<compile_context>
chip_gen: v7x
topology: tpu7x:2x2x1
jax: 0.10.0
libtpu: 0.0.40
codegen_flags: <defaults>
</compile_context>

<pallas_src>
import numpy as np
import jax
import jax.numpy as jnp
from jax.experimental import pallas as pl
from jax.experimental.pallas import tpu as pltpu

# ---------------- static network geometry ----------------
IN_H = IN_W = 28
K1 = 5                                   # conv1 kernel (valid)
C1_OUT, C1_OH, C1_OW = 16, 24, 24
P1_H, P1_W = 8, 8                        # after MaxPool2d(3)
K2 = 3                                   # conv2 kernel (pad=1)
C2_OUT, C2_OH, C2_OW = 16, 8, 8
P2_H, P2_W = 4, 4                        # after MaxPool2d(2)
FC_IN, FC_OUT = 256, 10

KIN = 144                                # im2row K: 5*28 = 140, padded to 144
L1 = C1_OW * C1_OUT                      # 384 conv1 lanes  (ow*16 + co)
L1P = (C1_OW - 2) * C1_OUT               # 352 lanes after pool1 column max
L2 = C2_OW * C2_OUT                      # 128 conv2 lanes  (ow*16 + co)
L2P = (C2_OW - 1) * C2_OUT               # 112 lanes after pool2 column max
FC_PAD = 128                             # lane-dense padded FC output width
NEG_PAD = -1e30                          # bias for padded logit lanes

MAX_BT = 128                             # max images per grid step


# ---------------- the fused Pallas kernel ----------------
def _convnet_kernel(x_ref, w1_ref, b1_ref, w2_ref, b2_ref, fcw_ref, fcb_ref,
                    o_ref, p_ref):
    bt = o_ref.shape[0]                  # images in this tile (multiple of 16)

    # ---- Conv1 (1->16, k=5, valid): ONE K=144 MXU matmul on the im2row slab
    c1 = jnp.dot(x_ref[...], w1_ref[...],
                 preferred_element_type=jnp.float32) + b1_ref[...]   # (24*bt, 384)

    # ---- MaxPool2d(3): row groups via reshape, shifted-lane column max; ReLU
    c1r = c1.reshape(P1_H, 3, bt, L1)
    m1 = jnp.maximum(jnp.maximum(c1r[:, 0], c1r[:, 1]), c1r[:, 2])
    m1 = m1.reshape(P1_H * bt, L1)
    m1 = jnp.maximum(jnp.maximum(m1[:, 0:L1P], m1[:, 16:16 + L1P]),
                     m1[:, 32:32 + L1P])                              # (8*bt, 352)
    m1 = jnp.maximum(m1, 0.0).astype(jnp.bfloat16)
    # (the stride-3 column down-sample is folded into W2's zero rows)

    # ---- Conv2 (16->16, k=3, pad=1): persistent zero-padded row buffer + 3 taps
    zrow = jnp.zeros((bt, L1P), jnp.bfloat16)
    p_ref[0:bt, :] = zrow                                   # borders rewritten
    p_ref[(C2_OH + 1) * bt:(C2_OH + 2) * bt, :] = zrow      # every step (cheap)
    p_ref[bt:(C2_OH + 1) * bt, :] = m1
    c2 = b2_ref[...] + jnp.dot(p_ref[0:C2_OH * bt, :], w2_ref[0],
                               preferred_element_type=jnp.float32)
    for i in range(1, K2):
        c2 = c2 + jnp.dot(p_ref[i * bt:(i + C2_OH) * bt, :], w2_ref[i],
                          preferred_element_type=jnp.float32)         # (8*bt, 128)

    # ---- MaxPool2d(2): row groups via reshape, shifted-lane column max; ReLU
    c2r = c2.reshape(P2_H, 2, bt, L2)
    m2 = jnp.maximum(c2r[:, 0], c2r[:, 1]).reshape(P2_H * bt, L2)
    m2 = jnp.maximum(m2[:, 0:L2P], m2[:, 16:16 + L2P])                # (4*bt, 112)
    m2 = jnp.maximum(m2, 0.0).astype(jnp.bfloat16)

    # ---- Linear(256->10) padded to 128 lane-dense outputs.  Pool2's column
    #      down-sample + PyTorch Flatten order are folded into fcw's zeros.
    #      Kept as 4 (bt,112)@(112,128) accumulating dots (N is already lane
    #      dense; lane-concatenating to one K=448 dot would add XLU copies).
    logits = fcb_ref[...] + jnp.dot(m2[0:bt, :], fcw_ref[0],
                                    preferred_element_type=jnp.float32)
    for h in range(1, P2_H):
        logits = logits + jnp.dot(m2[h * bt:(h + 1) * bt, :], fcw_ref[h],
                                  preferred_element_type=jnp.float32)  # (bt, 128)

    # ---- log_softmax: padded lanes carry bias -1e30, so exp underflows to 0
    mx = jnp.max(logits, axis=-1, keepdims=True)
    s = logits - mx
    lse = jnp.log(jnp.sum(jnp.exp(s), axis=-1, keepdims=True))
    o_ref[...] = s - lse


# ---------------- one-time weight re-layout (hoisted out of forward) ----------------
def prepare_params(params):
    """Build the structured (Toeplitz-over-width) matrices the kernel consumes."""
    w1 = params["conv1_w"]            # (co=16, ci=1, i=5, j=5)   PyTorch OIHW
    w2 = params["conv2_w"]            # (co=16, ci=16, i=3, j=3)
    fcw = params["fc_w"]              # (10, 256)

    # conv1 -> (KIN, 384): row i*28+jw, lane ow*16+co = w1[co,0,i,jw-ow]
    sel1 = np.zeros((K1, IN_W, C1_OW), np.float32)
    for j in range(K1):
        for ow in range(C1_OW):
            sel1[j, ow + j, ow] = 1.0
    W1 = jnp.einsum("jwq,oij->iwqo", sel1, w1[:, 0]).reshape(K1 * IN_W, L1)
    W1 = jnp.pad(W1, ((0, KIN - K1 * IN_W), (0, 0))).astype(jnp.bfloat16)
    B1 = jnp.tile(params["conv1_b"], C1_OW).reshape(1, L1).astype(jnp.float32)

    # conv2 (pad=1): only input lanes ow1 = 3*(ow+j-1) are non-zero, folding in
    # both the column zero-padding and pool1's stride-3 column down-sampling.
    sel2 = np.zeros((K2, L1P // C1_OUT, C2_OW), np.float32)
    for j in range(K2):
        for ow in range(C2_OW):
            src = ow + j - 1
            if 0 <= src < P1_W:
                sel2[j, 3 * src, ow] = 1.0
    W2 = jnp.einsum("jpq,ocij->ipcqo", sel2, w2).reshape(K2, L1P, L2)
    W2 = W2.astype(jnp.bfloat16)
    B2 = jnp.tile(params["conv2_b"], C2_OW).reshape(1, L2).astype(jnp.float32)

    # fc: only even ow2 = 2*w lanes carry pool2 column w; PyTorch Flatten order
    # is (ci, h, w).  Output columns padded 10 -> 128 lanes (zero weights).
    fcw_r = fcw.reshape(FC_OUT, C2_OUT, P2_H, P2_W)       # (n, ci, h, w)
    take = jnp.transpose(fcw_r, (2, 1, 3, 0))             # (h, ci, w, n)
    inter = jnp.stack([take, jnp.zeros_like(take)], axis=3)  # (h, ci, w, 2, n)
    F = jnp.transpose(inter, (0, 2, 3, 1, 4))             # (h, w, 2, ci, n)
    F = F.reshape(P2_H, 2 * P2_W, C2_OUT, FC_OUT)[:, :L2P // C2_OUT]
    F = F.reshape(P2_H, L2P, FC_OUT)                      # (4, 112, 10)
    F = jnp.pad(F, ((0, 0), (0, 0), (0, FC_PAD - FC_OUT))).astype(jnp.bfloat16)
    FCB = jnp.full((1, FC_PAD), NEG_PAD, jnp.float32)
    FCB = FCB.at[0, :FC_OUT].set(params["fc_b"].astype(jnp.float32))

    return {"w1": W1, "b1": B1, "w2": W2, "b2": B2, "fcw": F, "fcb": FCB}


# ---------------- batch-tile selection ----------------
def _pick_bt(n):
    """Images per grid step: multiple of 16, <= MAX_BT, >= 2 tiles if possible."""
    n_up = ((n + 15) // 16) * 16
    bt = min(MAX_BT, n_up)
    if bt > 16 and -(-n // bt) < 2:          # single tile: split for v7x's 2 TCs
        bt = ((bt // 2 + 15) // 16) * 16
    return bt


# ---------------- forward pass ----------------
@jax.jit
def convnet_forward(prep, x):
    n = x.shape[0]
    bt = _pick_bt(n)
    t = pl.cdiv(n, bt)
    npad = t * bt

    # im2row: slab[b, oh, i*28 + jw] = image[b, oh+i, jw]; K padded 140 -> 144.
    ximg = x.reshape(n, IN_H, IN_W).astype(jnp.bfloat16)
    if npad != n:                                  # ragged last tile -> pad batch
        ximg = jnp.pad(ximg, ((0, npad - n), (0, 0), (0, 0)))
    slab = jnp.concatenate([ximg[:, i:i + C1_OH, :] for i in range(K1)], axis=-1)
    slab = jnp.pad(slab, ((0, 0), (0, 0), (0, KIN - K1 * IN_W)))
    # rows ordered (tile, oh, b) so each grid block sees row = oh*bt + b
    slab = slab.reshape(t, bt, C1_OH, KIN).transpose(0, 2, 1, 3)
    slab = slab.reshape(t * C1_OH * bt, KIN)

    out = pl.pallas_call(
        _convnet_kernel,
        out_shape=jax.ShapeDtypeStruct((npad, FC_PAD), jnp.float32),
        grid_spec=pltpu.PrefetchScalarGridSpec(
            num_scalar_prefetch=0,
            grid=(t,),
            in_specs=[
                pl.BlockSpec((C1_OH * bt, KIN), lambda i: (i, 0)),       # im2row tile
                pl.BlockSpec((KIN, L1), lambda i: (0, 0)),               # W1
                pl.BlockSpec((1, L1), lambda i: (0, 0)),                 # b1
                pl.BlockSpec((K2, L1P, L2), lambda i: (0, 0, 0)),        # W2
                pl.BlockSpec((1, L2), lambda i: (0, 0)),                 # b2
                pl.BlockSpec((P2_H, L2P, FC_PAD), lambda i: (0, 0, 0)),  # fc W
                pl.BlockSpec((1, FC_PAD), lambda i: (0, 0)),             # fc b
            ],
            out_specs=pl.BlockSpec((bt, FC_PAD), lambda i: (i, 0)),
            scratch_shapes=[
                pltpu.VMEM(((C2_OH + 2) * bt, L1P), jnp.bfloat16),  # conv2 row pad
            ],
        ),
        compiler_params=pltpu.CompilerParams(
            dimension_semantics=("parallel",),        # megacore sharding on v7x
            vmem_limit_bytes=48 * 1024 * 1024,        # ~10 MiB used at bt=128
        ),
    )(slab, prep["w1"], prep["b1"], prep["w2"], prep["b2"],
      prep["fcw"], prep["fcb"])
    return out[:n, :FC_OUT]


# ---------------- PyTorch-layout params + pure-JAX reference ----------------
def init_params(key):
    k1, k2, k3, k4, k5, k6 = jax.random.split(key, 6)
    return {
        "conv1_w": jax.random.normal(k1, (16, 1, 5, 5), jnp.float32) * 0.1,
        "conv1_b": jax.random.normal(k2, (16,), jnp.float32) * 0.1,
        "conv2_w": jax.random.normal(k3, (16, 16, 3, 3), jnp.float32) * 0.05,
        "conv2_b": jax.random.normal(k4, (16,), jnp.float32) * 0.05,
        "fc_w":    jax.random.normal(k5, (10, 256), jnp.float32) * 0.05,
        "fc_b":    jax.random.normal(k6, (10,), jnp.float32) * 0.05,
    }


def convnet_reference(params, x):
    n = x.shape[0]
    xi = x.reshape(n, 1, IN_H, IN_W)
    dn = ("NCHW", "OIHW", "NCHW")
    y1 = jax.lax.conv_general_dilated(xi, params["conv1_w"], (1, 1), "VALID",
                                      dimension_numbers=dn)
    y1 = y1 + params["conv1_b"][None, :, None, None]
    p1 = jax.lax.reduce_window(y1, -jnp.inf, jax.lax.max,
                               (1, 1, 3, 3), (1, 1, 3, 3), "VALID")
    r1 = jnp.maximum(p1, 0.0)
    y2 = jax.lax.conv_general_dilated(r1, params["conv2_w"], (1, 1),
                                      ((1, 1), (1, 1)), dimension_numbers=dn)
    y2 = y2 + params["conv2_b"][None, :, None, None]
    p2 = jax.lax.reduce_window(y2, -jnp.inf, jax.lax.max,
                               (1, 1, 2, 2), (1, 1, 2, 2), "VALID")
    r2 = jnp.maximum(p2, 0.0)
    logits = r2.reshape(n, FC_IN) @ params["fc_w"].T + params["fc_b"]
    return jax.nn.log_softmax(logits, axis=-1)


if __name__ == "__main__":
    key = jax.random.PRNGKey(0)
    pkey, xkey = jax.random.split(key)
    params = init_params(pkey)
    prep = prepare_params(params)            # hoisted one-time weight re-layout
    x = jax.random.normal(xkey, (2, 784), jnp.float32)

    out = jax.block_until_ready(convnet_forward(prep, x))

    assert out.shape == (2, 10), out.shape
    assert bool(jnp.all(jnp.isfinite(out)))
    # log_softmax rows must normalize: logsumexp over classes == 0
    assert bool(jnp.allclose(jax.scipy.special.logsumexp(out, axis=-1), 0.0,
                             atol=1e-4))
    # agree with a pure-JAX/XLA f32 reference (tolerance covers bf16 MXU operands)
    ref = convnet_reference(params, x)
    err = float(jnp.max(jnp.abs(out - ref)))
    assert err < 5e-2, err
    print("KERNEL_OK")
</pallas_src>

<mosaic_0001>
module attributes {stable_mosaic.version = 11 : i64} {
  func.func @_convnet_kernel(%arg0: i32, %arg1: memref<384x144xbf16, #tpu.memory_space<vmem>>, %arg2: memref<144x384xbf16, #tpu.memory_space<vmem>>, %arg3: memref<1x384xf32, #tpu.memory_space<vmem>>, %arg4: memref<3x352x128xbf16, #tpu.memory_space<vmem>>, %arg5: memref<1x128xf32, #tpu.memory_space<vmem>>, %arg6: memref<4x112x128xbf16, #tpu.memory_space<vmem>>, %arg7: memref<1x128xf32, #tpu.memory_space<vmem>>, %arg8: memref<16x128xf32, #tpu.memory_space<vmem>>, %arg9: memref<160x352xbf16, #tpu.memory_space<vmem>>) attributes {dimension_semantics = [#tpu.dimension_semantics<parallel>], iteration_bounds = array<i64: 1>, scalar_prefetch = 0 : i64, scratch_operands = 1 : i64, tpu.core_type = #tpu.core_type<tc>, window_params = [{transform_indices = @transform_0, window_bounds = array<i64: 384, 144>}, {pipeline_mode = #tpu.pipeline_mode<synchronous>, transform_indices = @transform_1, window_bounds = array<i64: 144, 384>}, {pipeline_mode = #tpu.pipeline_mode<synchronous>, transform_indices = @transform_2, window_bounds = array<i64: 1, 384>}, {pipeline_mode = #tpu.pipeline_mode<synchronous>, transform_indices = @transform_3, window_bounds = array<i64: 3, 352, 128>}, {pipeline_mode = #tpu.pipeline_mode<synchronous>, transform_indices = @transform_4, window_bounds = array<i64: 1, 128>}, {pipeline_mode = #tpu.pipeline_mode<synchronous>, transform_indices = @transform_5, window_bounds = array<i64: 4, 112, 128>}, {pipeline_mode = #tpu.pipeline_mode<synchronous>, transform_indices = @transform_6, window_bounds = array<i64: 1, 128>}, {transform_indices = @transform_7, window_bounds = array<i64: 16, 128>}]} {
    %c0 = arith.constant 0 : index
    %c0_0 = arith.constant 0 : index
    %0 = vector.load %arg1[%c0, %c0_0] : memref<384x144xbf16, #tpu.memory_space<vmem>>, vector<384x144xbf16>
    %c0_1 = arith.constant 0 : index
    %c0_2 = arith.constant 0 : index
    %1 = vector.load %arg2[%c0_1, %c0_2] : memref<144x384xbf16, #tpu.memory_space<vmem>>, vector<144x384xbf16>
    %cst = arith.constant dense<0.000000e+00> : vector<384x384xf32>
    %2 = tpu.matmul %0, %1, %cst {dimension_numbers = #tpu.dot_dimension_numbers<[1], [0], [0], [1], [0, 0, 1, 1], [], []>} : vector<384x144xbf16>, vector<144x384xbf16>, vector<384x384xf32> -> vector<384x384xf32>
    %c0_3 = arith.constant 0 : index
    %c0_4 = arith.constant 0 : index
    %3 = vector.load %arg3[%c0_3, %c0_4] : memref<1x384xf32, #tpu.memory_space<vmem>>, vector<1x384xf32>
    %4 = vector.broadcast %3 : vector<1x384xf32> to vector<384x384xf32>
    %5 = arith.addf %2, %4 : vector<384x384xf32>
    %6 = vector.shape_cast %5 : vector<384x384xf32> to vector<8x3x16x384xf32>
    %7 = vector.extract_strided_slice %6 {offsets = [0, 0, 0, 0], sizes = [8, 1, 16, 384], strides = [1, 1, 1, 1]} : vector<8x3x16x384xf32> to vector<8x1x16x384xf32>
    %8 = vector.shape_cast %7 : vector<8x1x16x384xf32> to vector<8x16x384xf32>
    %9 = vector.extract_strided_slice %6 {offsets = [0, 1, 0, 0], sizes = [8, 1, 16, 384], strides = [1, 1, 1, 1]} : vector<8x3x16x384xf32> to vector<8x1x16x384xf32>
    %10 = vector.shape_cast %9 : vector<8x1x16x384xf32> to vector<8x16x384xf32>
    %11 = arith.maximumf %8, %10 : vector<8x16x384xf32>
    %12 = vector.extract_strided_slice %6 {offsets = [0, 2, 0, 0], sizes = [8, 1, 16, 384], strides = [1, 1, 1, 1]} : vector<8x3x16x384xf32> to vector<8x1x16x384xf32>
    %13 = vector.shape_cast %12 : vector<8x1x16x384xf32> to vector<8x16x384xf32>
    %14 = arith.maximumf %11, %13 : vector<8x16x384xf32>
    %15 = vector.shape_cast %14 : vector<8x16x384xf32> to vector<128x384xf32>
    %16 = vector.extract_strided_slice %15 {offsets = [0, 0], sizes = [128, 352], strides = [1, 1]} : vector<128x384xf32> to vector<128x352xf32>
    %17 = vector.extract_strided_slice %15 {offsets = [0, 16], sizes = [128, 352], strides = [1, 1]} : vector<128x384xf32> to vector<128x352xf32>
    %18 = arith.maximumf %16, %17 : vector<128x352xf32>
    %19 = vector.extract_strided_slice %15 {offsets = [0, 32], sizes = [128, 352], strides = [1, 1]} : vector<128x384xf32> to vector<128x352xf32>
    %20 = arith.maximumf %18, %19 : vector<128x352xf32>
    %cst_5 = arith.constant 0.000000e+00 : f32
    %21 = vector.broadcast %cst_5 : f32 to vector<128x352xf32>
    %22 = arith.maximumf %20, %21 : vector<128x352xf32>
    %23 = arith.truncf %22 : vector<128x352xf32> to vector<128x352xbf16>
    %cst_6 = arith.constant 0.000000e+00 : bf16
    %24 = vector.broadcast %cst_6 : bf16 to vector<16x352xbf16>
    %c0_7 = arith.constant 0 : index
    %c0_8 = arith.constant 0 : index
    %25 = vector.load %arg9[%c0_7, %c0_8] : memref<160x352xbf16, #tpu.memory_space<vmem>>, vector<16x352xbf16>
    tpu.vector_store %arg9[%c0_7, %c0_8], %24 {strides = array<i32>} : memref<160x352xbf16, #tpu.memory_space<vmem>>, vector<16x352xbf16>,
    %c144 = arith.constant 144 : index
    %c0_9 = arith.constant 0 : index
    %26 = vector.load %arg9[%c144, %c0_9] : memref<160x352xbf16, #tpu.memory_space<vmem>>, vector<16x352xbf16>
    tpu.vector_store %arg9[%c144, %c0_9], %24 {strides = array<i32>} : memref<160x352xbf16, #tpu.memory_space<vmem>>, vector<16x352xbf16>,
    %c16 = arith.constant 16 : index
    %c0_10 = arith.constant 0 : index
    %27 = vector.load %arg9[%c16, %c0_10] : memref<160x352xbf16, #tpu.memory_space<vmem>>, vector<128x352xbf16>
    tpu.vector_store %arg9[%c16, %c0_10], %23 {strides = array<i32>} : memref<160x352xbf16, #tpu.memory_space<vmem>>, vector<128x352xbf16>,
    %c0_11 = arith.constant 0 : index
    %c0_12 = arith.constant 0 : index
    %28 = vector.load %arg5[%c0_11, %c0_12] : memref<1x128xf32, #tpu.memory_space<vmem>>, vector<1x128xf32>
    %c0_13 = arith.constant 0 : index
    %c0_14 = arith.constant 0 : index
    %29 = vector.load %arg9[%c0_13, %c0_14] : memref<160x352xbf16, #tpu.memory_space<vmem>>, vector<128x352xbf16>
    %c0_15 = arith.constant 0 : index
    %c0_16 = arith.constant 0 : index
    %c0_17 = arith.constant 0 : index
    %30 = vector.load %arg4[%c0_15, %c0_16, %c0_17] : memref<3x352x128xbf16, #tpu.memory_space<vmem>>, vector<1x352x128xbf16>
    %31 = vector.shape_cast %30 : vector<1x352x128xbf16> to vector<352x128xbf16>
    %cst_18 = arith.constant dense<0.000000e+00> : vector<128x128xf32>
    %32 = tpu.matmul %29, %31, %cst_18 {dimension_numbers = #tpu.dot_dimension_numbers<[1], [0], [0], [1], [0, 0, 1, 1], [], []>} : vector<128x352xbf16>, vector<352x128xbf16>, vector<128x128xf32> -> vector<128x128xf32>
    %33 = vector.broadcast %28 : vector<1x128xf32> to vector<128x128xf32>
    %34 = arith.addf %33, %32 : vector<128x128xf32>
    %c16_19 = arith.constant 16 : index
    %c0_20 = arith.constant 0 : index
    %35 = vector.load %arg9[%c16_19, %c0_20] : memref<160x352xbf16, #tpu.memory_space<vmem>>, vector<128x352xbf16>
    %c1 = arith.constant 1 : index
    %c0_21 = arith.constant 0 : index
    %c0_22 = arith.constant 0 : index
    %36 = vector.load %arg4[%c1, %c0_21, %c0_22] : memref<3x352x128xbf16, #tpu.memory_space<vmem>>, vector<1x352x128xbf16>
    %37 = vector.shape_cast %36 : vector<1x352x128xbf16> to vector<352x128xbf16>
    %cst_23 = arith.constant dense<0.000000e+00> : vector<128x128xf32>
    %38 = tpu.matmul %35, %37, %cst_23 {dimension_numbers = #tpu.dot_dimension_numbers<[1], [0], [0], [1], [0, 0, 1, 1], [], []>} : vector<128x352xbf16>, vector<352x128xbf16>, vector<128x128xf32> -> vector<128x128xf32>
    %39 = arith.addf %34, %38 : vector<128x128xf32>
    %c32 = arith.constant 32 : index
    %c0_24 = arith.constant 0 : index
    %40 = vector.load %arg9[%c32, %c0_24] : memref<160x352xbf16, #tpu.memory_space<vmem>>, vector<128x352xbf16>
    %c2 = arith.constant 2 : index
    %c0_25 = arith.constant 0 : index
    %c0_26 = arith.constant 0 : index
    %41 = vector.load %arg4[%c2, %c0_25, %c0_26] : memref<3x352x128xbf16, #tpu.memory_space<vmem>>, vector<1x352x128xbf16>
    %42 = vector.shape_cast %41 : vector<1x352x128xbf16> to vector<352x128xbf16>
    %cst_27 = arith.constant dense<0.000000e+00> : vector<128x128xf32>
    %43 = tpu.matmul %40, %42, %cst_27 {dimension_numbers = #tpu.dot_dimension_numbers<[1], [0], [0], [1], [0, 0, 1, 1], [], []>} : vector<128x352xbf16>, vector<352x128xbf16>, vector<128x128xf32> -> vector<128x128xf32>
    %44 = arith.addf %39, %43 : vector<128x128xf32>
    %45 = vector.shape_cast %44 : vector<128x128xf32> to vector<4x2x16x128xf32>
    %46 = vector.extract_strided_slice %45 {offsets = [0, 0, 0, 0], sizes = [4, 1, 16, 128], strides = [1, 1, 1, 1]} : vector<4x2x16x128xf32> to vector<4x1x16x128xf32>
    %47 = vector.shape_cast %46 : vector<4x1x16x128xf32> to vector<4x16x128xf32>
    %48 = vector.extract_strided_slice %45 {offsets = [0, 1, 0, 0], sizes = [4, 1, 16, 128], strides = [1, 1, 1, 1]} : vector<4x2x16x128xf32> to vector<4x1x16x128xf32>
    %49 = vector.shape_cast %48 : vector<4x1x16x128xf32> to vector<4x16x128xf32>
    %50 = arith.maximumf %47, %49 : vector<4x16x128xf32>
    %51 = vector.shape_cast %50 : vector<4x16x128xf32> to vector<64x128xf32>
    %52 = vector.extract_strided_slice %51 {offsets = [0, 0], sizes = [64, 112], strides = [1, 1]} : vector<64x128xf32> to vector<64x112xf32>
    %53 = vector.extract_strided_slice %51 {offsets = [0, 16], sizes = [64, 112], strides = [1, 1]} : vector<64x128xf32> to vector<64x112xf32>
    %54 = arith.maximumf %52, %53 : vector<64x112xf32>
    %cst_28 = arith.constant 0.000000e+00 : f32
    %55 = vector.broadcast %cst_28 : f32 to vector<64x112xf32>
    %56 = arith.maximumf %54, %55 : vector<64x112xf32>
    %57 = arith.truncf %56 : vector<64x112xf32> to vector<64x112xbf16>
    %c0_29 = arith.constant 0 : index
    %c0_30 = arith.constant 0 : index
    %58 = vector.load %arg7[%c0_29, %c0_30] : memref<1x128xf32, #tpu.memory_space<vmem>>, vector<1x128xf32>
    %59 = vector.extract_strided_slice %57 {offsets = [0, 0], sizes = [16, 112], strides = [1, 1]} : vector<64x112xbf16> to vector<16x112xbf16>
    %c0_31 = arith.constant 0 : index
    %c0_32 = arith.constant 0 : index
    %c0_33 = arith.constant 0 : index
    %60 = vector.load %arg6[%c0_31, %c0_32, %c0_33] : memref<4x112x128xbf16, #tpu.memory_space<vmem>>, vector<1x112x128xbf16>
    %61 = vector.shape_cast %60 : vector<1x112x128xbf16> to vector<112x128xbf16>
    %cst_34 = arith.constant dense<0.000000e+00> : vector<16x128xf32>
    %62 = tpu.matmul %59, %61, %cst_34 {dimension_numbers = #tpu.dot_dimension_numbers<[1], [0], [0], [1], [0, 0, 1, 1], [], []>} : vector<16x112xbf16>, vector<112x128xbf16>, vector<16x128xf32> -> vector<16x128xf32>
    %63 = vector.broadcast %58 : vector<1x128xf32> to vector<16x128xf32>
    %64 = arith.addf %63, %62 : vector<16x128xf32>
    %65 = vector.extract_strided_slice %57 {offsets = [16, 0], sizes = [16, 112], strides = [1, 1]} : vector<64x112xbf16> to vector<16x112xbf16>
    %c1_35 = arith.constant 1 : index
    %c0_36 = arith.constant 0 : index
    %c0_37 = arith.constant 0 : index
    %66 = vector.load %arg6[%c1_35, %c0_36, %c0_37] : memref<4x112x128xbf16, #tpu.memory_space<vmem>>, vector<1x112x128xbf16>
    %67 = vector.shape_cast %66 : vector<1x112x128xbf16> to vector<112x128xbf16>
    %cst_38 = arith.constant dense<0.000000e+00> : vector<16x128xf32>
    %68 = tpu.matmul %65, %67, %cst_38 {dimension_numbers = #tpu.dot_dimension_numbers<[1], [0], [0], [1], [0, 0, 1, 1], [], []>} : vector<16x112xbf16>, vector<112x128xbf16>, vector<16x128xf32> -> vector<16x128xf32>
    %69 = arith.addf %64, %68 : vector<16x128xf32>
    %70 = vector.extract_strided_slice %57 {offsets = [32, 0], sizes = [16, 112], strides = [1, 1]} : vector<64x112xbf16> to vector<16x112xbf16>
    %c2_39 = arith.constant 2 : index
    %c0_40 = arith.constant 0 : index
    %c0_41 = arith.constant 0 : index
    %71 = vector.load %arg6[%c2_39, %c0_40, %c0_41] : memref<4x112x128xbf16, #tpu.memory_space<vmem>>, vector<1x112x128xbf16>
    %72 = vector.shape_cast %71 : vector<1x112x128xbf16> to vector<112x128xbf16>
    %cst_42 = arith.constant dense<0.000000e+00> : vector<16x128xf32>
    %73 = tpu.matmul %70, %72, %cst_42 {dimension_numbers = #tpu.dot_dimension_numbers<[1], [0], [0], [1], [0, 0, 1, 1], [], []>} : vector<16x112xbf16>, vector<112x128xbf16>, vector<16x128xf32> -> vector<16x128xf32>
    %74 = arith.addf %69, %73 : vector<16x128xf32>
    %75 = vector.extract_strided_slice %57 {offsets = [48, 0], sizes = [16, 112], strides = [1, 1]} : vector<64x112xbf16> to vector<16x112xbf16>
    %c3 = arith.constant 3 : index
    %c0_43 = arith.constant 0 : index
    %c0_44 = arith.constant 0 : index
    %76 = vector.load %arg6[%c3, %c0_43, %c0_44] : memref<4x112x128xbf16, #tpu.memory_space<vmem>>, vector<1x112x128xbf16>
    %77 = vector.shape_cast %76 : vector<1x112x128xbf16> to vector<112x128xbf16>
    %cst_45 = arith.constant dense<0.000000e+00> : vector<16x128xf32>
    %78 = tpu.matmul %75, %77, %cst_45 {dimension_numbers = #tpu.dot_dimension_numbers<[1], [0], [0], [1], [0, 0, 1, 1], [], []>} : vector<16x112xbf16>, vector<112x128xbf16>, vector<16x128xf32> -> vector<16x128xf32>
    %79 = arith.addf %74, %78 : vector<16x128xf32>
    %cst_46 = arith.constant dense<0xFF800000> : vector<16xf32>
    %80 = vector.multi_reduction <maximumf>, %79, %cst_46 [1] : vector<16x128xf32> to vector<16xf32>
    %81 = vector.shape_cast %80 : vector<16xf32> to vector<16x1xf32>
    %82 = vector.broadcast %81 : vector<16x1xf32> to vector<16x128xf32>
    %83 = arith.subf %79, %82 : vector<16x128xf32>
    %84 = math.exp %83 : vector<16x128xf32>
    %cst_47 = arith.constant dense<0.000000e+00> : vector<16xf32>
    %85 = vector.multi_reduction <add>, %84, %cst_47 [1] : vector<16x128xf32> to vector<16xf32>
    %86 = vector.shape_cast %85 : vector<16xf32> to vector<16x1xf32>
    %87 = math.log %86 : vector<16x1xf32>
    %88 = vector.broadcast %87 : vector<16x1xf32> to vector<16x128xf32>
    %89 = arith.subf %83, %88 : vector<16x128xf32>
    %c0_48 = arith.constant 0 : index
    %c0_49 = arith.constant 0 : index
    %90 = vector.load %arg8[%c0_48, %c0_49] : memref<16x128xf32, #tpu.memory_space<vmem>>, vector<16x128xf32>
    tpu.vector_store %arg8[%c0_48, %c0_49], %89 {strides = array<i32>} : memref<16x128xf32, #tpu.memory_space<vmem>>, vector<16x128xf32>,
    return
  }
  func.func @transform_0(%arg0: i32) -> (i32, i32) {
    %c0_i32 = arith.constant 0 : i32
    %c0_i32_0 = arith.constant 0 : i32
    return %arg0, %c0_i32 : i32, i32
  }
  func.func @transform_1(%arg0: i32) -> (i32, i32) {
    %c0_i32 = arith.constant 0 : i32
    %c0_i32_0 = arith.constant 0 : i32
    %c0_i32_1 = arith.constant 0 : i32
    return %c0_i32, %c0_i32_0 : i32, i32
  }
  func.func @transform_2(%arg0: i32) -> (i32, i32) {
    %c0_i32 = arith.constant 0 : i32
    %c0_i32_0 = arith.constant 0 : i32
    %c0_i32_1 = arith.constant 0 : i32
    return %c0_i32, %c0_i32_0 : i32, i32
  }
  func.func @transform_3(%arg0: i32) -> (i32, i32, i32) {
    %c0_i32 = arith.constant 0 : i32
    %c0_i32_0 = arith.constant 0 : i32
    %c0_i32_1 = arith.constant 0 : i32
    %c0_i32_2 = arith.constant 0 : i32
    return %c0_i32, %c0_i32_0, %c0_i32_1 : i32, i32, i32
  }
  func.func @transform_4(%arg0: i32) -> (i32, i32) {
    %c0_i32 = arith.constant 0 : i32
    %c0_i32_0 = arith.constant 0 : i32
    %c0_i32_1 = arith.constant 0 : i32
    return %c0_i32, %c0_i32_0 : i32, i32
  }
  func.func @transform_5(%arg0: i32) -> (i32, i32, i32) {
    %c0_i32 = arith.constant 0 : i32
    %c0_i32_0 = arith.constant 0 : i32
    %c0_i32_1 = arith.constant 0 : i32
    %c0_i32_2 = arith.constant 0 : i32
    return %c0_i32, %c0_i32_0, %c0_i32_1 : i32, i32, i32
  }
  func.func @transform_6(%arg0: i32) -> (i32, i32) {
    %c0_i32 = arith.constant 0 : i32
    %c0_i32_0 = arith.constant 0 : i32
    %c0_i32_1 = arith.constant 0 : i32
    return %c0_i32, %c0_i32_0 : i32, i32
  }
  func.func @transform_7(%arg0: i32) -> (i32, i32) {
    %c0_i32 = arith.constant 0 : i32
    %c0_i32_0 = arith.constant 0 : i32
    return %arg0, %c0_i32 : i32, i32
  }
}

</mosaic_0001>

<llo_original>
// kernel: convnet_forward.1
$region0: #{convnet_forward.1}
  #allocation0 [shape = 'u32[]', space=smem, size = 0x4, offset = 0x4, fixed_abs, tag = 'smem constant byte address 0x4 - core index']
  #allocation1 [shape = 'u32[144,128]{1,0:T(1,128)}', space=vmem, size = 0x12000, scoped, tag = 'internal scratch']
  #allocation2 [shape = 'bf16[160,352]{1,0:T(16,128)(2,1)}', space=vmem, size = 0x1e000, scoped, tag = 'scratch operand']
  %s0 = inlined_call_operand.vmem [shape: bf16[384,144], index: 0, kind: input, shape index: {}]
  %s1 = inlined_call_operand.vmem [shape: bf16[144,384], index: 1, kind: input, shape index: {}]
  %s2 = inlined_call_operand.vmem [shape: f32[1,384], index: 2, kind: input, shape index: {}]
  %s3 = inlined_call_operand.vmem [shape: bf16[3,352,128], index: 3, kind: input, shape index: {}]
  %s4 = inlined_call_operand.vmem [shape: f32[1,128], index: 4, kind: input, shape index: {}]
  %s5 = inlined_call_operand.vmem [shape: bf16[4,112,128], index: 5, kind: input, shape index: {}]
  %s6 = inlined_call_operand.vmem [shape: f32[1,128], index: 6, kind: input, shape index: {}]
  %s7 = inlined_call_operand.vmem [shape: f32[16,128], index: 7, kind: output, shape index: {}]
  %s8 = sld [smem:[#allocation0]]
  $region38: #{convnet_forward.1} parent=0
    _
  %s10 = ssub.s32 1, %s8
  %s11 = scalar_select 0, %s10, %s8
  // Predicated region
  $region2: #{convnet_forward.1} parent=0 // pred_check
    _
  $region3: #{convnet_forward.1} parent=0 // pred_check_branch
    %13 = sbr.rel (0) target = $region5
  $region4: #{convnet_forward.1} parent=0 // pred_region
    _
  $region5: #{convnet_forward.1} parent=0 // pred_fallthru
    _
  // Predicated region
  $region6: #{convnet_forward.1} parent=0 // pred_check
    _
  $region7: #{convnet_forward.1} parent=0 // pred_check_branch
    %15 = sbr.rel (0) target = $region9
  $region8: #{convnet_forward.1} parent=0 // pred_region
    _
  $region9: #{convnet_forward.1} parent=0 // pred_fallthru
    _
  // Predicated region
  $region10: #{convnet_forward.1} parent=0 // pred_check
    _
  $region11: #{convnet_forward.1} parent=0 // pred_check_branch
    %17 = sbr.rel (0) target = $region13
  $region12: #{convnet_forward.1} parent=0 // pred_region
    _
  $region13: #{convnet_forward.1} parent=0 // pred_fallthru
    _
  // Predicated region
  $region14: #{convnet_forward.1} parent=0 // pred_check
    _
  $region15: #{convnet_forward.1} parent=0 // pred_check_branch
    %19 = sbr.rel (0) target = $region17
  $region16: #{convnet_forward.1} parent=0 // pred_region
    _
  $region17: #{convnet_forward.1} parent=0 // pred_fallthru
    _
  // Predicated region
  $region18: #{convnet_forward.1} parent=0 // pred_check
    _
  $region19: #{convnet_forward.1} parent=0 // pred_check_branch
    %21 = sbr.rel (0) target = $region21
  $region20: #{convnet_forward.1} parent=0 // pred_region
    _
  $region21: #{convnet_forward.1} parent=0 // pred_fallthru
    _
  // Predicated region
  $region22: #{convnet_forward.1} parent=0 // pred_check
    _
  $region23: #{convnet_forward.1} parent=0 // pred_check_branch
    %23 = sbr.rel (0) target = $region25
  $region24: #{convnet_forward.1} parent=0 // pred_region
    _
  $region25: #{convnet_forward.1} parent=0 // pred_fallthru
    _
  // Predicated region
  $region26: #{convnet_forward.1} parent=0 // pred_check
    _
  $region27: #{convnet_forward.1} parent=0 // pred_check_branch
    %25 = sbr.rel (0) target = $region29
  $region28: #{convnet_forward.1} parent=0 // pred_region
    _
  $region29: #{convnet_forward.1} parent=0 // pred_fallthru
    _
  %v27 = vld [vmem:[%s0] sm:$0xff]
  %v28 = vld [vmem:[%s0 + $0x8] sm:$0xff]
  %v29 = vld [vmem:[%s0 + $0x10] sm:$0xff]
  %v30 = vld [vmem:[%s0 + $0x18] sm:$0xff]
  %v31 = vld [vmem:[%s0 + $0x20] sm:$0xff]
  %v32 = vld [vmem:[%s0 + $0x28] sm:$0xff]
  %v33 = vld [vmem:[%s0 + $0x30] sm:$0xff]
  %v34 = vld [vmem:[%s0 + $0x38] sm:$0xff]
  %v35 = vld [vmem:[%s0 + $0x40] sm:$0xff]
  %v36 = vld [vmem:[%s0 + $0x48] sm:$0xff]
  %v37 = vld [vmem:[%s0 + $0x50] sm:$0xff]
  %v38 = vld [vmem:[%s0 + $0x58] sm:$0xff]
  %v39 = vld [vmem:[%s0 + $0x60] sm:$0xff]
  %v40 = vld [vmem:[%s0 + $0x68] sm:$0xff]
  %v41 = vld [vmem:[%s0 + $0x70] sm:$0xff]
  %v42 = vld [vmem:[%s0 + $0x78] sm:$0xff]
  %v43 = vld [vmem:[%s0 + $0x80] sm:$0xff]
  %v44 = vld [vmem:[%s0 + $0x88] sm:$0xff]
  %v45 = vld [vmem:[%s0 + $0x90] sm:$0xff]
  %v46 = vld [vmem:[%s0 + $0x98] sm:$0xff]
  %v47 = vld [vmem:[%s0 + $0xa0] sm:$0xff]
  %v48 = vld [vmem:[%s0 + $0xa8] sm:$0xff]
  %v49 = vld [vmem:[%s0 + $0xb0] sm:$0xff]
  %v50 = vld [vmem:[%s0 + $0xb8] sm:$0xff]
  %v51 = vld [vmem:[%s0 + $0xc0] sm:$0xff]
  %v52 = vld [vmem:[%s0 + $0xc8] sm:$0xff]
  %v53 = vld [vmem:[%s0 + $0xd0] sm:$0xff]
  %v54 = vld [vmem:[%s0 + $0xd8] sm:$0xff]
  %v55 = vld [vmem:[%s0 + $0xe0] sm:$0xff]
  %v56 = vld [vmem:[%s0 + $0xe8] sm:$0xff]
  %v57 = vld [vmem:[%s0 + $0xf0] sm:$0xff]
  %v58 = vld [vmem:[%s0 + $0xf8] sm:$0xff]
  %v59 = vld [vmem:[%s0 + $0x100] sm:$0xff]
  %v60 = vld [vmem:[%s0 + $0x108] sm:$0xff]
  %v61 = vld [vmem:[%s0 + $0x110] sm:$0xff]
  %v62 = vld [vmem:[%s0 + $0x118] sm:$0xff]
  %v63 = vld [vmem:[%s0 + $0x120] sm:$0xff]
  %v64 = vld [vmem:[%s0 + $0x128] sm:$0xff]
  %v65 = vld [vmem:[%s0 + $0x130] sm:$0xff]
  %v66 = vld [vmem:[%s0 + $0x138] sm:$0xff]
  %v67 = vld [vmem:[%s0 + $0x140] sm:$0xff]
  %v68 = vld [vmem:[%s0 + $0x148] sm:$0xff]
  %v69 = vld [vmem:[%s0 + $0x150] sm:$0xff]
  %v70 = vld [vmem:[%s0 + $0x158] sm:$0xff]
  %v71 = vld [vmem:[%s0 + $0x160] sm:$0xff]
  %v72 = vld [vmem:[%s0 + $0x168] sm:$0xff]
  %v73 = vld [vmem:[%s0 + $0x170] sm:$0xff]
  %v74 = vld [vmem:[%s0 + $0x178] sm:$0xff]
  %v75 = vld [vmem:[%s1] sm:$0xff]
  %v76 = vld [vmem:[%s1 + $0x8] sm:$0xf]
  %v77 = vld [vmem:[%s1 + $0xc] sm:$0xff]
  %v78 = vld [vmem:[%s1 + $0x14] sm:$0xf]
  %v79 = vld [vmem:[%s1 + $0x18] sm:$0xff]
  %v80 = vld [vmem:[%s1 + $0x20] sm:$0xf]
  %v81 = vld [vmem:[%s1 + $0x24] sm:$0xff]
  %v82 = vld [vmem:[%s1 + $0x2c] sm:$0xf]
  %v83 = vld [vmem:[%s1 + $0x30] sm:$0xff]
  %v84 = vld [vmem:[%s1 + $0x38] sm:$0xf]
  %v85 = vld [vmem:[%s1 + $0x3c] sm:$0xff]
  %v86 = vld [vmem:[%s1 + $0x44] sm:$0xf]
  %v87 = vld [vmem:[%s1 + $0x48] sm:$0xff]
  %v88 = vld [vmem:[%s1 + $0x50] sm:$0xf]
  %v89 = vld [vmem:[%s1 + $0x54] sm:$0xff]
  %v90 = vld [vmem:[%s1 + $0x5c] sm:$0xf]
  %v91 = vld [vmem:[%s1 + $0x60] sm:$0xff]
  %v92 = vld [vmem:[%s1 + $0x68] sm:$0xf]
  %v93 = vld [vmem:[%s1 + $0x6c] sm:$0xff]
  %v94 = vld [vmem:[%s1 + $0x74] sm:$0xf]
  %v95 = vld [vmem:[%s1 + $0x78] sm:$0xff]
  %v96 = vld [vmem:[%s1 + $0x80] sm:$0xf]
  %v97 = vld [vmem:[%s1 + $0x84] sm:$0xff]
  %v98 = vld [vmem:[%s1 + $0x8c] sm:$0xf]
  %v99 = vld [vmem:[%s1 + $0x90] sm:$0xff]
  %v100 = vld [vmem:[%s1 + $0x98] sm:$0xf]
  %v101 = vld [vmem:[%s1 + $0x9c] sm:$0xff]
  %v102 = vld [vmem:[%s1 + $0xa4] sm:$0xf]
  %v103 = vld [vmem:[%s1 + $0xa8] sm:$0xff]
  %v104 = vld [vmem:[%s1 + $0xb0] sm:$0xf]
  %v105 = vld [vmem:[%s1 + $0xb4] sm:$0xff]
  %v106 = vld [vmem:[%s1 + $0xbc] sm:$0xf]
  %v107 = vld [vmem:[%s1 + $0xc0] sm:$0xff]
  %v108 = vld [vmem:[%s1 + $0xc8] sm:$0xf]
  %v109 = vld [vmem:[%s1 + $0xcc] sm:$0xff]
  %v110 = vld [vmem:[%s1 + $0xd4] sm:$0xf]
  %v111 = vld [vmem:[%s2] sm:$0x7]
  %v113 = vlaneseq
  %v114 = vshrl.u32 %v113, 7
  %v115 = vsub.s32 0, %v114
  %v116 = vrot.slane %v111, %v115
  %v117 = vlaneseq
  %v118 = vshrl.u32 %v117, 7
  %v119 = vsub.s32 1, %v118
  %v120 = vrot.slane %v111, %v119
  %v121 = vlaneseq
  %v122 = vshrl.u32 %v121, 7
  %v123 = vsub.s32 2, %v122
  %v124 = vrot.slane %v111, %v123
  %v176 = vunpack.c.l.b16 %v27
  %v177 = vunpack.c.h.b16 %v27
  %v178 = vunpack.c.l.b16 %v28
  %v179 = vunpack.c.h.b16 %v28
  %v180 = vunpack.c.l.b16 %v29
  %v181 = vunpack.c.h.b16 %v29
  %v182 = vunpack.c.l.b16 %v30
  %v183 = vunpack.c.h.b16 %v30
  %v184 = vunpack.c.l.b16 %v31
  %v185 = vunpack.c.h.b16 %v31
  %v186 = vunpack.c.l.b16 %v32
  %v187 = vunpack.c.h.b16 %v32
  %v188 = vunpack.c.l.b16 %v33
  %v189 = vunpack.c.h.b16 %v33
  %v190 = vunpack.c.l.b16 %v34
  %v191 = vunpack.c.h.b16 %v34
  %v192 = vunpack.c.l.b16 %v35
  %v193 = vunpack.c.h.b16 %v35
  %v194 = vunpack.c.l.b16 %v36
  %v195 = vunpack.c.h.b16 %v36
  %v196 = vunpack.c.l.b16 %v37
  %v197 = vunpack.c.h.b16 %v37
  %v198 = vunpack.c.l.b16 %v38
  %v199 = vunpack.c.h.b16 %v38
  %v200 = vunpack.c.l.b16 %v39
  %v201 = vunpack.c.h.b16 %v39
  %v202 = vunpack.c.l.b16 %v40
  %v203 = vunpack.c.h.b16 %v40
  %v204 = vunpack.c.l.b16 %v41
  %v205 = vunpack.c.h.b16 %v41
  %v206 = vunpack.c.l.b16 %v42
  %v207 = vunpack.c.h.b16 %v42
  %v208 = vunpack.c.l.b16 %v43
  %v209 = vunpack.c.h.b16 %v43
  %v210 = vunpack.c.l.b16 %v44
  %v211 = vunpack.c.h.b16 %v44
  %v212 = vunpack.c.l.b16 %v45
  %v213 = vunpack.c.h.b16 %v45
  %v214 = vunpack.c.l.b16 %v46
  %v215 = vunpack.c.h.b16 %v46
  %v216 = vunpack.c.l.b16 %v47
  %v217 = vunpack.c.h.b16 %v47
  %v218 = vunpack.c.l.b16 %v48
  %v219 = vunpack.c.h.b16 %v48
  %v220 = vunpack.c.l.b16 %v49
  %v221 = vunpack.c.h.b16 %v49
  %v222 = vunpack.c.l.b16 %v50
  %v223 = vunpack.c.h.b16 %v50
  %v224 = vunpack.c.l.b16 %v51
  %v225 = vunpack.c.h.b16 %v51
  %v226 = vunpack.c.l.b16 %v52
  %v227 = vunpack.c.h.b16 %v52
  %v228 = vunpack.c.l.b16 %v53
  %v229 = vunpack.c.h.b16 %v53
  %v230 = vunpack.c.l.b16 %v54
  %v231 = vunpack.c.h.b16 %v54
  %v232 = vunpack.c.l.b16 %v55
  %v233 = vunpack.c.h.b16 %v55
  %v234 = vunpack.c.l.b16 %v56
  %v235 = vunpack.c.h.b16 %v56
  %v236 = vunpack.c.l.b16 %v57
  %v237 = vunpack.c.h.b16 %v57
  %v238 = vunpack.c.l.b16 %v58
  %v239 = vunpack.c.h.b16 %v58
  %v240 = vunpack.c.l.b16 %v59
  %v241 = vunpack.c.h.b16 %v59
  %v242 = vunpack.c.l.b16 %v60
  %v243 = vunpack.c.h.b16 %v60
  %v244 = vunpack.c.l.b16 %v61
  %v245 = vunpack.c.h.b16 %v61
  %v246 = vunpack.c.l.b16 %v62
  %v247 = vunpack.c.h.b16 %v62
  %v248 = vunpack.c.l.b16 %v63
  %v249 = vunpack.c.h.b16 %v63
  %v250 = vunpack.c.l.b16 %v64
  %v251 = vunpack.c.h.b16 %v64
  %v252 = vunpack.c.l.b16 %v65
  %v253 = vunpack.c.h.b16 %v65
  %v254 = vunpack.c.l.b16 %v66
  %v255 = vunpack.c.h.b16 %v66
  %v256 = vunpack.c.l.b16 %v67
  %v257 = vunpack.c.h.b16 %v67
  %v258 = vunpack.c.l.b16 %v68
  %v259 = vunpack.c.h.b16 %v68
  %v260 = vunpack.c.l.b16 %v69
  %v261 = vunpack.c.h.b16 %v69
  %v262 = vunpack.c.l.b16 %v70
  %v263 = vunpack.c.h.b16 %v70
  %v264 = vunpack.c.l.b16 %v71
  %v265 = vunpack.c.h.b16 %v71
  %v266 = vunpack.c.l.b16 %v72
  %v267 = vunpack.c.h.b16 %v72
  %v268 = vunpack.c.l.b16 %v73
  %v269 = vunpack.c.h.b16 %v73
  %v270 = vunpack.c.l.b16 %v74
  %v271 = vunpack.c.h.b16 %v74
  %v272 = vpack.c.b16 %v178, %v176
  %v273 = vpack.c.b16 %v179, %v177
  %v274 = vpack.c.b16 %v182, %v180
  %v275 = vpack.c.b16 %v183, %v181
  %v276 = vpack.c.b16 %v186, %v184
  %v277 = vpack.c.b16 %v187, %v185
  %v278 = vpack.c.b16 %v190, %v188
  %v279 = vpack.c.b16 %v191, %v189
  %v280 = vpack.c.b16 %v194, %v192
  %v281 = vpack.c.b16 %v195, %v193
  %v282 = vpack.c.b16 %v198, %v196
  %v283 = vpack.c.b16 %v199, %v197
  %v284 = vpack.c.b16 %v202, %v200
  %v285 = vpack.c.b16 %v203, %v201
  %v286 = vpack.c.b16 %v206, %v204
  %v287 = vpack.c.b16 %v207, %v205
  %v288 = vpack.c.b16 %v210, %v208
  %v289 = vpack.c.b16 %v211, %v209
  %v290 = vpack.c.b16 %v214, %v212
  %v291 = vpack.c.b16 %v215, %v213
  %v292 = vpack.c.b16 %v218, %v216
  %v293 = vpack.c.b16 %v219, %v217
  %v294 = vpack.c.b16 %v222, %v220
  %v295 = vpack.c.b16 %v223, %v221
  %v296 = vpack.c.b16 %v226, %v224
  %v297 = vpack.c.b16 %v227, %v225
  %v298 = vpack.c.b16 %v230, %v228
  %v299 = vpack.c.b16 %v231, %v229
  %v300 = vpack.c.b16 %v234, %v232
  %v301 = vpack.c.b16 %v235, %v233
  %v302 = vpack.c.b16 %v238, %v236
  %v303 = vpack.c.b16 %v239, %v237
  %v304 = vpack.c.b16 %v242, %v240
  %v305 = vpack.c.b16 %v243, %v241
  %v306 = vpack.c.b16 %v246, %v244
  %v307 = vpack.c.b16 %v247, %v245
  %v308 = vpack.c.b16 %v250, %v248
  %v309 = vpack.c.b16 %v251, %v249
  %v310 = vpack.c.b16 %v254, %v252
  %v311 = vpack.c.b16 %v255, %v253
  %v312 = vpack.c.b16 %v258, %v256
  %v313 = vpack.c.b16 %v259, %v257
  %v314 = vpack.c.b16 %v262, %v260
  %v315 = vpack.c.b16 %v263, %v261
  %v316 = vpack.c.b16 %v266, %v264
  %v317 = vpack.c.b16 %v267, %v265
  %v318 = vpack.c.b16 %v270, %v268
  %v319 = vpack.c.b16 %v271, %v269
  %v380 = vunpack.c.l.b16 %v75
  %v381 = vunpack.c.h.b16 %v75
  %v382 = vunpack.c.l.b16 %v76
  %v383 = vunpack.c.l.b16 %v77
  %v384 = vunpack.c.h.b16 %v77
  %v385 = vunpack.c.l.b16 %v78
  %v386 = vunpack.c.l.b16 %v79
  %v387 = vunpack.c.h.b16 %v79
  %v388 = vunpack.c.l.b16 %v80
  %v389 = vunpack.c.l.b16 %v81
  %v390 = vunpack.c.h.b16 %v81
  %v391 = vunpack.c.l.b16 %v82
  %v392 = vunpack.c.l.b16 %v83
  %v393 = vunpack.c.h.b16 %v83
  %v394 = vunpack.c.l.b16 %v84
  %v395 = vunpack.c.l.b16 %v85
  %v396 = vunpack.c.h.b16 %v85
  %v397 = vunpack.c.l.b16 %v86
  %v398 = vunpack.c.l.b16 %v87
  %v399 = vunpack.c.h.b16 %v87
  %v400 = vunpack.c.l.b16 %v88
  %v401 = vunpack.c.l.b16 %v89
  %v402 = vunpack.c.h.b16 %v89
  %v403 = vunpack.c.l.b16 %v90
  %v404 = vunpack.c.l.b16 %v91
  %v405 = vunpack.c.h.b16 %v91
  %v406 = vunpack.c.l.b16 %v92
  %v407 = vunpack.c.l.b16 %v93
  %v408 = vunpack.c.h.b16 %v93
  %v409 = vunpack.c.l.b16 %v94
  %v410 = vunpack.c.l.b16 %v95
  %v411 = vunpack.c.h.b16 %v95
  %v412 = vunpack.c.l.b16 %v96
  %v413 = vunpack.c.l.b16 %v97
  %v414 = vunpack.c.h.b16 %v97
  %v415 = vunpack.c.l.b16 %v98
  %v416 = vunpack.c.l.b16 %v99
  %v417 = vunpack.c.h.b16 %v99
  %v418 = vunpack.c.l.b16 %v100
  %v419 = vunpack.c.l.b16 %v101
  %v420 = vunpack.c.h.b16 %v101
  %v421 = vunpack.c.l.b16 %v102
  %v422 = vunpack.c.l.b16 %v103
  %v423 = vunpack.c.h.b16 %v103
  %v424 = vunpack.c.l.b16 %v104
  %v425 = vunpack.c.l.b16 %v105
  %v426 = vunpack.c.h.b16 %v105
  %v427 = vunpack.c.l.b16 %v106
  %v428 = vunpack.c.l.b16 %v107
  %v429 = vunpack.c.h.b16 %v107
  %v430 = vunpack.c.l.b16 %v108
  %v431 = vunpack.c.l.b16 %v109
  %v432 = vunpack.c.h.b16 %v109
  %v433 = vunpack.c.l.b16 %v110
  %v434 = vpack.c.b16 %v383, %v380
  %v435 = vpack.c.b16 %v384, %v381
  %v436 = vpack.c.b16 %v385, %v382
  %v437 = vpack.c.b16 %v389, %v386
  %v438 = vpack.c.b16 %v390, %v387
  %v439 = vpack.c.b16 %v391, %v388
  %v440 = vpack.c.b16 %v395, %v392
  %v441 = vpack.c.b16 %v396, %v393
  %v442 = vpack.c.b16 %v397, %v394
  %v443 = vpack.c.b16 %v401, %v398
  %v444 = vpack.c.b16 %v402, %v399
  %v445 = vpack.c.b16 %v403, %v400
  %v446 = vpack.c.b16 %v407, %v404
  %v447 = vpack.c.b16 %v408, %v405
  %v448 = vpack.c.b16 %v409, %v406
  %v449 = vpack.c.b16 %v413, %v410
  %v450 = vpack.c.b16 %v414, %v411
  %v451 = vpack.c.b16 %v415, %v412
  %v452 = vpack.c.b16 %v419, %v416
  %v453 = vpack.c.b16 %v420, %v417
  %v454 = vpack.c.b16 %v421, %v418
  %v455 = vpack.c.b16 %v425, %v422
  %v456 = vpack.c.b16 %v426, %v423
  %v457 = vpack.c.b16 %v427, %v424
  %v458 = vpack.c.b16 %v431, %v428
  %v459 = vpack.c.b16 %v432, %v429
  %v460 = vpack.c.b16 %v433, %v430
  %vm488 = vcmask 130048
  %v490 = vsel %vm488, %v273, 0
  %v493 = vsel %vm488, %v275, 0
  %v496 = vsel %vm488, %v277, 0
  %v499 = vsel %vm488, %v279, 0
  %v502 = vsel %vm488, %v281, 0
  %v505 = vsel %vm488, %v283, 0
  %v508 = vsel %vm488, %v285, 0
  %v511 = vsel %vm488, %v287, 0
  %v514 = vsel %vm488, %v289, 0
  %v517 = vsel %vm488, %v291, 0
  %v520 = vsel %vm488, %v293, 0
  %v523 = vsel %vm488, %v295, 0
  %v526 = vsel %vm488, %v297, 0
  %v529 = vsel %vm488, %v299, 0
  %v532 = vsel %vm488, %v301, 0
  %v535 = vsel %vm488, %v303, 0
  %v538 = vsel %vm488, %v305, 0
  %v541 = vsel %vm488, %v307, 0
  %v544 = vsel %vm488, %v309, 0
  %v547 = vsel %vm488, %v311, 0
  %v550 = vsel %vm488, %v313, 0
  %v553 = vsel %vm488, %v315, 0
  %v556 = vsel %vm488, %v317, 0
  %v559 = vsel %vm488, %v319, 0
  %561 = vmatprep.subr.bf16.mxu0 %v435
  %562 = vmatpush1.bf16.msra.mxu0 %v434
  %563 = vmatprep.subr.bf16.mxu0 %v438
  %564 = vmatpush1.bf16.msra.mxu0 %v437
  %565 = vmatprep.subr.bf16.mxu0 %v441
  %566 = vmatpush1.bf16.msra.mxu0 %v440
  %567 = vmatprep.subr.bf16.mxu0 %v444
  %568 = vmatpush1.bf16.msra.mxu0 %v443
  %569 = vmatprep.subr.bf16.mxu0 %v447
  %570 = vmatpush1.bf16.msra.mxu0 %v446
  %571 = vmatprep.subr.bf16.mxu0 %v450
  %572 = vmatpush1.bf16.msra.mxu0 %v449
  %573 = vmatprep.subr.bf16.mxu0 %v453
  %574 = vmatpush1.bf16.msra.mxu0 %v452
  %575 = vmatprep.subr.bf16.mxu0 %v456
  %576 = vmatpush1.bf16.msra.mxu0 %v455
  %577 = vmatprep.subr.bf16.mxu0 %v459
  %578 = vmatpush1.bf16.msra.mxu0 %v458
  %579 = vmatprep.subr.bf16.mxu0 0
  %580 = vmatpush1.bf16.msra.mxu0 0
  %581 = vmatprep.subr.bf16.mxu0 0
  %582 = vmatpush1.bf16.msra.mxu0 0
  %583 = vmatprep.subr.bf16.mxu0 0
  %584 = vmatpush1.bf16.msra.mxu0 0
  %585 = vmatprep.subr.bf16.mxu0 0
  %586 = vmatpush1.bf16.msra.mxu0 0
  %587 = vmatprep.subr.bf16.mxu0 0
  %588 = vmatpush1.bf16.msra.mxu0 0
  %589 = vmatprep.subr.bf16.mxu0 0
  %590 = vmatpush1.bf16.msra.mxu0 0
  %591 = vmatprep.subr.bf16.mxu0 0
  %592 = vmatpush1.bf16.msra.mxu0 0
  %593 = vmatprep.mubr.bf16.mxu0 %v490
  %594 = vmatmul.mubr.bf16.gmra.mrb[0].mxu0 %v272
  %v595 = vpop.f32.mrb[0].mxu0
  %v596 = vadd.f32 %v116, %v595
  %v597 = vpop.f32.mrb[0].mxu0
  %v598 = vadd.f32 %v120, %v597
  %v599 = vpop.f32.mrb[0].mxu0
  %v600 = vadd.f32 %v116, %v599
  %v601 = vpop.f32.mrb[0].mxu0
  %v602 = vadd.f32 %v120, %v601
  %603 = vmatprep.mubr.bf16.mxu0 %v493
  %604 = vmatmul.mubr.bf16.gmra.mrb[0].mxu0 %v274
  %v605 = vpop.f32.mrb[0].mxu0
  %v606 = vadd.f32 %v116, %v605
  %v607 = vpop.f32.mrb[0].mxu0
  %v608 = vadd.f32 %v120, %v607
  %v609 = vpop.f32.mrb[0].mxu0
  %v610 = vadd.f32 %v116, %v609
  %v611 = vpop.f32.mrb[0].mxu0
  %v612 = vadd.f32 %v120, %v611
  %613 = vmatprep.mubr.bf16.mxu0 %v496
  %614 = vmatmul.mubr.bf16.gmra.mrb[0].mxu0 %v276
  %v615 = vpop.f32.mrb[0].mxu0
  %v616 = vadd.f32 %v116, %v615
  %v617 = vpop.f32.mrb[0].mxu0
  %v618 = vadd.f32 %v120, %v617
  %v619 = vpop.f32.mrb[0].mxu0
  %v620 = vadd.f32 %v116, %v619
  %v621 = vpop.f32.mrb[0].mxu0
  %v622 = vadd.f32 %v120, %v621
  %623 = vmatprep.mubr.bf16.mxu0 %v499
  %624 = vmatmul.mubr.bf16.gmra.mrb[0].mxu0 %v278
  %v625 = vpop.f32.mrb[0].mxu0
  %v626 = vadd.f32 %v116, %v625
  %v627 = vpop.f32.mrb[0].mxu0
  %v628 = vadd.f32 %v120, %v627
  %v629 = vpop.f32.mrb[0].mxu0
  %v630 = vadd.f32 %v116, %v629
  %v631 = vpop.f32.mrb[0].mxu0
  %v632 = vadd.f32 %v120, %v631
  %633 = vmatprep.mubr.bf16.mxu0 %v502
  %634 = vmatmul.mubr.bf16.gmra.mrb[0].mxu0 %v280
  %v635 = vpop.f32.mrb[0].mxu0
  %v636 = vadd.f32 %v116, %v635
  %v637 = vpop.f32.mrb[0].mxu0
  %v638 = vadd.f32 %v120, %v637
  %v639 = vpop.f32.mrb[0].mxu0
  %v640 = vadd.f32 %v116, %v639
  %v641 = vpop.f32.mrb[0].mxu0
  %v642 = vadd.f32 %v120, %v641
  %643 = vmatprep.mubr.bf16.mxu0 %v505
  %644 = vmatmul.mubr.bf16.gmra.mrb[0].mxu0 %v282
  %v645 = vpop.f32.mrb[0].mxu0
  %v646 = vadd.f32 %v116, %v645
  %v647 = vpop.f32.mrb[0].mxu0
  %v648 = vadd.f32 %v120, %v647
  %v649 = vpop.f32.mrb[0].mxu0
  %v650 = vadd.f32 %v116, %v649
  %v651 = vpop.f32.mrb[0].mxu0
  %v652 = vadd.f32 %v120, %v651
  %653 = vmatprep.mubr.bf16.mxu0 %v508
  %654 = vmatmul.mubr.bf16.gmra.mrb[0].mxu0 %v284
  %v655 = vpop.f32.mrb[0].mxu0
  %v656 = vadd.f32 %v116, %v655
  %v657 = vpop.f32.mrb[0].mxu0
  %v658 = vadd.f32 %v120, %v657
  %v659 = vpop.f32.mrb[0].mxu0
  %v660 = vadd.f32 %v116, %v659
  %v661 = vpop.f32.mrb[0].mxu0
  %v662 = vadd.f32 %v120, %v661
  %663 = vmatprep.mubr.bf16.mxu0 %v511
  %664 = vmatmul.mubr.bf16.gmra.mrb[0].mxu0 %v286
  %v665 = vpop.f32.mrb[0].mxu0
  %v666 = vadd.f32 %v116, %v665
  %v667 = vpop.f32.mrb[0].mxu0
  %v668 = vadd.f32 %v120, %v667
  %v669 = vpop.f32.mrb[0].mxu0
  %v670 = vadd.f32 %v116, %v669
  %v671 = vpop.f32.mrb[0].mxu0
  %v672 = vadd.f32 %v120, %v671
  %673 = vmatprep.mubr.bf16.mxu0 %v514
  %674 = vmatmul.mubr.bf16.gmra.mrb[0].mxu0 %v288
  %v675 = vpop.f32.mrb[0].mxu0
  %v676 = vadd.f32 %v116, %v675
  %v677 = vpop.f32.mrb[0].mxu0
  %v678 = vadd.f32 %v120, %v677
  %v679 = vpop.f32.mrb[0].mxu0
  %v680 = vadd.f32 %v116, %v679
  %v681 = vpop.f32.mrb[0].mxu0
  %v682 = vadd.f32 %v120, %v681
  %683 = vmatprep.mubr.bf16.mxu0 %v517
  %684 = vmatmul.mubr.bf16.gmra.mrb[0].mxu0 %v290
  %v685 = vpop.f32.mrb[0].mxu0
  %v686 = vadd.f32 %v116, %v685
  %v687 = vpop.f32.mrb[0].mxu0
  %v688 = vadd.f32 %v120, %v687
  %v689 = vpop.f32.mrb[0].mxu0
  %v690 = vadd.f32 %v116, %v689
  %v691 = vpop.f32.mrb[0].mxu0
  %v692 = vadd.f32 %v120, %v691
  %693 = vmatprep.mubr.bf16.mxu0 %v520
  %694 = vmatmul.mubr.bf16.gmra.mrb[0].mxu0 %v292
  %v695 = vpop.f32.mrb[0].mxu0
  %v696 = vadd.f32 %v116, %v695
  %v697 = vpop.f32.mrb[0].mxu0
  %v698 = vadd.f32 %v120, %v697
  %v699 = vpop.f32.mrb[0].mxu0
  %v700 = vadd.f32 %v116, %v699
  %v701 = vpop.f32.mrb[0].mxu0
  %v702 = vadd.f32 %v120, %v701
  %703 = vmatprep.mubr.bf16.mxu0 %v523
  %704 = vmatmul.mubr.bf16.gmra.mrb[0].mxu0 %v294
  %v705 = vpop.f32.mrb[0].mxu0
  %v706 = vadd.f32 %v116, %v705
  %v707 = vpop.f32.mrb[0].mxu0
  %v708 = vadd.f32 %v120, %v707
  %v709 = vpop.f32.mrb[0].mxu0
  %v710 = vadd.f32 %v116, %v709
  %v711 = vpop.f32.mrb[0].mxu0
  %v712 = vadd.f32 %v120, %v711
  %713 = vmatprep.mubr.bf16.mxu0 %v526
  %714 = vmatmul.mubr.bf16.gmra.mrb[0].mxu0 %v296
  %v715 = vpop.f32.mrb[0].mxu0
  %v716 = vadd.f32 %v116, %v715
  %v717 = vpop.f32.mrb[0].mxu0
  %v718 = vadd.f32 %v120, %v717
  %v719 = vpop.f32.mrb[0].mxu0
  %v720 = vadd.f32 %v116, %v719
  %v721 = vpop.f32.mrb[0].mxu0
  %v722 = vadd.f32 %v120, %v721
  %723 = vmatprep.mubr.bf16.mxu0 %v529
  %724 = vmatmul.mubr.bf16.gmra.mrb[0].mxu0 %v298
  %v725 = vpop.f32.mrb[0].mxu0
  %v726 = vadd.f32 %v116, %v725
  %v727 = vpop.f32.mrb[0].mxu0
  %v728 = vadd.f32 %v120, %v727
  %v729 = vpop.f32.mrb[0].mxu0
  %v730 = vadd.f32 %v116, %v729
  %v731 = vpop.f32.mrb[0].mxu0
  %v732 = vadd.f32 %v120, %v731
  %733 = vmatprep.mubr.bf16.mxu0 %v532
  %734 = vmatmul.mubr.bf16.gmra.mrb[0].mxu0 %v300
  %v735 = vpop.f32.mrb[0].mxu0
  %v736 = vadd.f32 %v116, %v735
  %v737 = vpop.f32.mrb[0].mxu0
  %v738 = vadd.f32 %v120, %v737
  %v739 = vpop.f32.mrb[0].mxu0
  %v740 = vadd.f32 %v116, %v739
  %v741 = vpop.f32.mrb[0].mxu0
  %v742 = vadd.f32 %v120, %v741
  %743 = vmatprep.mubr.bf16.mxu0 %v535
  %744 = vmatmul.mubr.bf16.gmra.mrb[0].mxu0 %v302
  %v745 = vpop.f32.mrb[0].mxu0
  %v746 = vadd.f32 %v116, %v745
  %v747 = vpop.f32.mrb[0].mxu0
  %v748 = vadd.f32 %v120, %v747
  %v749 = vpop.f32.mrb[0].mxu0
  %v750 = vadd.f32 %v116, %v749
  %v751 = vpop.f32.mrb[0].mxu0
  %v752 = vadd.f32 %v120, %v751
  %753 = vmatprep.mubr.bf16.mxu0 %v538
  %754 = vmatmul.mubr.bf16.gmra.mrb[0].mxu0 %v304
  %v755 = vpop.f32.mrb[0].mxu0
  %v756 = vadd.f32 %v116, %v755
  %v757 = vpop.f32.mrb[0].mxu0
  %v758 = vadd.f32 %v120, %v757
  %v759 = vpop.f32.mrb[0].mxu0
  %v760 = vadd.f32 %v116, %v759
  %v761 = vpop.f32.mrb[0].mxu0
  %v762 = vadd.f32 %v120, %v761
  %763 = vmatprep.mubr.bf16.mxu0 %v541
  %764 = vmatmul.mubr.bf16.gmra.mrb[0].mxu0 %v306
  %v765 = vpop.f32.mrb[0].mxu0
  %v766 = vadd.f32 %v116, %v765
  %v767 = vpop.f32.mrb[0].mxu0
  %v768 = vadd.f32 %v120, %v767
  %v769 = vpop.f32.mrb[0].mxu0
  %v770 = vadd.f32 %v116, %v769
  %v771 = vpop.f32.mrb[0].mxu0
  %v772 = vadd.f32 %v120, %v771
  %773 = vmatprep.mubr.bf16.mxu0 %v544
  %774 = vmatmul.mubr.bf16.gmra.mrb[0].mxu0 %v308
  %v775 = vpop.f32.mrb[0].mxu0
  %v776 = vadd.f32 %v116, %v775
  %v777 = vpop.f32.mrb[0].mxu0
  %v778 = vadd.f32 %v120, %v777
  %v779 = vpop.f32.mrb[0].mxu0
  %v780 = vadd.f32 %v116, %v779
  %v781 = vpop.f32.mrb[0].mxu0
  %v782 = vadd.f32 %v120, %v781
  %783 = vmatprep.mubr.bf16.mxu0 %v547
  %784 = vmatmul.mubr.bf16.gmra.mrb[0].mxu0 %v310
  %v785 = vpop.f32.mrb[0].mxu0
  %v786 = vadd.f32 %v116, %v785
  %v787 = vpop.f32.mrb[0].mxu0
  %v788 = vadd.f32 %v120, %v787
  %v789 = vpop.f32.mrb[0].mxu0
  %v790 = vadd.f32 %v116, %v789
  %v791 = vpop.f32.mrb[0].mxu0
  %v792 = vadd.f32 %v120, %v791
  %793 = vmatprep.mubr.bf16.mxu0 %v550
  %794 = vmatmul.mubr.bf16.gmra.mrb[0].mxu0 %v312
  %v795 = vpop.f32.mrb[0].mxu0
  %v796 = vadd.f32 %v116, %v795
  %v797 = vpop.f32.mrb[0].mxu0
  %v798 = vadd.f32 %v120, %v797
  %v799 = vpop.f32.mrb[0].mxu0
  %v800 = vadd.f32 %v116, %v799
  %v801 = vpop.f32.mrb[0].mxu0
  %v802 = vadd.f32 %v120, %v801
  %803 = vmatprep.mubr.bf16.mxu0 %v553
  %804 = vmatmul.mubr.bf16.gmra.mrb[0].mxu0 %v314
  %v805 = vpop.f32.mrb[0].mxu0
  %v806 = vadd.f32 %v116, %v805
  %v807 = vpop.f32.mrb[0].mxu0
  %v808 = vadd.f32 %v120, %v807
  %v809 = vpop.f32.mrb[0].mxu0
  %v810 = vadd.f32 %v116, %v809
  %v811 = vpop.f32.mrb[0].mxu0
  %v812 = vadd.f32 %v120, %v811
  %813 = vmatprep.mubr.bf16.mxu0 %v556
  %814 = vmatmul.mubr.bf16.gmra.mrb[0].mxu0 %v316
  %v815 = vpop.f32.mrb[0].mxu0
  %v816 = vadd.f32 %v116, %v815
  %v817 = vpop.f32.mrb[0].mxu0
  %v818 = vadd.f32 %v120, %v817
  %v819 = vpop.f32.mrb[0].mxu0
  %v820 = vadd.f32 %v116, %v819
  %v821 = vpop.f32.mrb[0].mxu0
  %v822 = vadd.f32 %v120, %v821
  %823 = vmatprep.mubr.bf16.mxu0 %v559
  %824 = vmatmul.mubr.bf16.gmra.mrb[0].mxu0 %v318
  %v825 = vpop.f32.mrb[0].mxu0
  %v826 = vadd.f32 %v116, %v825
  %v827 = vpop.f32.mrb[0].mxu0
  %v828 = vadd.f32 %v120, %v827
  %v829 = vpop.f32.mrb[0].mxu0
  %v830 = vadd.f32 %v116, %v829
  %v831 = vpop.f32.mrb[0].mxu0
  %v832 = vadd.f32 %v120, %v831
  %833 = vdwg.mxu0
  %834 = vmatprep.subr.bf16.mxu0 0
  %835 = vmatpush1.bf16.msra.mxu0 %v436
  %836 = vmatprep.subr.bf16.mxu0 0
  %837 = vmatpush1.bf16.msra.mxu0 %v439
  %838 = vmatprep.subr.bf16.mxu0 0
  %839 = vmatpush1.bf16.msra.mxu0 %v442
  %840 = vmatprep.subr.bf16.mxu0 0
  %841 = vmatpush1.bf16.msra.mxu0 %v445
  %842 = vmatprep.subr.bf16.mxu0 0
  %843 = vmatpush1.bf16.msra.mxu0 %v448
  %844 = vmatprep.subr.bf16.mxu0 0
  %845 = vmatpush1.bf16.msra.mxu0 %v451
  %846 = vmatprep.subr.bf16.mxu0 0
  %847 = vmatpush1.bf16.msra.mxu0 %v454
  %848 = vmatprep.subr.bf16.mxu0 0
  %849 = vmatpush1.bf16.msra.mxu0 %v457
  %850 = vmatprep.subr.bf16.mxu0 0
  %851 = vmatpush1.bf16.msra.mxu0 %v460
  %852 = vmatprep.subr.bf16.mxu0 0
  %853 = vmatpush1.bf16.msra.mxu0 0
  %854 = vmatprep.subr.bf16.mxu0 0
  %855 = vmatpush1.bf16.msra.mxu0 0
  %856 = vmatprep.subr.bf16.mxu0 0
  %857 = vmatpush1.bf16.msra.mxu0 0
  %858 = vmatprep.subr.bf16.mxu0 0
  %859 = vmatpush1.bf16.msra.mxu0 0
  %860 = vmatprep.subr.bf16.mxu0 0
  %861 = vmatpush1.bf16.msra.mxu0 0
  %862 = vmatprep.subr.bf16.mxu0 0
  %863 = vmatpush1.bf16.msra.mxu0 0
  %864 = vmatprep.subr.bf16.mxu0 0
  %865 = vmatpush1.bf16.msra.mxu0 0
  %866 = vmatprep.mubr.bf16.mxu0 %v490
  %867 = vmatmul.mubr.bf16.gmra.mrb[0].mxu0 %v272
  %v868 = vpop.f32.mrb[0].mxu0
  %v869 = vadd.f32 %v124, %v868
  %v870 = vpop.f32.mrb[0].mxu0
  %v871 = vpop.f32.mrb[0].mxu0
  %v872 = vadd.f32 %v124, %v871
  %v873 = vpop.f32.mrb[0].mxu0
  %874 = vmatprep.mubr.bf16.mxu0 %v493
  %875 = vmatmul.mubr.bf16.gmra.mrb[0].mxu0 %v274
  %v876 = vpop.f32.mrb[0].mxu0
  %v877 = vadd.f32 %v124, %v876
  %v878 = vpop.f32.mrb[0].mxu0
  %v879 = vpop.f32.mrb[0].mxu0
  %v880 = vadd.f32 %v124, %v879
  %v881 = vpop.f32.mrb[0].mxu0
  %882 = vmatprep.mubr.bf16.mxu0 %v496
  %883 = vmatmul.mubr.bf16.gmra.mrb[0].mxu0 %v276
  %v884 = vpop.f32.mrb[0].mxu0
  %v885 = vadd.f32 %v124, %v884
  %v886 = vpop.f32.mrb[0].mxu0
  %v887 = vpop.f32.mrb[0].mxu0
  %v888 = vadd.f32 %v124, %v887
  %v889 = vpop.f32.mrb[0].mxu0
  %890 = vmatprep.mubr.bf16.mxu0 %v499
  %891 = vmatmul.mubr.bf16.gmra.mrb[0].mxu0 %v278
  %v892 = vpop.f32.mrb[0].mxu0
  %v893 = vadd.f32 %v124, %v892
  %v894 = vpop.f32.mrb[0].mxu0
  %v895 = vpop.f32.mrb[0].mxu0
  %v896 = vadd.f32 %v124, %v895
  %v897 = vpop.f32.mrb[0].mxu0
  %898 = vmatprep.mubr.bf16.mxu0 %v502
  %899 = vmatmul.mubr.bf16.gmra.mrb[0].mxu0 %v280
  %v900 = vpop.f32.mrb[0].mxu0
  %v901 = vadd.f32 %v124, %v900
  %v902 = vpop.f32.mrb[0].mxu0
  %v903 = vpop.f32.mrb[0].mxu0
  %v904 = vadd.f32 %v124, %v903
  %v905 = vpop.f32.mrb[0].mxu0
  %906 = vmatprep.mubr.bf16.mxu0 %v505
  %907 = vmatmul.mubr.bf16.gmra.mrb[0].mxu0 %v282
  %v908 = vpop.f32.mrb[0].mxu0
  %v909 = vadd.f32 %v124, %v908
  %v910 = vpop.f32.mrb[0].mxu0
  %v911 = vpop.f32.mrb[0].mxu0
  %v912 = vadd.f32 %v124, %v911
  %v913 = vpop.f32.mrb[0].mxu0
  %914 = vmatprep.mubr.bf16.mxu0 %v508
  %915 = vmatmul.mubr.bf16.gmra.mrb[0].mxu0 %v284
  %v916 = vpop.f32.mrb[0].mxu0
  %v917 = vadd.f32 %v124, %v916
  %v918 = vpop.f32.mrb[0].mxu0
  %v919 = vpop.f32.mrb[0].mxu0
  %v920 = vadd.f32 %v124, %v919
  %v921 = vpop.f32.mrb[0].mxu0
  %922 = vmatprep.mubr.bf16.mxu0 %v511
  %923 = vmatmul.mubr.bf16.gmra.mrb[0].mxu0 %v286
  %v924 = vpop.f32.mrb[0].mxu0
  %v925 = vadd.f32 %v124, %v924
  %v926 = vpop.f32.mrb[0].mxu0
  %v927 = vpop.f32.mrb[0].mxu0
  %v928 = vadd.f32 %v124, %v927
  %v929 = vpop.f32.mrb[0].mxu0
  %930 = vmatprep.mubr.bf16.mxu0 %v514
  %931 = vmatmul.mubr.bf16.gmra.mrb[0].mxu0 %v288
  %v932 = vpop.f32.mrb[0].mxu0
  %v933 = vadd.f32 %v124, %v932
  %v934 = vpop.f32.mrb[0].mxu0
  %v935 = vpop.f32.mrb[0].mxu0
  %v936 = vadd.f32 %v124, %v935
  %v937 = vpop.f32.mrb[0].mxu0
  %938 = vmatprep.mubr.bf16.mxu0 %v517
  %939 = vmatmul.mubr.bf16.gmra.mrb[0].mxu0 %v290
  %v940 = vpop.f32.mrb[0].mxu0
  %v941 = vadd.f32 %v124, %v940
  %v942 = vpop.f32.mrb[0].mxu0
  %v943 = vpop.f32.mrb[0].mxu0
  %v944 = vadd.f32 %v124, %v943
  %v945 = vpop.f32.mrb[0].mxu0
  %946 = vmatprep.mubr.bf16.mxu0 %v520
  %947 = vmatmul.mubr.bf16.gmra.mrb[0].mxu0 %v292
  %v948 = vpop.f32.mrb[0].mxu0
  %v949 = vadd.f32 %v124, %v948
  %v950 = vpop.f32.mrb[0].mxu0
  %v951 = vpop.f32.mrb[0].mxu0
  %v952 = vadd.f32 %v124, %v951
  %v953 = vpop.f32.mrb[0].mxu0
  %954 = vmatprep.mubr.bf16.mxu0 %v523
  %955 = vmatmul.mubr.bf16.gmra.mrb[0].mxu0 %v294
  %v956 = vpop.f32.mrb[0].mxu0
  %v957 = vadd.f32 %v124, %v956
  %v958 = vpop.f32.mrb[0].mxu0
  %v959 = vpop.f32.mrb[0].mxu0
  %v960 = vadd.f32 %v124, %v959
  %v961 = vpop.f32.mrb[0].mxu0
  %962 = vmatprep.mubr.bf16.mxu0 %v526
  %963 = vmatmul.mubr.bf16.gmra.mrb[0].mxu0 %v296
  %v964 = vpop.f32.mrb[0].mxu0
  %v965 = vadd.f32 %v124, %v964
  %v966 = vpop.f32.mrb[0].mxu0
  %v967 = vpop.f32.mrb[0].mxu0
  %v968 = vadd.f32 %v124, %v967
  %v969 = vpop.f32.mrb[0].mxu0
  %970 = vmatprep.mubr.bf16.mxu0 %v529
  %971 = vmatmul.mubr.bf16.gmra.mrb[0].mxu0 %v298
  %v972 = vpop.f32.mrb[0].mxu0
  %v973 = vadd.f32 %v124, %v972
  %v974 = vpop.f32.mrb[0].mxu0
  %v975 = vpop.f32.mrb[0].mxu0
  %v976 = vadd.f32 %v124, %v975
  %v977 = vpop.f32.mrb[0].mxu0
  %978 = vmatprep.mubr.bf16.mxu0 %v532
  %979 = vmatmul.mubr.bf16.gmra.mrb[0].mxu0 %v300
  %v980 = vpop.f32.mrb[0].mxu0
  %v981 = vadd.f32 %v124, %v980
  %v982 = vpop.f32.mrb[0].mxu0
  %v983 = vpop.f32.mrb[0].mxu0
  %v984 = vadd.f32 %v124, %v983
  %v985 = vpop.f32.mrb[0].mxu0
  %986 = vmatprep.mubr.bf16.mxu0 %v535
  %987 = vmatmul.mubr.bf16.gmra.mrb[0].mxu0 %v302
  %v988 = vpop.f32.mrb[0].mxu0
  %v989 = vadd.f32 %v124, %v988
  %v990 = vpop.f32.mrb[0].mxu0
  %v991 = vpop.f32.mrb[0].mxu0
  %v992 = vadd.f32 %v124, %v991
  %v993 = vpop.f32.mrb[0].mxu0
  %994 = vmatprep.mubr.bf16.mxu0 %v538
  %995 = vmatmul.mubr.bf16.gmra.mrb[0].mxu0 %v304
  %v996 = vpop.f32.mrb[0].mxu0
  %v997 = vadd.f32 %v124, %v996
  %v998 = vpop.f32.mrb[0].mxu0
  %v999 = vpop.f32.mrb[0].mxu0
  %v1000 = vadd.f32 %v124, %v999
  %v1001 = vpop.f32.mrb[0].mxu0
  %1002 = vmatprep.mubr.bf16.mxu0 %v541
  %1003 = vmatmul.mubr.bf16.gmra.mrb[0].mxu0 %v306
  %v1004 = vpop.f32.mrb[0].mxu0
  %v1005 = vadd.f32 %v124, %v1004
  %v1006 = vpop.f32.mrb[0].mxu0
  %v1007 = vpop.f32.mrb[0].mxu0
  %v1008 = vadd.f32 %v124, %v1007
  %v1009 = vpop.f32.mrb[0].mxu0
  %1010 = vmatprep.mubr.bf16.mxu0 %v544
  %1011 = vmatmul.mubr.bf16.gmra.mrb[0].mxu0 %v308
  %v1012 = vpop.f32.mrb[0].mxu0
  %v1013 = vadd.f32 %v124, %v1012
  %v1014 = vpop.f32.mrb[0].mxu0
  %v1015 = vpop.f32.mrb[0].mxu0
  %v1016 = vadd.f32 %v124, %v1015
  %v1017 = vpop.f32.mrb[0].mxu0
  %1018 = vmatprep.mubr.bf16.mxu0 %v547
  %1019 = vmatmul.mubr.bf16.gmra.mrb[0].mxu0 %v310
  %v1020 = vpop.f32.mrb[0].mxu0
  %v1021 = vadd.f32 %v124, %v1020
  %v1022 = vpop.f32.mrb[0].mxu0
  %v1023 = vpop.f32.mrb[0].mxu0
  %v1024 = vadd.f32 %v124, %v1023
  %v1025 = vpop.f32.mrb[0].mxu0
  %1026 = vmatprep.mubr.bf16.mxu0 %v550
  %1027 = vmatmul.mubr.bf16.gmra.mrb[0].mxu0 %v312
  %v1028 = vpop.f32.mrb[0].mxu0
  %v1029 = vadd.f32 %v124, %v1028
  %v1030 = vpop.f32.mrb[0].mxu0
  %v1031 = vpop.f32.mrb[0].mxu0
  %v1032 = vadd.f32 %v124, %v1031
  %v1033 = vpop.f32.mrb[0].mxu0
  %1034 = vmatprep.mubr.bf16.mxu0 %v553
  %1035 = vmatmul.mubr.bf16.gmra.mrb[0].mxu0 %v314
  %v1036 = vpop.f32.mrb[0].mxu0
  %v1037 = vadd.f32 %v124, %v1036
  %v1038 = vpop.f32.mrb[0].mxu0
  %v1039 = vpop.f32.mrb[0].mxu0
  %v1040 = vadd.f32 %v124, %v1039
  %v1041 = vpop.f32.mrb[0].mxu0
  %1042 = vmatprep.mubr.bf16.mxu0 %v556
  %1043 = vmatmul.mubr.bf16.gmra.mrb[0].mxu0 %v316
  %v1044 = vpop.f32.mrb[0].mxu0
  %v1045 = vadd.f32 %v124, %v1044
  %v1046 = vpop.f32.mrb[0].mxu0
  %v1047 = vpop.f32.mrb[0].mxu0
  %v1048 = vadd.f32 %v124, %v1047
  %v1049 = vpop.f32.mrb[0].mxu0
  %1050 = vmatprep.mubr.bf16.mxu0 %v559
  %1051 = vmatmul.mubr.bf16.gmra.mrb[0].mxu0 %v318
  %v1052 = vpop.f32.mrb[0].mxu0
  %v1053 = vadd.f32 %v124, %v1052
  %v1054 = vpop.f32.mrb[0].mxu0
  %v1055 = vpop.f32.mrb[0].mxu0
  %v1056 = vadd.f32 %v124, %v1055
  %v1057 = vpop.f32.mrb[0].mxu0
  %1058 = vdwg.mxu0
  %v1059 = vmax.f32 %v596, %v606
  %v1060 = vmax.f32 %v598, %v608
  %v1061 = vmax.f32 %v869, %v877
  %v1062 = vmax.f32 %v600, %v610
  %v1063 = vmax.f32 %v602, %v612
  %v1064 = vmax.f32 %v872, %v880
  %v1065 = vmax.f32 %v626, %v636
  %v1066 = vmax.f32 %v628, %v638
  %v1067 = vmax.f32 %v893, %v901
  %v1068 = vmax.f32 %v630, %v640
  %v1069 = vmax.f32 %v632, %v642
  %v1070 = vmax.f32 %v896, %v904
  %v1071 = vmax.f32 %v656, %v666
  %v1072 = vmax.f32 %v658, %v668
  %v1073 = vmax.f32 %v917, %v925
  %v1074 = vmax.f32 %v660, %v670
  %v1075 = vmax.f32 %v662, %v672
  %v1076 = vmax.f32 %v920, %v928
  %v1077 = vmax.f32 %v686, %v696
  %v1078 = vmax.f32 %v688, %v698
  %v1079 = vmax.f32 %v941, %v949
  %v1080 = vmax.f32 %v690, %v700
  %v1081 = vmax.f32 %v692, %v702
  %v1082 = vmax.f32 %v944, %v952
  %v1083 = vmax.f32 %v716, %v726
  %v1084 = vmax.f32 %v718, %v728
  %v1085 = vmax.f32 %v965, %v973
  %v1086 = vmax.f32 %v720, %v730
  %v1087 = vmax.f32 %v722, %v732
  %v1088 = vmax.f32 %v968, %v976
  %v1089 = vmax.f32 %v746, %v756
  %v1090 = vmax.f32 %v748, %v758
  %v1091 = vmax.f32 %v989, %v997
  %v1092 = vmax.f32 %v750, %v760
  %v1093 = vmax.f32 %v752, %v762
  %v1094 = vmax.f32 %v992, %v1000
  %v1095 = vmax.f32 %v776, %v786
  %v1096 = vmax.f32 %v778, %v788
  %v1097 = vmax.f32 %v1013, %v1021
  %v1098 = vmax.f32 %v780, %v790
  %v1099 = vmax.f32 %v782, %v792
  %v1100 = vmax.f32 %v1016, %v1024
  %v1101 = vmax.f32 %v806, %v816
  %v1102 = vmax.f32 %v808, %v818
  %v1103 = vmax.f32 %v1037, %v1045
  %v1104 = vmax.f32 %v810, %v820
  %v1105 = vmax.f32 %v812, %v822
  %v1106 = vmax.f32 %v1040, %v1048
  %v1107 = vmax.f32 %v1059, %v616
  %v1108 = vmax.f32 %v1060, %v618
  %v1109 = vmax.f32 %v1061, %v885
  %v1110 = vmax.f32 %v1062, %v620
  %v1111 = vmax.f32 %v1063, %v622
  %v1112 = vmax.f32 %v1064, %v888
  %v1113 = vmax.f32 %v1065, %v646
  %v1114 = vmax.f32 %v1066, %v648
  %v1115 = vmax.f32 %v1067, %v909
  %v1116 = vmax.f32 %v1068, %v650
  %v1117 = vmax.f32 %v1069, %v652
  %v1118 = vmax.f32 %v1070, %v912
  %v1119 = vmax.f32 %v1071, %v676
  %v1120 = vmax.f32 %v1072, %v678
  %v1121 = vmax.f32 %v1073, %v933
  %v1122 = vmax.f32 %v1074, %v680
  %v1123 = vmax.f32 %v1075, %v682
  %v1124 = vmax.f32 %v1076, %v936
  %v1125 = vmax.f32 %v1077, %v706
  %v1126 = vmax.f32 %v1078, %v708
  %v1127 = vmax.f32 %v1079, %v957
  %v1128 = vmax.f32 %v1080, %v710
  %v1129 = vmax.f32 %v1081, %v712
  %v1130 = vmax.f32 %v1082, %v960
  %v1131 = vmax.f32 %v1083, %v736
  %v1132 = vmax.f32 %v1084, %v738
  %v1133 = vmax.f32 %v1085, %v981
  %v1134 = vmax.f32 %v1086, %v740
  %v1135 = vmax.f32 %v1087, %v742
  %v1136 = vmax.f32 %v1088, %v984
  %v1137 = vmax.f32 %v1089, %v766
  %v1138 = vmax.f32 %v1090, %v768
  %v1139 = vmax.f32 %v1091, %v1005
  %v1140 = vmax.f32 %v1092, %v770
  %v1141 = vmax.f32 %v1093, %v772
  %v1142 = vmax.f32 %v1094, %v1008
  %v1143 = vmax.f32 %v1095, %v796
  %v1144 = vmax.f32 %v1096, %v798
  %v1145 = vmax.f32 %v1097, %v1029
  %v1146 = vmax.f32 %v1098, %v800
  %v1147 = vmax.f32 %v1099, %v802
  %v1148 = vmax.f32 %v1100, %v1032
  %v1149 = vmax.f32 %v1101, %v826
  %v1150 = vmax.f32 %v1102, %v828
  %v1151 = vmax.f32 %v1103, %v1053
  %v1152 = vmax.f32 %v1104, %v830
  %v1153 = vmax.f32 %v1105, %v832
  %v1154 = vmax.f32 %v1106, %v1056
  %1203 = vrot.lane.b32.xlu0 %v1107, 112
  %v1204 = vpop.permute.xlu0 %1203
  %1205 = vrot.lane.b32.xlu0 %v1108, 112
  %v1206 = vpop.permute.xlu0 %1205
  %1207 = vrot.lane.b32.xlu0 %v1109, 112
  %v1208 = vpop.permute.xlu0 %1207
  %1209 = vrot.lane.b32.xlu0 %v1110, 112
  %v1210 = vpop.permute.xlu0 %1209
  %1211 = vrot.lane.b32.xlu0 %v1111, 112
  %v1212 = vpop.permute.xlu0 %1211
  %1213 = vrot.lane.b32.xlu0 %v1112, 112
  %v1214 = vpop.permute.xlu0 %1213
  %1215 = vrot.lane.b32.xlu0 %v1113, 112
  %v1216 = vpop.permute.xlu0 %1215
  %1217 = vrot.lane.b32.xlu0 %v1114, 112
  %v1218 = vpop.permute.xlu0 %1217
  %1219 = vrot.lane.b32.xlu0 %v1115, 112
  %v1220 = vpop.permute.xlu0 %1219
  %1221 = vrot.lane.b32.xlu0 %v1116, 112
  %v1222 = vpop.permute.xlu0 %1221
  %1223 = vrot.lane.b32.xlu0 %v1117, 112
  %v1224 = vpop.permute.xlu0 %1223
  %1225 = vrot.lane.b32.xlu0 %v1118, 112
  %v1226 = vpop.permute.xlu0 %1225
  %1227 = vrot.lane.b32.xlu0 %v1119, 112
  %v1228 = vpop.permute.xlu0 %1227
  %1229 = vrot.lane.b32.xlu0 %v1120, 112
  %v1230 = vpop.permute.xlu0 %1229
  %1231 = vrot.lane.b32.xlu0 %v1121, 112
  %v1232 = vpop.permute.xlu0 %1231
  %1233 = vrot.lane.b32.xlu0 %v1122, 112
  %v1234 = vpop.permute.xlu0 %1233
  %1235 = vrot.lane.b32.xlu0 %v1123, 112
  %v1236 = vpop.permute.xlu0 %1235
  %1237 = vrot.lane.b32.xlu0 %v1124, 112
  %v1238 = vpop.permute.xlu0 %1237
  %1239 = vrot.lane.b32.xlu0 %v1125, 112
  %v1240 = vpop.permute.xlu0 %1239
  %1241 = vrot.lane.b32.xlu0 %v1126, 112
  %v1242 = vpop.permute.xlu0 %1241
  %1243 = vrot.lane.b32.xlu0 %v1127, 112
  %v1244 = vpop.permute.xlu0 %1243
  %1245 = vrot.lane.b32.xlu0 %v1128, 112
  %v1246 = vpop.permute.xlu0 %1245
  %1247 = vrot.lane.b32.xlu0 %v1129, 112
  %v1248 = vpop.permute.xlu0 %1247
  %1249 = vrot.lane.b32.xlu0 %v1130, 112
  %v1250 = vpop.permute.xlu0 %1249
  %1251 = vrot.lane.b32.xlu0 %v1131, 112
  %v1252 = vpop.permute.xlu0 %1251
  %1253 = vrot.lane.b32.xlu0 %v1132, 112
  %v1254 = vpop.permute.xlu0 %1253
  %1255 = vrot.lane.b32.xlu0 %v1133, 112
  %v1256 = vpop.permute.xlu0 %1255
  %1257 = vrot.lane.b32.xlu0 %v1134, 112
  %v1258 = vpop.permute.xlu0 %1257
  %1259 = vrot.lane.b32.xlu0 %v1135, 112
  %v1260 = vpop.permute.xlu0 %1259
  %1261 = vrot.lane.b32.xlu0 %v1136, 112
  %v1262 = vpop.permute.xlu0 %1261
  %1263 = vrot.lane.b32.xlu0 %v1137, 112
  %v1264 = vpop.permute.xlu0 %1263
  %1265 = vrot.lane.b32.xlu0 %v1138, 112
  %v1266 = vpop.permute.xlu0 %1265
  %1267 = vrot.lane.b32.xlu0 %v1139, 112
  %v1268 = vpop.permute.xlu0 %1267
  %1269 = vrot.lane.b32.xlu0 %v1140, 112
  %v1270 = vpop.permute.xlu0 %1269
  %1271 = vrot.lane.b32.xlu0 %v1141, 112
  %v1272 = vpop.permute.xlu0 %1271
  %1273 = vrot.lane.b32.xlu0 %v1142, 112
  %v1274 = vpop.permute.xlu0 %1273
  %1275 = vrot.lane.b32.xlu0 %v1143, 112
  %v1276 = vpop.permute.xlu0 %1275
  %1277 = vrot.lane.b32.xlu0 %v1144, 112
  %v1278 = vpop.permute.xlu0 %1277
  %1279 = vrot.lane.b32.xlu0 %v1145, 112
  %v1280 = vpop.permute.xlu0 %1279
  %1281 = vrot.lane.b32.xlu0 %v1146, 112
  %v1282 = vpop.permute.xlu0 %1281
  %1283 = vrot.lane.b32.xlu0 %v1147, 112
  %v1284 = vpop.permute.xlu0 %1283
  %1285 = vrot.lane.b32.xlu0 %v1148, 112
  %v1286 = vpop.permute.xlu0 %1285
  %1287 = vrot.lane.b32.xlu0 %v1149, 112
  %v1288 = vpop.permute.xlu0 %1287
  %1289 = vrot.lane.b32.xlu0 %v1150, 112
  %v1290 = vpop.permute.xlu0 %1289
  %1291 = vrot.lane.b32.xlu0 %v1151, 112
  %v1292 = vpop.permute.xlu0 %1291
  %1293 = vrot.lane.b32.xlu0 %v1152, 112
  %v1294 = vpop.permute.xlu0 %1293
  %1295 = vrot.lane.b32.xlu0 %v1153, 112
  %v1296 = vpop.permute.xlu0 %1295
  %1297 = vrot.lane.b32.xlu0 %v1154, 112
  %v1298 = vpop.permute.xlu0 %1297
  %vm1299 = vcmask 916480
  %v1300 = vsel %vm1299, %v1204, %v1206
  %v1301 = vsel %vm1299, %v1206, %v1208
  %v1302 = vsel %vm1299, %v1210, %v1212
  %v1303 = vsel %vm1299, %v1212, %v1214
  %v1304 = vsel %vm1299, %v1216, %v1218
  %v1305 = vsel %vm1299, %v1218, %v1220
  %v1306 = vsel %vm1299, %v1222, %v1224
  %v1307 = vsel %vm1299, %v1224, %v1226
  %v1308 = vsel %vm1299, %v1228, %v1230
  %v1309 = vsel %vm1299, %v1230, %v1232
  %v1310 = vsel %vm1299, %v1234, %v1236
  %v1311 = vsel %vm1299, %v1236, %v1238
  %v1312 = vsel %vm1299, %v1240, %v1242
  %v1313 = vsel %vm1299, %v1242, %v1244
  %v1314 = vsel %vm1299, %v1246, %v1248
  %v1315 = vsel %vm1299, %v1248, %v1250
  %v1316 = vsel %vm1299, %v1252, %v1254
  %v1317 = vsel %vm1299, %v1254, %v1256
  %v1318 = vsel %vm1299, %v1258, %v1260
  %v1319 = vsel %vm1299, %v1260, %v1262
  %v1320 = vsel %vm1299, %v1264, %v1266
  %v1321 = vsel %vm1299, %v1266, %v1268
  %v1322 = vsel %vm1299, %v1270, %v1272
  %v1323 = vsel %vm1299, %v1272, %v1274
  %v1324 = vsel %vm1299, %v1276, %v1278
  %v1325 = vsel %vm1299, %v1278, %v1280
  %v1326 = vsel %vm1299, %v1282, %v1284
  %v1327 = vsel %vm1299, %v1284, %v1286
  %v1328 = vsel %vm1299, %v1288, %v1290
  %v1329 = vsel %vm1299, %v1290, %v1292
  %v1330 = vsel %vm1299, %v1294, %v1296
  %v1331 = vsel %vm1299, %v1296, %v1298
  %v1380 = vmax.f32 %v1107, %v1300
  %v1381 = vmax.f32 %v1108, %v1301
  %v1382 = vmax.f32 %v1109, %v1208
  %v1383 = vmax.f32 %v1110, %v1302
  %v1384 = vmax.f32 %v1111, %v1303
  %v1385 = vmax.f32 %v1112, %v1214
  %v1386 = vmax.f32 %v1113, %v1304
  %v1387 = vmax.f32 %v1114, %v1305
  %v1388 = vmax.f32 %v1115, %v1220
  %v1389 = vmax.f32 %v1116, %v1306
  %v1390 = vmax.f32 %v1117, %v1307
  %v1391 = vmax.f32 %v1118, %v1226
  %v1392 = vmax.f32 %v1119, %v1308
  %v1393 = vmax.f32 %v1120, %v1309
  %v1394 = vmax.f32 %v1121, %v1232
  %v1395 = vmax.f32 %v1122, %v1310
  %v1396 = vmax.f32 %v1123, %v1311
  %v1397 = vmax.f32 %v1124, %v1238
  %v1398 = vmax.f32 %v1125, %v1312
  %v1399 = vmax.f32 %v1126, %v1313
  %v1400 = vmax.f32 %v1127, %v1244
  %v1401 = vmax.f32 %v1128, %v1314
  %v1402 = vmax.f32 %v1129, %v1315
  %v1403 = vmax.f32 %v1130, %v1250
  %v1404 = vmax.f32 %v1131, %v1316
  %v1405 = vmax.f32 %v1132, %v1317
  %v1406 = vmax.f32 %v1133, %v1256
  %v1407 = vmax.f32 %v1134, %v1318
  %v1408 = vmax.f32 %v1135, %v1319
  %v1409 = vmax.f32 %v1136, %v1262
  %v1410 = vmax.f32 %v1137, %v1320
  %v1411 = vmax.f32 %v1138, %v1321
  %v1412 = vmax.f32 %v1139, %v1268
  %v1413 = vmax.f32 %v1140, %v1322
  %v1414 = vmax.f32 %v1141, %v1323
  %v1415 = vmax.f32 %v1142, %v1274
  %v1416 = vmax.f32 %v1143, %v1324
  %v1417 = vmax.f32 %v1144, %v1325
  %v1418 = vmax.f32 %v1145, %v1280
  %v1419 = vmax.f32 %v1146, %v1326
  %v1420 = vmax.f32 %v1147, %v1327
  %v1421 = vmax.f32 %v1148, %v1286
  %v1422 = vmax.f32 %v1149, %v1328
  %v1423 = vmax.f32 %v1150, %v1329
  %v1424 = vmax.f32 %v1151, %v1292
  %v1425 = vmax.f32 %v1152, %v1330
  %v1426 = vmax.f32 %v1153, %v1331
  %v1427 = vmax.f32 %v1154, %v1298
  %1428 = vrot.lane.b32.xlu0 %v1107, 96
  %v1429 = vpop.permute.xlu0 %1428
  %1430 = vrot.lane.b32.xlu0 %v1108, 96
  %v1431 = vpop.permute.xlu0 %1430
  %1432 = vrot.lane.b32.xlu0 %v1109, 96
  %v1433 = vpop.permute.xlu0 %1432
  %1434 = vrot.lane.b32.xlu0 %v1110, 96
  %v1435 = vpop.permute.xlu0 %1434
  %1436 = vrot.lane.b32.xlu0 %v1111, 96
  %v1437 = vpop.permute.xlu0 %1436
  %1438 = vrot.lane.b32.xlu0 %v1112, 96
  %v1439 = vpop.permute.xlu0 %1438
  %1440 = vrot.lane.b32.xlu0 %v1113, 96
  %v1441 = vpop.permute.xlu0 %1440
  %1442 = vrot.lane.b32.xlu0 %v1114, 96
  %v1443 = vpop.permute.xlu0 %1442
  %1444 = vrot.lane.b32.xlu0 %v1115, 96
  %v1445 = vpop.permute.xlu0 %1444
  %1446 = vrot.lane.b32.xlu0 %v1116, 96
  %v1447 = vpop.permute.xlu0 %1446
  %1448 = vrot.lane.b32.xlu0 %v1117, 96
  %v1449 = vpop.permute.xlu0 %1448
  %1450 = vrot.lane.b32.xlu0 %v1118, 96
  %v1451 = vpop.permute.xlu0 %1450
  %1452 = vrot.lane.b32.xlu0 %v1119, 96
  %v1453 = vpop.permute.xlu0 %1452
  %1454 = vrot.lane.b32.xlu0 %v1120, 96
  %v1455 = vpop.permute.xlu0 %1454
  %1456 = vrot.lane.b32.xlu0 %v1121, 96
  %v1457 = vpop.permute.xlu0 %1456
  %1458 = vrot.lane.b32.xlu0 %v1122, 96
  %v1459 = vpop.permute.xlu0 %1458
  %1460 = vrot.lane.b32.xlu0 %v1123, 96
  %v1461 = vpop.permute.xlu0 %1460
  %1462 = vrot.lane.b32.xlu0 %v1124, 96
  %v1463 = vpop.permute.xlu0 %1462
  %1464 = vrot.lane.b32.xlu0 %v1125, 96
  %v1465 = vpop.permute.xlu0 %1464
  %1466 = vrot.lane.b32.xlu0 %v1126, 96
  %v1467 = vpop.permute.xlu0 %1466
  %1468 = vrot.lane.b32.xlu0 %v1127, 96
  %v1469 = vpop.permute.xlu0 %1468
  %1470 = vrot.lane.b32.xlu0 %v1128, 96
  %v1471 = vpop.permute.xlu0 %1470
  %1472 = vrot.lane.b32.xlu0 %v1129, 96
  %v1473 = vpop.permute.xlu0 %1472
  %1474 = vrot.lane.b32.xlu0 %v1130, 96
  %v1475 = vpop.permute.xlu0 %1474
  %1476 = vrot.lane.b32.xlu0 %v1131, 96
  %v1477 = vpop.permute.xlu0 %1476
  %1478 = vrot.lane.b32.xlu0 %v1132, 96
  %v1479 = vpop.permute.xlu0 %1478
  %1480 = vrot.lane.b32.xlu0 %v1133, 96
  %v1481 = vpop.permute.xlu0 %1480
  %1482 = vrot.lane.b32.xlu0 %v1134, 96
  %v1483 = vpop.permute.xlu0 %1482
  %1484 = vrot.lane.b32.xlu0 %v1135, 96
  %v1485 = vpop.permute.xlu0 %1484
  %1486 = vrot.lane.b32.xlu0 %v1136, 96
  %v1487 = vpop.permute.xlu0 %1486
  %1488 = vrot.lane.b32.xlu0 %v1137, 96
  %v1489 = vpop.permute.xlu0 %1488
  %1490 = vrot.lane.b32.xlu0 %v1138, 96
  %v1491 = vpop.permute.xlu0 %1490
  %1492 = vrot.lane.b32.xlu0 %v1139, 96
  %v1493 = vpop.permute.xlu0 %1492
  %1494 = vrot.lane.b32.xlu0 %v1140, 96
  %v1495 = vpop.permute.xlu0 %1494
  %1496 = vrot.lane.b32.xlu0 %v1141, 96
  %v1497 = vpop.permute.xlu0 %1496
  %1498 = vrot.lane.b32.xlu0 %v1142, 96
  %v1499 = vpop.permute.xlu0 %1498
  %1500 = vrot.lane.b32.xlu0 %v1143, 96
  %v1501 = vpop.permute.xlu0 %1500
  %1502 = vrot.lane.b32.xlu0 %v1144, 96
  %v1503 = vpop.permute.xlu0 %1502
  %1504 = vrot.lane.b32.xlu0 %v1145, 96
  %v1505 = vpop.permute.xlu0 %1504
  %1506 = vrot.lane.b32.xlu0 %v1146, 96
  %v1507 = vpop.permute.xlu0 %1506
  %1508 = vrot.lane.b32.xlu0 %v1147, 96
  %v1509 = vpop.permute.xlu0 %1508
  %1510 = vrot.lane.b32.xlu0 %v1148, 96
  %v1511 = vpop.permute.xlu0 %1510
  %1512 = vrot.lane.b32.xlu0 %v1149, 96
  %v1513 = vpop.permute.xlu0 %1512
  %1514 = vrot.lane.b32.xlu0 %v1150, 96
  %v1515 = vpop.permute.xlu0 %1514
  %1516 = vrot.lane.b32.xlu0 %v1151, 96
  %v1517 = vpop.permute.xlu0 %1516
  %1518 = vrot.lane.b32.xlu0 %v1152, 96
  %v1519 = vpop.permute.xlu0 %1518
  %1520 = vrot.lane.b32.xlu0 %v1153, 96
  %v1521 = vpop.permute.xlu0 %1520
  %1522 = vrot.lane.b32.xlu0 %v1154, 96
  %v1523 = vpop.permute.xlu0 %1522
  %vm1524 = vcmask 785408
  %v1525 = vsel %vm1524, %v1429, %v1431
  %v1526 = vsel %vm1524, %v1431, %v1433
  %v1527 = vsel %vm1524, %v1435, %v1437
  %v1528 = vsel %vm1524, %v1437, %v1439
  %v1529 = vsel %vm1524, %v1441, %v1443
  %v1530 = vsel %vm1524, %v1443, %v1445
  %v1531 = vsel %vm1524, %v1447, %v1449
  %v1532 = vsel %vm1524, %v1449, %v1451
  %v1533 = vsel %vm1524, %v1453, %v1455
  %v1534 = vsel %vm1524, %v1455, %v1457
  %v1535 = vsel %vm1524, %v1459, %v1461
  %v1536 = vsel %vm1524, %v1461, %v1463
  %v1537 = vsel %vm1524, %v1465, %v1467
  %v1538 = vsel %vm1524, %v1467, %v1469
  %v1539 = vsel %vm1524, %v1471, %v1473
  %v1540 = vsel %vm1524, %v1473, %v1475
  %v1541 = vsel %vm1524, %v1477, %v1479
  %v1542 = vsel %vm1524, %v1479, %v1481
  %v1543 = vsel %vm1524, %v1483, %v1485
  %v1544 = vsel %vm1524, %v1485, %v1487
  %v1545 = vsel %vm1524, %v1489, %v1491
  %v1546 = vsel %vm1524, %v1491, %v1493
  %v1547 = vsel %vm1524, %v1495, %v1497
  %v1548 = vsel %vm1524, %v1497, %v1499
  %v1549 = vsel %vm1524, %v1501, %v1503
  %v1550 = vsel %vm1524, %v1503, %v1505
  %v1551 = vsel %vm1524, %v1507, %v1509
  %v1552 = vsel %vm1524, %v1509, %v1511
  %v1553 = vsel %vm1524, %v1513, %v1515
  %v1554 = vsel %vm1524, %v1515, %v1517
  %v1555 = vsel %vm1524, %v1519, %v1521
  %v1556 = vsel %vm1524, %v1521, %v1523
  %v1605 = vmax.f32 %v1380, %v1525
  %v1606 = vmax.f32 %v1381, %v1526
  %v1607 = vmax.f32 %v1382, %v1433
  %v1608 = vmax.f32 %v1383, %v1527
  %v1609 = vmax.f32 %v1384, %v1528
  %v1610 = vmax.f32 %v1385, %v1439
  %v1611 = vmax.f32 %v1386, %v1529
  %v1612 = vmax.f32 %v1387, %v1530
  %v1613 = vmax.f32 %v1388, %v1445
  %v1614 = vmax.f32 %v1389, %v1531
  %v1615 = vmax.f32 %v1390, %v1532
  %v1616 = vmax.f32 %v1391, %v1451
  %v1617 = vmax.f32 %v1392, %v1533
  %v1618 = vmax.f32 %v1393, %v1534
  %v1619 = vmax.f32 %v1394, %v1457
  %v1620 = vmax.f32 %v1395, %v1535
  %v1621 = vmax.f32 %v1396, %v1536
  %v1622 = vmax.f32 %v1397, %v1463
  %v1623 = vmax.f32 %v1398, %v1537
  %v1624 = vmax.f32 %v1399, %v1538
  %v1625 = vmax.f32 %v1400, %v1469
  %v1626 = vmax.f32 %v1401, %v1539
  %v1627 = vmax.f32 %v1402, %v1540
  %v1628 = vmax.f32 %v1403, %v1475
  %v1629 = vmax.f32 %v1404, %v1541
  %v1630 = vmax.f32 %v1405, %v1542
  %v1631 = vmax.f32 %v1406, %v1481
  %v1632 = vmax.f32 %v1407, %v1543
  %v1633 = vmax.f32 %v1408, %v1544
  %v1634 = vmax.f32 %v1409, %v1487
  %v1635 = vmax.f32 %v1410, %v1545
  %v1636 = vmax.f32 %v1411, %v1546
  %v1637 = vmax.f32 %v1412, %v1493
  %v1638 = vmax.f32 %v1413, %v1547
  %v1639 = vmax.f32 %v1414, %v1548
  %v1640 = vmax.f32 %v1415, %v1499
  %v1641 = vmax.f32 %v1416, %v1549
  %v1642 = vmax.f32 %v1417, %v1550
  %v1643 = vmax.f32 %v1418, %v1505
  %v1644 = vmax.f32 %v1419, %v1551
  %v1645 = vmax.f32 %v1420, %v1552
  %v1646 = vmax.f32 %v1421, %v1511
  %v1647 = vmax.f32 %v1422, %v1553
  %v1648 = vmax.f32 %v1423, %v1554
  %v1649 = vmax.f32 %v1424, %v1517
  %v1650 = vmax.f32 %v1425, %v1555
  %v1651 = vmax.f32 %v1426, %v1556
  %v1652 = vmax.f32 %v1427, %v1523
  %v1653 = vmax.f32 %v1605, 0.0
  %v1654 = vmax.f32 %v1606, 0.0
  %v1655 = vmax.f32 %v1607, 0.0
  %v1656 = vmax.f32 %v1608, 0.0
  %v1657 = vmax.f32 %v1609, 0.0
  %v1658 = vmax.f32 %v1610, 0.0
  %v1659 = vmax.f32 %v1611, 0.0
  %v1660 = vmax.f32 %v1612, 0.0
  %v1661 = vmax.f32 %v1613, 0.0
  %v1662 = vmax.f32 %v1614, 0.0
  %v1663 = vmax.f32 %v1615, 0.0
  %v1664 = vmax.f32 %v1616, 0.0
  %v1665 = vmax.f32 %v1617, 0.0
  %v1666 = vmax.f32 %v1618, 0.0
  %v1667 = vmax.f32 %v1619, 0.0
  %v1668 = vmax.f32 %v1620, 0.0
  %v1669 = vmax.f32 %v1621, 0.0
  %v1670 = vmax.f32 %v1622, 0.0
  %v1671 = vmax.f32 %v1623, 0.0
  %v1672 = vmax.f32 %v1624, 0.0
  %v1673 = vmax.f32 %v1625, 0.0
  %v1674 = vmax.f32 %v1626, 0.0
  %v1675 = vmax.f32 %v1627, 0.0
  %v1676 = vmax.f32 %v1628, 0.0
  %v1677 = vmax.f32 %v1629, 0.0
  %v1678 = vmax.f32 %v1630, 0.0
  %v1679 = vmax.f32 %v1631, 0.0
  %v1680 = vmax.f32 %v1632, 0.0
  %v1681 = vmax.f32 %v1633, 0.0
  %v1682 = vmax.f32 %v1634, 0.0
  %v1683 = vmax.f32 %v1635, 0.0
  %v1684 = vmax.f32 %v1636, 0.0
  %v1685 = vmax.f32 %v1637, 0.0
  %v1686 = vmax.f32 %v1638, 0.0
  %v1687 = vmax.f32 %v1639, 0.0
  %v1688 = vmax.f32 %v1640, 0.0
  %v1689 = vmax.f32 %v1641, 0.0
  %v1690 = vmax.f32 %v1642, 0.0
  %v1691 = vmax.f32 %v1643, 0.0
  %v1692 = vmax.f32 %v1644, 0.0
  %v1693 = vmax.f32 %v1645, 0.0
  %v1694 = vmax.f32 %v1646, 0.0
  %v1695 = vmax.f32 %v1647, 0.0
  %v1696 = vmax.f32 %v1648, 0.0
  %v1697 = vmax.f32 %v1649, 0.0
  %v1698 = vmax.f32 %v1650, 0.0
  %v1699 = vmax.f32 %v1651, 0.0
  %v1700 = vmax.f32 %v1652, 0.0
  %v1701 = vpack.c.bf16 %v1656, %v1653
  %v1702 = vpack.c.bf16 %v1657, %v1654
  %v1703 = vpack.c.bf16 %v1658, %v1655
  %v1704 = vpack.c.bf16 %v1662, %v1659
  %v1705 = vpack.c.bf16 %v1663, %v1660
  %v1706 = vpack.c.bf16 %v1664, %v1661
  %v1707 = vpack.c.bf16 %v1668, %v1665
  %v1708 = vpack.c.bf16 %v1669, %v1666
  %v1709 = vpack.c.bf16 %v1670, %v1667
  %v1710 = vpack.c.bf16 %v1674, %v1671
  %v1711 = vpack.c.bf16 %v1675, %v1672
  %v1712 = vpack.c.bf16 %v1676, %v1673
  %v1713 = vpack.c.bf16 %v1680, %v1677
  %v1714 = vpack.c.bf16 %v1681, %v1678
  %v1715 = vpack.c.bf16 %v1682, %v1679
  %v1716 = vpack.c.bf16 %v1686, %v1683
  %v1717 = vpack.c.bf16 %v1687, %v1684
  %v1718 = vpack.c.bf16 %v1688, %v1685
  %v1719 = vpack.c.bf16 %v1692, %v1689
  %v1720 = vpack.c.bf16 %v1693, %v1690
  %v1721 = vpack.c.bf16 %v1694, %v1691
  %v1722 = vpack.c.bf16 %v1698, %v1695
  %v1723 = vpack.c.bf16 %v1699, %v1696
  %v1724 = vpack.c.bf16 %v1700, %v1697
  %1725 = vst [vmem:[#allocation2] sm:$0xff] 0
  %1726 = vst [vmem:[#allocation2 + $0x8] sm:$0xff] 0
  %1727 = vst.msk [vmem:[#allocation2 + $0x10] sm:$0xff] %vm1524, 0
  %1728 = vst [vmem:[#allocation2 + $0xd8] sm:$0xff] 0
  %1729 = vst [vmem:[#allocation2 + $0xe0] sm:$0xff] 0
  %1730 = vst.msk [vmem:[#allocation2 + $0xe8] sm:$0xff] %vm1524, 0
  %1731 = vst [vmem:[#allocation2 + $0x18] sm:$0xff] %v1701
  %1732 = vst [vmem:[#allocation2 + $0x20] sm:$0xff] %v1702
  %1733 = vst.msk [vmem:[#allocation2 + $0x28] sm:$0xff] %vm1524, %v1703
  %1734 = vst [vmem:[#allocation2 + $0x30] sm:$0xff] %v1704
  %1735 = vst [vmem:[#allocation2 + $0x38] sm:$0xff] %v1705
  %1736 = vst.msk [vmem:[#allocation2 + $0x40] sm:$0xff] %vm1524, %v1706
  %1737 = vst [vmem:[#allocation2 + $0x48] sm:$0xff] %v1707
  %1738 = vst [vmem:[#allocation2 + $0x50] sm:$0xff] %v1708
  %1739 = vst.msk [vmem:[#allocation2 + $0x58] sm:$0xff] %vm1524, %v1709
  %1740 = vst [vmem:[#allocation2 + $0x60] sm:$0xff] %v1710
  %1741 = vst [vmem:[#allocation2 + $0x68] sm:$0xff] %v1711
  %1742 = vst.msk [vmem:[#allocation2 + $0x70] sm:$0xff] %vm1524, %v1712
  %1743 = vst [vmem:[#allocation2 + $0x78] sm:$0xff] %v1713
  %1744 = vst [vmem:[#allocation2 + $0x80] sm:$0xff] %v1714
  %1745 = vst.msk [vmem:[#allocation2 + $0x88] sm:$0xff] %vm1524, %v1715
  %1746 = vst [vmem:[#allocation2 + $0x90] sm:$0xff] %v1716
  %1747 = vst [vmem:[#allocation2 + $0x98] sm:$0xff] %v1717
  %1748 = vst.msk [vmem:[#allocation2 + $0xa0] sm:$0xff] %vm1524, %v1718
  %1749 = vst [vmem:[#allocation2 + $0xa8] sm:$0xff] %v1719
  %1750 = vst [vmem:[#allocation2 + $0xb0] sm:$0xff] %v1720
  %1751 = vst.msk [vmem:[#allocation2 + $0xb8] sm:$0xff] %vm1524, %v1721
  %1752 = vst [vmem:[#allocation2 + $0xc0] sm:$0xff] %v1722
  %1753 = vst [vmem:[#allocation2 + $0xc8] sm:$0xff] %v1723
  %1754 = vst.msk [vmem:[#allocation2 + $0xd0] sm:$0xff] %vm1524, %v1724
  %v1755 = vld [vmem:[%s4] sm:$0x1]
  %v1756 = vld [vmem:[#allocation2] sm:$0xff]
  %v1757 = vld [vmem:[#allocation2 + $0x8] sm:$0xff]
  %v1758 = vld [vmem:[#allocation2 + $0x10] sm:$0xff]
  %v1759 = vld [vmem:[#allocation2 + $0x18] sm:$0xff]
  %v1760 = vld [vmem:[#allocation2 + $0x20] sm:$0xff]
  %v1761 = vld [vmem:[#allocation2 + $0x28] sm:$0xff]
  %v1762 = vld [vmem:[#allocation2 + $0x30] sm:$0xff]
  %v1763 = vld [vmem:[#allocation2 + $0x38] sm:$0xff]
  %v1764 = vld [vmem:[#allocation2 + $0x40] sm:$0xff]
  %v1765 = vld [vmem:[#allocation2 + $0x48] sm:$0xff]
  %v1766 = vld [vmem:[#allocation2 + $0x50] sm:$0xff]
  %v1767 = vld [vmem:[#allocation2 + $0x58] sm:$0xff]
  %v1768 = vld [vmem:[#allocation2 + $0x60] sm:$0xff]
  %v1769 = vld [vmem:[#allocation2 + $0x68] sm:$0xff]
  %v1770 = vld [vmem:[#allocation2 + $0x70] sm:$0xff]
  %v1771 = vld [vmem:[#allocation2 + $0x78] sm:$0xff]
  %v1772 = vld [vmem:[#allocation2 + $0x80] sm:$0xff]
  %v1773 = vld [vmem:[#allocation2 + $0x88] sm:$0xff]
  %v1774 = vld [vmem:[#allocation2 + $0x90] sm:$0xff]
  %v1775 = vld [vmem:[#allocation2 + $0x98] sm:$0xff]
  %v1776 = vld [vmem:[#allocation2 + $0xa0] sm:$0xff]
  %v1777 = vld [vmem:[#allocation2 + $0xa8] sm:$0xff]
  %v1778 = vld [vmem:[#allocation2 + $0xb0] sm:$0xff]
  %v1779 = vld [vmem:[#allocation2 + $0xb8] sm:$0xff]
  %v1780 = vld [vmem:[%s3] sm:$0xf]
  %v1781 = vld [vmem:[%s3 + $0x4] sm:$0xf]
  %v1782 = vld [vmem:[%s3 + $0x8] sm:$0xf]
  %v1783 = vld [vmem:[%s3 + $0xc] sm:$0xf]
  %v1784 = vld [vmem:[%s3 + $0x10] sm:$0xf]
  %v1785 = vld [vmem:[%s3 + $0x14] sm:$0xf]
  %v1786 = vld [vmem:[%s3 + $0x18] sm:$0xf]
  %v1787 = vld [vmem:[%s3 + $0x1c] sm:$0xf]
  %v1788 = vld [vmem:[%s3 + $0x20] sm:$0xf]
  %v1789 = vld [vmem:[%s3 + $0x24] sm:$0xf]
  %v1790 = vld [vmem:[%s3 + $0x28] sm:$0xf]
  %v1791 = vld [vmem:[%s3 + $0x2c] sm:$0xf]
  %v1792 = vld [vmem:[%s3 + $0x30] sm:$0xf]
  %v1793 = vld [vmem:[%s3 + $0x34] sm:$0xf]
  %v1794 = vld [vmem:[%s3 + $0x38] sm:$0xf]
  %v1795 = vld [vmem:[%s3 + $0x3c] sm:$0xf]
  %v1796 = vld [vmem:[%s3 + $0x40] sm:$0xf]
  %v1797 = vld [vmem:[%s3 + $0x44] sm:$0xf]
  %v1798 = vld [vmem:[%s3 + $0x48] sm:$0xf]
  %v1799 = vld [vmem:[%s3 + $0x4c] sm:$0xf]
  %v1800 = vld [vmem:[%s3 + $0x50] sm:$0xf]
  %v1801 = vld [vmem:[%s3 + $0x54] sm:$0xf]
  %v1802 = vld [vmem:[%s3 + $0x58] sm:$0xf]
  %v1803 = vld [vmem:[%s3 + $0x5c] sm:$0xf]
  %v1804 = vld [vmem:[%s3 + $0x60] sm:$0xf]
  %v1805 = vld [vmem:[%s3 + $0x64] sm:$0xf]
  %v1806 = vld [vmem:[%s3 + $0x68] sm:$0xf]
  %v1807 = vld [vmem:[%s3 + $0x6c] sm:$0xf]
  %v1808 = vld [vmem:[%s3 + $0x70] sm:$0xf]
  %v1809 = vld [vmem:[%s3 + $0x74] sm:$0xf]
  %v1810 = vld [vmem:[%s3 + $0x78] sm:$0xf]
  %v1811 = vld [vmem:[%s3 + $0x7c] sm:$0xf]
  %v1812 = vld [vmem:[%s3 + $0x80] sm:$0xf]
  %v1813 = vld [vmem:[%s3 + $0x84] sm:$0xf]
  %v1814 = vld [vmem:[%s3 + $0x88] sm:$0xf]
  %v1815 = vld [vmem:[%s3 + $0x8c] sm:$0xf]
  %v1816 = vld [vmem:[%s3 + $0x90] sm:$0xf]
  %v1817 = vld [vmem:[%s3 + $0x94] sm:$0xf]
  %v1818 = vld [vmem:[%s3 + $0x98] sm:$0xf]
  %v1819 = vld [vmem:[%s3 + $0x9c] sm:$0xf]
  %v1820 = vld [vmem:[%s3 + $0xa0] sm:$0xf]
  %v1821 = vld [vmem:[%s3 + $0xa4] sm:$0xf]
  %v1822 = vld [vmem:[%s3 + $0xa8] sm:$0xf]
  %v1823 = vld [vmem:[%s3 + $0xac] sm:$0xf]
  %v1868 = vunpack.c.l.b16 %v1780
  %v1869 = vunpack.c.l.b16 %v1781
  %v1870 = vunpack.c.l.b16 %v1782
  %v1871 = vunpack.c.l.b16 %v1783
  %v1872 = vunpack.c.l.b16 %v1784
  %v1873 = vunpack.c.l.b16 %v1785
  %v1874 = vunpack.c.l.b16 %v1786
  %v1875 = vunpack.c.l.b16 %v1787
  %v1876 = vunpack.c.l.b16 %v1788
  %v1877 = vunpack.c.l.b16 %v1789
  %v1878 = vunpack.c.l.b16 %v1790
  %v1879 = vunpack.c.l.b16 %v1791
  %v1880 = vunpack.c.l.b16 %v1792
  %v1881 = vunpack.c.l.b16 %v1793
  %v1882 = vunpack.c.l.b16 %v1794
  %v1883 = vunpack.c.l.b16 %v1795
  %v1884 = vunpack.c.l.b16 %v1796
  %v1885 = vunpack.c.l.b16 %v1797
  %v1886 = vunpack.c.l.b16 %v1798
  %v1887 = vunpack.c.l.b16 %v1799
  %v1888 = vunpack.c.l.b16 %v1800
  %v1889 = vunpack.c.l.b16 %v1801
  %v1890 = vunpack.c.l.b16 %v1802
  %v1891 = vunpack.c.l.b16 %v1803
  %v1892 = vunpack.c.l.b16 %v1804
  %v1893 = vunpack.c.l.b16 %v1805
  %v1894 = vunpack.c.l.b16 %v1806
  %v1895 = vunpack.c.l.b16 %v1807
  %v1896 = vunpack.c.l.b16 %v1808
  %v1897 = vunpack.c.l.b16 %v1809
  %v1898 = vunpack.c.l.b16 %v1810
  %v1899 = vunpack.c.l.b16 %v1811
  %v1900 = vunpack.c.l.b16 %v1812
  %v1901 = vunpack.c.l.b16 %v1813
  %v1902 = vunpack.c.l.b16 %v1814
  %v1903 = vunpack.c.l.b16 %v1815
  %v1904 = vunpack.c.l.b16 %v1816
  %v1905 = vunpack.c.l.b16 %v1817
  %v1906 = vunpack.c.l.b16 %v1818
  %v1907 = vunpack.c.l.b16 %v1819
  %v1908 = vunpack.c.l.b16 %v1820
  %v1909 = vunpack.c.l.b16 %v1821
  %v1910 = vunpack.c.l.b16 %v1822
  %v1911 = vunpack.c.l.b16 %v1823
  %v1912 = vpack.c.b16 %v1869, %v1868
  %v1913 = vpack.c.b16 %v1871, %v1870
  %v1914 = vpack.c.b16 %v1873, %v1872
  %v1915 = vpack.c.b16 %v1875, %v1874
  %v1916 = vpack.c.b16 %v1877, %v1876
  %v1917 = vpack.c.b16 %v1879, %v1878
  %v1918 = vpack.c.b16 %v1881, %v1880
  %v1919 = vpack.c.b16 %v1883, %v1882
  %v1920 = vpack.c.b16 %v1885, %v1884
  %v1921 = vpack.c.b16 %v1887, %v1886
  %v1922 = vpack.c.b16 %v1889, %v1888
  %v1923 = vpack.c.b16 %v1891, %v1890
  %v1924 = vpack.c.b16 %v1893, %v1892
  %v1925 = vpack.c.b16 %v1895, %v1894
  %v1926 = vpack.c.b16 %v1897, %v1896
  %v1927 = vpack.c.b16 %v1899, %v1898
  %v1928 = vpack.c.b16 %v1901, %v1900
  %v1929 = vpack.c.b16 %v1903, %v1902
  %v1930 = vpack.c.b16 %v1905, %v1904
  %v1931 = vpack.c.b16 %v1907, %v1906
  %v1932 = vpack.c.b16 %v1909, %v1908
  %v1933 = vpack.c.b16 %v1911, %v1910
  %v1957 = vsel %vm1524, %v1758, 0
  %v1960 = vsel %vm1524, %v1761, 0
  %v1963 = vsel %vm1524, %v1764, 0
  %v1966 = vsel %vm1524, %v1767, 0
  %v1969 = vsel %vm1524, %v1770, 0
  %v1972 = vsel %vm1524, %v1773, 0
  %v1975 = vsel %vm1524, %v1776, 0
  %v1978 = vsel %vm1524, %v1779, 0
  %1980 = vmatprep.subr.bf16.mxu0 0
  %1981 = vmatpush1.bf16.msra.mxu0 %v1912
  %1982 = vmatprep.subr.bf16.mxu0 0
  %1983 = vmatpush1.bf16.msra.mxu0 %v1913
  %1984 = vmatprep.subr.bf16.mxu0 0
  %1985 = vmatpush1.bf16.msra.mxu0 %v1914
  %1986 = vmatprep.subr.bf16.mxu0 0
  %1987 = vmatpush1.bf16.msra.mxu0 %v1915
  %1988 = vmatprep.subr.bf16.mxu0 0
  %1989 = vmatpush1.bf16.msra.mxu0 %v1916
  %1990 = vmatprep.subr.bf16.mxu0 0
  %1991 = vmatpush1.bf16.msra.mxu0 %v1917
  %1992 = vmatprep.subr.bf16.mxu0 0
  %1993 = vmatpush1.bf16.msra.mxu0 %v1918
  %1994 = vmatprep.subr.bf16.mxu0 0
  %1995 = vmatpush1.bf16.msra.mxu0 %v1919
  %1996 = vmatprep.subr.bf16.mxu0 0
  %1997 = vmatpush1.bf16.msra.mxu0 %v1920
  %1998 = vmatprep.subr.bf16.mxu0 0
  %1999 = vmatpush1.bf16.msra.mxu0 %v1921
  %2000 = vmatprep.subr.bf16.mxu0 0
  %2001 = vmatpush1.bf16.msra.mxu0 %v1922
  %2002 = vmatprep.subr.bf16.mxu0 0
  %2003 = vmatpush1.bf16.msra.mxu0 %v1923
  %2004 = vmatprep.subr.bf16.mxu0 0
  %2005 = vmatpush1.bf16.msra.mxu0 %v1924
  %2006 = vmatprep.subr.bf16.mxu0 0
  %2007 = vmatpush1.bf16.msra.mxu0 %v1925
  %2008 = vmatprep.subr.bf16.mxu0 0
  %2009 = vmatpush1.bf16.msra.mxu0 %v1926
  %2010 = vmatprep.subr.bf16.mxu0 0
  %2011 = vmatpush1.bf16.msra.mxu0 %v1927
  %2012 = vmatprep.mubr.bf16.mxu0 %v1757
  %2013 = vmatmul.mubr.bf16.gmra.mrb[0].mxu0 %v1756
  %v2014 = vpop.f32.mrb[0].mxu0
  %v2015 = vadd.f32 0.0, %v2014
  %v2016 = vpop.f32.mrb[0].mxu0
  %v2017 = vpop.f32.mrb[0].mxu0
  %v2018 = vadd.f32 0.0, %v2017
  %v2019 = vpop.f32.mrb[0].mxu0
  %2020 = vmatprep.mubr.bf16.mxu0 %v1760
  %2021 = vmatmul.mubr.bf16.gmra.mrb[0].mxu0 %v1759
  %v2022 = vpop.f32.mrb[0].mxu0
  %v2023 = vadd.f32 0.0, %v2022
  %v2024 = vpop.f32.mrb[0].mxu0
  %v2025 = vpop.f32.mrb[0].mxu0
  %v2026 = vadd.f32 0.0, %v2025
  %v2027 = vpop.f32.mrb[0].mxu0
  %2028 = vmatprep.mubr.bf16.mxu0 %v1763
  %2029 = vmatmul.mubr.bf16.gmra.mrb[0].mxu0 %v1762
  %v2030 = vpop.f32.mrb[0].mxu0
  %v2031 = vadd.f32 0.0, %v2030
  %v2032 = vpop.f32.mrb[0].mxu0
  %v2033 = vpop.f32.mrb[0].mxu0
  %v2034 = vadd.f32 0.0, %v2033
  %v2035 = vpop.f32.mrb[0].mxu0
  %2036 = vmatprep.mubr.bf16.mxu0 %v1766
  %2037 = vmatmul.mubr.bf16.gmra.mrb[0].mxu0 %v1765
  %v2038 = vpop.f32.mrb[0].mxu0
  %v2039 = vadd.f32 0.0, %v2038
  %v2040 = vpop.f32.mrb[0].mxu0
  %v2041 = vpop.f32.mrb[0].mxu0
  %v2042 = vadd.f32 0.0, %v2041
  %v2043 = vpop.f32.mrb[0].mxu0
  %2044 = vmatprep.mubr.bf16.mxu0 %v1769
  %2045 = vmatmul.mubr.bf16.gmra.mrb[0].mxu0 %v1768
  %v2046 = vpop.f32.mrb[0].mxu0
  %v2047 = vadd.f32 0.0, %v2046
  %v2048 = vpop.f32.mrb[0].mxu0
  %v2049 = vpop.f32.mrb[0].mxu0
  %v2050 = vadd.f32 0.0, %v2049
  %v2051 = vpop.f32.mrb[0].mxu0
  %2052 = vmatprep.mubr.bf16.mxu0 %v1772
  %2053 = vmatmul.mubr.bf16.gmra.mrb[0].mxu0 %v1771
  %v2054 = vpop.f32.mrb[0].mxu0
  %v2055 = vadd.f32 0.0, %v2054
  %v2056 = vpop.f32.mrb[0].mxu0
  %v2057 = vpop.f32.mrb[0].mxu0
  %v2058 = vadd.f32 0.0, %v2057
  %v2059 = vpop.f32.mrb[0].mxu0
  %2060 = vmatprep.mubr.bf16.mxu0 %v1775
  %2061 = vmatmul.mubr.bf16.gmra.mrb[0].mxu0 %v1774
  %v2062 = vpop.f32.mrb[0].mxu0
  %v2063 = vadd.f32 0.0, %v2062
  %v2064 = vpop.f32.mrb[0].mxu0
  %v2065 = vpop.f32.mrb[0].mxu0
  %v2066 = vadd.f32 0.0, %v2065
  %v2067 = vpop.f32.mrb[0].mxu0
  %2068 = vmatprep.mubr.bf16.mxu0 %v1778
  %2069 = vmatmul.mubr.bf16.gmra.mrb[0].mxu0 %v1777
  %v2070 = vpop.f32.mrb[0].mxu0
  %v2071 = vadd.f32 0.0, %v2070
  %v2072 = vpop.f32.mrb[0].mxu0
  %v2073 = vpop.f32.mrb[0].mxu0
  %v2074 = vadd.f32 0.0, %v2073
  %v2075 = vpop.f32.mrb[0].mxu0
  %2076 = vdwg.mxu0
  %2077 = vmatprep.subr.bf16.mxu0 0
  %2078 = vmatpush1.bf16.msra.mxu0 %v1928
  %2079 = vmatprep.subr.bf16.mxu0 0
  %2080 = vmatpush1.bf16.msra.mxu0 %v1929
  %2081 = vmatprep.subr.bf16.mxu0 0
  %2082 = vmatpush1.bf16.msra.mxu0 %v1930
  %2083 = vmatprep.subr.bf16.mxu0 0
  %2084 = vmatpush1.bf16.msra.mxu0 %v1931
  %2085 = vmatprep.subr.bf16.mxu0 0
  %2086 = vmatpush1.bf16.msra.mxu0 %v1932
  %2087 = vmatprep.subr.bf16.mxu0 0
  %2088 = vmatpush1.bf16.msra.mxu0 %v1933
  %2089 = vmatprep.subr.bf16.mxu0 0
  %2090 = vmatpush1.bf16.msra.mxu0 0
  %2091 = vmatprep.subr.bf16.mxu0 0
  %2092 = vmatpush1.bf16.msra.mxu0 0
  %2093 = vmatprep.subr.bf16.mxu0 0
  %2094 = vmatpush1.bf16.msra.mxu0 0
  %2095 = vmatprep.subr.bf16.mxu0 0
  %2096 = vmatpush1.bf16.msra.mxu0 0
  %2097 = vmatprep.subr.bf16.mxu0 0
  %2098 = vmatpush1.bf16.msra.mxu0 0
  %2099 = vmatprep.subr.bf16.mxu0 0
  %2100 = vmatpush1.bf16.msra.mxu0 0
  %2101 = vmatprep.subr.bf16.mxu0 0
  %2102 = vmatpush1.bf16.msra.mxu0 0
  %2103 = vmatprep.subr.bf16.mxu0 0
  %2104 = vmatpush1.bf16.msra.mxu0 0
  %2105 = vmatprep.subr.bf16.mxu0 0
  %2106 = vmatpush1.bf16.msra.mxu0 0
  %2107 = vmatprep.subr.bf16.mxu0 0
  %2108 = vmatpush1.bf16.msra.mxu0 0
  %2109 = vmatprep.mubr.bf16.mxu0 0
  %2110 = vmatmul.mubr.bf16.gmra.mrb[0].mxu0 %v1957
  %v2111 = vpop.f32.mrb[0].mxu0
  %v2112 = vadd.f32 %v2015, %v2111
  %v2113 = vpop.f32.mrb[0].mxu0
  %v2114 = vpop.f32.mrb[0].mxu0
  %v2115 = vadd.f32 %v2018, %v2114
  %v2116 = vpop.f32.mrb[0].mxu0
  %2117 = vmatprep.mubr.bf16.mxu0 0
  %2118 = vmatmul.mubr.bf16.gmra.mrb[0].mxu0 %v1960
  %v2119 = vpop.f32.mrb[0].mxu0
  %v2120 = vadd.f32 %v2023, %v2119
  %v2121 = vpop.f32.mrb[0].mxu0
  %v2122 = vpop.f32.mrb[0].mxu0
  %v2123 = vadd.f32 %v2026, %v2122
  %v2124 = vpop.f32.mrb[0].mxu0
  %2125 = vmatprep.mubr.bf16.mxu0 0
  %2126 = vmatmul.mubr.bf16.gmra.mrb[0].mxu0 %v1963
  %v2127 = vpop.f32.mrb[0].mxu0
  %v2128 = vadd.f32 %v2031, %v2127
  %v2129 = vpop.f32.mrb[0].mxu0
  %v2130 = vpop.f32.mrb[0].mxu0
  %v2131 = vadd.f32 %v2034, %v2130
  %v2132 = vpop.f32.mrb[0].mxu0
  %2133 = vmatprep.mubr.bf16.mxu0 0
  %2134 = vmatmul.mubr.bf16.gmra.mrb[0].mxu0 %v1966
  %v2135 = vpop.f32.mrb[0].mxu0
  %v2136 = vadd.f32 %v2039, %v2135
  %v2137 = vpop.f32.mrb[0].mxu0
  %v2138 = vpop.f32.mrb[0].mxu0
  %v2139 = vadd.f32 %v2042, %v2138
  %v2140 = vpop.f32.mrb[0].mxu0
  %2141 = vmatprep.mubr.bf16.mxu0 0
  %2142 = vmatmul.mubr.bf16.gmra.mrb[0].mxu0 %v1969
  %v2143 = vpop.f32.mrb[0].mxu0
  %v2144 = vadd.f32 %v2047, %v2143
  %v2145 = vpop.f32.mrb[0].mxu0
  %v2146 = vpop.f32.mrb[0].mxu0
  %v2147 = vadd.f32 %v2050, %v2146
  %v2148 = vpop.f32.mrb[0].mxu0
  %2149 = vmatprep.mubr.bf16.mxu0 0
  %2150 = vmatmul.mubr.bf16.gmra.mrb[0].mxu0 %v1972
  %v2151 = vpop.f32.mrb[0].mxu0
  %v2152 = vadd.f32 %v2055, %v2151
  %v2153 = vpop.f32.mrb[0].mxu0
  %v2154 = vpop.f32.mrb[0].mxu0
  %v2155 = vadd.f32 %v2058, %v2154
  %v2156 = vpop.f32.mrb[0].mxu0
  %2157 = vmatprep.mubr.bf16.mxu0 0
  %2158 = vmatmul.mubr.bf16.gmra.mrb[0].mxu0 %v1975
  %v2159 = vpop.f32.mrb[0].mxu0
  %v2160 = vadd.f32 %v2063, %v2159
  %v2161 = vpop.f32.mrb[0].mxu0
  %v2162 = vpop.f32.mrb[0].mxu0
  %v2163 = vadd.f32 %v2066, %v2162
  %v2164 = vpop.f32.mrb[0].mxu0
  %2165 = vmatprep.mubr.bf16.mxu0 0
  %2166 = vmatmul.mubr.bf16.gmra.mrb[0].mxu0 %v1978
  %v2167 = vpop.f32.mrb[0].mxu0
  %v2168 = vadd.f32 %v2071, %v2167
  %v2169 = vpop.f32.mrb[0].mxu0
  %v2170 = vpop.f32.mrb[0].mxu0
  %v2171 = vadd.f32 %v2074, %v2170
  %v2172 = vpop.f32.mrb[0].mxu0
  %2173 = vdwg.mxu0
  %v2175 = vlaneseq
  %v2176 = vshrl.u32 %v2175, 7
  %v2177 = vsub.s32 0, %v2176
  %v2178 = vrot.slane %v1755, %v2177
  %v2180 = vadd.f32 %v2178, %v2112
  %v2181 = vadd.f32 %v2178, %v2115
  %v2182 = vadd.f32 %v2178, %v2120
  %v2183 = vadd.f32 %v2178, %v2123
  %v2184 = vadd.f32 %v2178, %v2128
  %v2185 = vadd.f32 %v2178, %v2131
  %v2186 = vadd.f32 %v2178, %v2136
  %v2187 = vadd.f32 %v2178, %v2139
  %v2188 = vadd.f32 %v2178, %v2144
  %v2189 = vadd.f32 %v2178, %v2147
  %v2190 = vadd.f32 %v2178, %v2152
  %v2191 = vadd.f32 %v2178, %v2155
  %v2192 = vadd.f32 %v2178, %v2160
  %v2193 = vadd.f32 %v2178, %v2163
  %v2194 = vadd.f32 %v2178, %v2168
  %v2195 = vadd.f32 %v2178, %v2171
  %v2196 = vld [vmem:[#allocation2 + $0x18] sm:$0xff]
  %v2197 = vld [vmem:[#allocation2 + $0x20] sm:$0xff]
  %v2198 = vld [vmem:[#allocation2 + $0x28] sm:$0xff]
  %v2199 = vld [vmem:[#allocation2 + $0x30] sm:$0xff]
  %v2200 = vld [vmem:[#allocation2 + $0x38] sm:$0xff]
  %v2201 = vld [vmem:[#allocation2 + $0x40] sm:$0xff]
  %v2202 = vld [vmem:[#allocation2 + $0x48] sm:$0xff]
  %v2203 = vld [vmem:[#allocation2 + $0x50] sm:$0xff]
  %v2204 = vld [vmem:[#allocation2 + $0x58] sm:$0xff]
  %v2205 = vld [vmem:[#allocation2 + $0x60] sm:$0xff]
  %v2206 = vld [vmem:[#allocation2 + $0x68] sm:$0xff]
  %v2207 = vld [vmem:[#allocation2 + $0x70] sm:$0xff]
  %v2208 = vld [vmem:[#allocation2 + $0x78] sm:$0xff]
  %v2209 = vld [vmem:[#allocation2 + $0x80] sm:$0xff]
  %v2210 = vld [vmem:[#allocation2 + $0x88] sm:$0xff]
  %v2211 = vld [vmem:[#allocation2 + $0x90] sm:$0xff]
  %v2212 = vld [vmem:[#allocation2 + $0x98] sm:$0xff]
  %v2213 = vld [vmem:[#allocation2 + $0xa0] sm:$0xff]
  %v2214 = vld [vmem:[#allocation2 + $0xa8] sm:$0xff]
  %v2215 = vld [vmem:[#allocation2 + $0xb0] sm:$0xff]
  %v2216 = vld [vmem:[#allocation2 + $0xb8] sm:$0xff]
  %v2217 = vld [vmem:[#allocation2 + $0xc0] sm:$0xff]
  %v2218 = vld [vmem:[#allocation2 + $0xc8] sm:$0xff]
  %v2219 = vld [vmem:[#allocation2 + $0xd0] sm:$0xff]
  %s2220 = scalar_lea.vmem %s3, 176
  %v2221 = vld [vmem:[%s2220] sm:$0xf]
  %v2222 = vld [vmem:[%s2220 + $0x4] sm:$0xf]
  %v2223 = vld [vmem:[%s2220 + $0x8] sm:$0xf]
  %v2224 = vld [vmem:[%s2220 + $0xc] sm:$0xf]
  %v2225 = vld [vmem:[%s2220 + $0x10] sm:$0xf]
  %v2226 = vld [vmem:[%s2220 + $0x14] sm:$0xf]
  %v2227 = vld [vmem:[%s2220 + $0x18] sm:$0xf]
  %v2228 = vld [vmem:[%s2220 + $0x1c] sm:$0xf]
  %v2229 = vld [vmem:[%s2220 + $0x20] sm:$0xf]
  %v2230 = vld [vmem:[%s2220 + $0x24] sm:$0xf]
  %v2231 = vld [vmem:[%s2220 + $0x28] sm:$0xf]
  %v2232 = vld [vmem:[%s2220 + $0x2c] sm:$0xf]
  %v2233 = vld [vmem:[%s2220 + $0x30] sm:$0xf]
  %v2234 = vld [vmem:[%s2220 + $0x34] sm:$0xf]
  %v2235 = vld [vmem:[%s2220 + $0x38] sm:$0xf]
  %v2236 = vld [vmem:[%s2220 + $0x3c] sm:$0xf]
  %v2237 = vld [vmem:[%s2220 + $0x40] sm:$0xf]
  %v2238 = vld [vmem:[%s2220 + $0x44] sm:$0xf]
  %v2239 = vld [vmem:[%s2220 + $0x48] sm:$0xf]
  %v2240 = vld [vmem:[%s2220 + $0x4c] sm:$0xf]
  %v2241 = vld [vmem:[%s2220 + $0x50] sm:$0xf]
  %v2242 = vld [vmem:[%s2220 + $0x54] sm:$0xf]
  %v2243 = vld [vmem:[%s2220 + $0x58] sm:$0xf]
  %v2244 = vld [vmem:[%s2220 + $0x5c] sm:$0xf]
  %v2245 = vld [vmem:[%s2220 + $0x60] sm:$0xf]
  %v2246 = vld [vmem:[%s2220 + $0x64] sm:$0xf]
  %v2247 = vld [vmem:[%s2220 + $0x68] sm:$0xf]
  %v2248 = vld [vmem:[%s2220 + $0x6c] sm:$0xf]
  %v2249 = vld [vmem:[%s2220 + $0x70] sm:$0xf]
  %v2250 = vld [vmem:[%s2220 + $0x74] sm:$0xf]
  %v2251 = vld [vmem:[%s2220 + $0x78] sm:$0xf]
  %v2252 = vld [vmem:[%s2220 + $0x7c] sm:$0xf]
  %v2253 = vld [vmem:[%s2220 + $0x80] sm:$0xf]
  %v2254 = vld [vmem:[%s2220 + $0x84] sm:$0xf]
  %v2255 = vld [vmem:[%s2220 + $0x88] sm:$0xf]
  %v2256 = vld [vmem:[%s2220 + $0x8c] sm:$0xf]
  %v2257 = vld [vmem:[%s2220 + $0x90] sm:$0xf]
  %v2258 = vld [vmem:[%s2220 + $0x94] sm:$0xf]
  %v2259 = vld [vmem:[%s2220 + $0x98] sm:$0xf]
  %v2260 = vld [vmem:[%s2220 + $0x9c] sm:$0xf]
  %v2261 = vld [vmem:[%s2220 + $0xa0] sm:$0xf]
  %v2262 = vld [vmem:[%s2220 + $0xa4] sm:$0xf]
  %v2263 = vld [vmem:[%s2220 + $0xa8] sm:$0xf]
  %v2264 = vld [vmem:[%s2220 + $0xac] sm:$0xf]
  %v2309 = vunpack.c.l.b16 %v2221
  %v2310 = vunpack.c.l.b16 %v2222
  %v2311 = vunpack.c.l.b16 %v2223
  %v2312 = vunpack.c.l.b16 %v2224
  %v2313 = vunpack.c.l.b16 %v2225
  %v2314 = vunpack.c.l.b16 %v2226
  %v2315 = vunpack.c.l.b16 %v2227
  %v2316 = vunpack.c.l.b16 %v2228
  %v2317 = vunpack.c.l.b16 %v2229
  %v2318 = vunpack.c.l.b16 %v2230
  %v2319 = vunpack.c.l.b16 %v2231
  %v2320 = vunpack.c.l.b16 %v2232
  %v2321 = vunpack.c.l.b16 %v2233
  %v2322 = vunpack.c.l.b16 %v2234
  %v2323 = vunpack.c.l.b16 %v2235
  %v2324 = vunpack.c.l.b16 %v2236
  %v2325 = vunpack.c.l.b16 %v2237
  %v2326 = vunpack.c.l.b16 %v2238
  %v2327 = vunpack.c.l.b16 %v2239
  %v2328 = vunpack.c.l.b16 %v2240
  %v2329 = vunpack.c.l.b16 %v2241
  %v2330 = vunpack.c.l.b16 %v2242
  %v2331 = vunpack.c.l.b16 %v2243
  %v2332 = vunpack.c.l.b16 %v2244
  %v2333 = vunpack.c.l.b16 %v2245
  %v2334 = vunpack.c.l.b16 %v2246
  %v2335 = vunpack.c.l.b16 %v2247
  %v2336 = vunpack.c.l.b16 %v2248
  %v2337 = vunpack.c.l.b16 %v2249
  %v2338 = vunpack.c.l.b16 %v2250
  %v2339 = vunpack.c.l.b16 %v2251
  %v2340 = vunpack.c.l.b16 %v2252
  %v2341 = vunpack.c.l.b16 %v2253
  %v2342 = vunpack.c.l.b16 %v2254
  %v2343 = vunpack.c.l.b16 %v2255
  %v2344 = vunpack.c.l.b16 %v2256
  %v2345 = vunpack.c.l.b16 %v2257
  %v2346 = vunpack.c.l.b16 %v2258
  %v2347 = vunpack.c.l.b16 %v2259
  %v2348 = vunpack.c.l.b16 %v2260
  %v2349 = vunpack.c.l.b16 %v2261
  %v2350 = vunpack.c.l.b16 %v2262
  %v2351 = vunpack.c.l.b16 %v2263
  %v2352 = vunpack.c.l.b16 %v2264
  %v2353 = vpack.c.b16 %v2310, %v2309
  %v2354 = vpack.c.b16 %v2312, %v2311
  %v2355 = vpack.c.b16 %v2314, %v2313
  %v2356 = vpack.c.b16 %v2316, %v2315
  %v2357 = vpack.c.b16 %v2318, %v2317
  %v2358 = vpack.c.b16 %v2320, %v2319
  %v2359 = vpack.c.b16 %v2322, %v2321
  %v2360 = vpack.c.b16 %v2324, %v2323
  %v2361 = vpack.c.b16 %v2326, %v2325
  %v2362 = vpack.c.b16 %v2328, %v2327
  %v2363 = vpack.c.b16 %v2330, %v2329
  %v2364 = vpack.c.b16 %v2332, %v2331
  %v2365 = vpack.c.b16 %v2334, %v2333
  %v2366 = vpack.c.b16 %v2336, %v2335
  %v2367 = vpack.c.b16 %v2338, %v2337
  %v2368 = vpack.c.b16 %v2340, %v2339
  %v2369 = vpack.c.b16 %v2342, %v2341
  %v2370 = vpack.c.b16 %v2344, %v2343
  %v2371 = vpack.c.b16 %v2346, %v2345
  %v2372 = vpack.c.b16 %v2348, %v2347
  %v2373 = vpack.c.b16 %v2350, %v2349
  %v2374 = vpack.c.b16 %v2352, %v2351
  %v2398 = vsel %vm1524, %v2198, 0
  %v2401 = vsel %vm1524, %v2201, 0
  %v2404 = vsel %vm1524, %v2204, 0
  %v2407 = vsel %vm1524, %v2207, 0
  %v2410 = vsel %vm1524, %v2210, 0
  %v2413 = vsel %vm1524, %v2213, 0
  %v2416 = vsel %vm1524, %v2216, 0
  %v2419 = vsel %vm1524, %v2219, 0
  %2421 = vmatprep.subr.bf16.mxu0 0
  %2422 = vmatpush1.bf16.msra.mxu0 %v2353
  %2423 = vmatprep.subr.bf16.mxu0 0
  %2424 = vmatpush1.bf16.msra.mxu0 %v2354
  %2425 = vmatprep.subr.bf16.mxu0 0
  %2426 = vmatpush1.bf16.msra.mxu0 %v2355
  %2427 = vmatprep.subr.bf16.mxu0 0
  %2428 = vmatpush1.bf16.msra.mxu0 %v2356
  %2429 = vmatprep.subr.bf16.mxu0 0
  %2430 = vmatpush1.bf16.msra.mxu0 %v2357
  %2431 = vmatprep.subr.bf16.mxu0 0
  %2432 = vmatpush1.bf16.msra.mxu0 %v2358
  %2433 = vmatprep.subr.bf16.mxu0 0
  %2434 = vmatpush1.bf16.msra.mxu0 %v2359
  %2435 = vmatprep.subr.bf16.mxu0 0
  %2436 = vmatpush1.bf16.msra.mxu0 %v2360
  %2437 = vmatprep.subr.bf16.mxu0 0
  %2438 = vmatpush1.bf16.msra.mxu0 %v2361
  %2439 = vmatprep.subr.bf16.mxu0 0
  %2440 = vmatpush1.bf16.msra.mxu0 %v2362
  %2441 = vmatprep.subr.bf16.mxu0 0
  %2442 = vmatpush1.bf16.msra.mxu0 %v2363
  %2443 = vmatprep.subr.bf16.mxu0 0
  %2444 = vmatpush1.bf16.msra.mxu0 %v2364
  %2445 = vmatprep.subr.bf16.mxu0 0
  %2446 = vmatpush1.bf16.msra.mxu0 %v2365
  %2447 = vmatprep.subr.bf16.mxu0 0
  %2448 = vmatpush1.bf16.msra.mxu0 %v2366
  %2449 = vmatprep.subr.bf16.mxu0 0
  %2450 = vmatpush1.bf16.msra.mxu0 %v2367
  %2451 = vmatprep.subr.bf16.mxu0 0
  %2452 = vmatpush1.bf16.msra.mxu0 %v2368
  %2453 = vmatprep.mubr.bf16.mxu0 %v2197
  %2454 = vmatmul.mubr.bf16.gmra.mrb[0].mxu0 %v2196
  %v2455 = vpop.f32.mrb[0].mxu0
  %v2456 = vadd.f32 0.0, %v2455
  %v2457 = vpop.f32.mrb[0].mxu0
  %v2458 = vpop.f32.mrb[0].mxu0
  %v2459 = vadd.f32 0.0, %v2458
  %v2460 = vpop.f32.mrb[0].mxu0
  %2461 = vmatprep.mubr.bf16.mxu0 %v2200
  %2462 = vmatmul.mubr.bf16.gmra.mrb[0].mxu0 %v2199
  %v2463 = vpop.f32.mrb[0].mxu0
  %v2464 = vadd.f32 0.0, %v2463
  %v2465 = vpop.f32.mrb[0].mxu0
  %v2466 = vpop.f32.mrb[0].mxu0
  %v2467 = vadd.f32 0.0, %v2466
  %v2468 = vpop.f32.mrb[0].mxu0
  %2469 = vmatprep.mubr.bf16.mxu0 %v2203
  %2470 = vmatmul.mubr.bf16.gmra.mrb[0].mxu0 %v2202
  %v2471 = vpop.f32.mrb[0].mxu0
  %v2472 = vadd.f32 0.0, %v2471
  %v2473 = vpop.f32.mrb[0].mxu0
  %v2474 = vpop.f32.mrb[0].mxu0
  %v2475 = vadd.f32 0.0, %v2474
  %v2476 = vpop.f32.mrb[0].mxu0
  %2477 = vmatprep.mubr.bf16.mxu0 %v2206
  %2478 = vmatmul.mubr.bf16.gmra.mrb[0].mxu0 %v2205
  %v2479 = vpop.f32.mrb[0].mxu0
  %v2480 = vadd.f32 0.0, %v2479
  %v2481 = vpop.f32.mrb[0].mxu0
  %v2482 = vpop.f32.mrb[0].mxu0
  %v2483 = vadd.f32 0.0, %v2482
  %v2484 = vpop.f32.mrb[0].mxu0
  %2485 = vmatprep.mubr.bf16.mxu0 %v2209
  %2486 = vmatmul.mubr.bf16.gmra.mrb[0].mxu0 %v2208
  %v2487 = vpop.f32.mrb[0].mxu0
  %v2488 = vadd.f32 0.0, %v2487
  %v2489 = vpop.f32.mrb[0].mxu0
  %v2490 = vpop.f32.mrb[0].mxu0
  %v2491 = vadd.f32 0.0, %v2490
  %v2492 = vpop.f32.mrb[0].mxu0
  %2493 = vmatprep.mubr.bf16.mxu0 %v2212
  %2494 = vmatmul.mubr.bf16.gmra.mrb[0].mxu0 %v2211
  %v2495 = vpop.f32.mrb[0].mxu0
  %v2496 = vadd.f32 0.0, %v2495
  %v2497 = vpop.f32.mrb[0].mxu0
  %v2498 = vpop.f32.mrb[0].mxu0
  %v2499 = vadd.f32 0.0, %v2498
  %v2500 = vpop.f32.mrb[0].mxu0
  %2501 = vmatprep.mubr.bf16.mxu0 %v2215
  %2502 = vmatmul.mubr.bf16.gmra.mrb[0].mxu0 %v2214
  %v2503 = vpop.f32.mrb[0].mxu0
  %v2504 = vadd.f32 0.0, %v2503
  %v2505 = vpop.f32.mrb[0].mxu0
  %v2506 = vpop.f32.mrb[0].mxu0
  %v2507 = vadd.f32 0.0, %v2506
  %v2508 = vpop.f32.mrb[0].mxu0
  %2509 = vmatprep.mubr.bf16.mxu0 %v2218
  %2510 = vmatmul.mubr.bf16.gmra.mrb[0].mxu0 %v2217
  %v2511 = vpop.f32.mrb[0].mxu0
  %v2512 = vadd.f32 0.0, %v2511
  %v2513 = vpop.f32.mrb[0].mxu0
  %v2514 = vpop.f32.mrb[0].mxu0
  %v2515 = vadd.f32 0.0, %v2514
  %v2516 = vpop.f32.mrb[0].mxu0
  %2517 = vdwg.mxu0
  %2518 = vmatprep.subr.bf16.mxu0 0
  %2519 = vmatpush1.bf16.msra.mxu0 %v2369
  %2520 = vmatprep.subr.bf16.mxu0 0
  %2521 = vmatpush1.bf16.msra.mxu0 %v2370
  %2522 = vmatprep.subr.bf16.mxu0 0
  %2523 = vmatpush1.bf16.msra.mxu0 %v2371
  %2524 = vmatprep.subr.bf16.mxu0 0
  %2525 = vmatpush1.bf16.msra.mxu0 %v2372
  %2526 = vmatprep.subr.bf16.mxu0 0
  %2527 = vmatpush1.bf16.msra.mxu0 %v2373
  %2528 = vmatprep.subr.bf16.mxu0 0
  %2529 = vmatpush1.bf16.msra.mxu0 %v2374
  %2530 = vmatprep.subr.bf16.mxu0 0
  %2531 = vmatpush1.bf16.msra.mxu0 0
  %2532 = vmatprep.subr.bf16.mxu0 0
  %2533 = vmatpush1.bf16.msra.mxu0 0
  %2534 = vmatprep.subr.bf16.mxu0 0
  %2535 = vmatpush1.bf16.msra.mxu0 0
  %2536 = vmatprep.subr.bf16.mxu0 0
  %2537 = vmatpush1.bf16.msra.mxu0 0
  %2538 = vmatprep.subr.bf16.mxu0 0
  %2539 = vmatpush1.bf16.msra.mxu0 0
  %2540 = vmatprep.subr.bf16.mxu0 0
  %2541 = vmatpush1.bf16.msra.mxu0 0
  %2542 = vmatprep.subr.bf16.mxu0 0
  %2543 = vmatpush1.bf16.msra.mxu0 0
  %2544 = vmatprep.subr.bf16.mxu0 0
  %2545 = vmatpush1.bf16.msra.mxu0 0
  %2546 = vmatprep.subr.bf16.mxu0 0
  %2547 = vmatpush1.bf16.msra.mxu0 0
  %2548 = vmatprep.subr.bf16.mxu0 0
  %2549 = vmatpush1.bf16.msra.mxu0 0
  %2550 = vmatprep.mubr.bf16.mxu0 0
  %2551 = vmatmul.mubr.bf16.gmra.mrb[0].mxu0 %v2398
  %v2552 = vpop.f32.mrb[0].mxu0
  %v2553 = vadd.f32 %v2456, %v2552
  %v2554 = vpop.f32.mrb[0].mxu0
  %v2555 = vpop.f32.mrb[0].mxu0
  %v2556 = vadd.f32 %v2459, %v2555
  %v2557 = vpop.f32.mrb[0].mxu0
  %2558 = vmatprep.mubr.bf16.mxu0 0
  %2559 = vmatmul.mubr.bf16.gmra.mrb[0].mxu0 %v2401
  %v2560 = vpop.f32.mrb[0].mxu0
  %v2561 = vadd.f32 %v2464, %v2560
  %v2562 = vpop.f32.mrb[0].mxu0
  %v2563 = vpop.f32.mrb[0].mxu0
  %v2564 = vadd.f32 %v2467, %v2563
  %v2565 = vpop.f32.mrb[0].mxu0
  %2566 = vmatprep.mubr.bf16.mxu0 0
  %2567 = vmatmul.mubr.bf16.gmra.mrb[0].mxu0 %v2404
  %v2568 = vpop.f32.mrb[0].mxu0
  %v2569 = vadd.f32 %v2472, %v2568
  %v2570 = vpop.f32.mrb[0].mxu0
  %v2571 = vpop.f32.mrb[0].mxu0
  %v2572 = vadd.f32 %v2475, %v2571
  %v2573 = vpop.f32.mrb[0].mxu0
  %2574 = vmatprep.mubr.bf16.mxu0 0
  %2575 = vmatmul.mubr.bf16.gmra.mrb[0].mxu0 %v2407
  %v2576 = vpop.f32.mrb[0].mxu0
  %v2577 = vadd.f32 %v2480, %v2576
  %v2578 = vpop.f32.mrb[0].mxu0
  %v2579 = vpop.f32.mrb[0].mxu0
  %v2580 = vadd.f32 %v2483, %v2579
  %v2581 = vpop.f32.mrb[0].mxu0
  %2582 = vmatprep.mubr.bf16.mxu0 0
  %2583 = vmatmul.mubr.bf16.gmra.mrb[0].mxu0 %v2410
  %v2584 = vpop.f32.mrb[0].mxu0
  %v2585 = vadd.f32 %v2488, %v2584
  %v2586 = vpop.f32.mrb[0].mxu0
  %v2587 = vpop.f32.mrb[0].mxu0
  %v2588 = vadd.f32 %v2491, %v2587
  %v2589 = vpop.f32.mrb[0].mxu0
  %2590 = vmatprep.mubr.bf16.mxu0 0
  %2591 = vmatmul.mubr.bf16.gmra.mrb[0].mxu0 %v2413
  %v2592 = vpop.f32.mrb[0].mxu0
  %v2593 = vadd.f32 %v2496, %v2592
  %v2594 = vpop.f32.mrb[0].mxu0
  %v2595 = vpop.f32.mrb[0].mxu0
  %v2596 = vadd.f32 %v2499, %v2595
  %v2597 = vpop.f32.mrb[0].mxu0
  %2598 = vmatprep.mubr.bf16.mxu0 0
  %2599 = vmatmul.mubr.bf16.gmra.mrb[0].mxu0 %v2416
  %v2600 = vpop.f32.mrb[0].mxu0
  %v2601 = vadd.f32 %v2504, %v2600
  %v2602 = vpop.f32.mrb[0].mxu0
  %v2603 = vpop.f32.mrb[0].mxu0
  %v2604 = vadd.f32 %v2507, %v2603
  %v2605 = vpop.f32.mrb[0].mxu0
  %2606 = vmatprep.mubr.bf16.mxu0 0
  %2607 = vmatmul.mubr.bf16.gmra.mrb[0].mxu0 %v2419
  %v2608 = vpop.f32.mrb[0].mxu0
  %v2609 = vadd.f32 %v2512, %v2608
  %v2610 = vpop.f32.mrb[0].mxu0
  %v2611 = vpop.f32.mrb[0].mxu0
  %v2612 = vadd.f32 %v2515, %v2611
  %v2613 = vpop.f32.mrb[0].mxu0
  %2614 = vdwg.mxu0
  %v2615 = vadd.f32 %v2180, %v2553
  %v2616 = vadd.f32 %v2181, %v2556
  %v2617 = vadd.f32 %v2182, %v2561
  %v2618 = vadd.f32 %v2183, %v2564
  %v2619 = vadd.f32 %v2184, %v2569
  %v2620 = vadd.f32 %v2185, %v2572
  %v2621 = vadd.f32 %v2186, %v2577
  %v2622 = vadd.f32 %v2187, %v2580
  %v2623 = vadd.f32 %v2188, %v2585
  %v2624 = vadd.f32 %v2189, %v2588
  %v2625 = vadd.f32 %v2190, %v2593
  %v2626 = vadd.f32 %v2191, %v2596
  %v2627 = vadd.f32 %v2192, %v2601
  %v2628 = vadd.f32 %v2193, %v2604
  %v2629 = vadd.f32 %v2194, %v2609
  %v2630 = vadd.f32 %v2195, %v2612
  %v2631 = vld [vmem:[#allocation2 + $0x30] sm:$0xff]
  %v2632 = vld [vmem:[#allocation2 + $0x38] sm:$0xff]
  %v2633 = vld [vmem:[#allocation2 + $0x40] sm:$0xff]
  %v2634 = vld [vmem:[#allocation2 + $0x48] sm:$0xff]
  %v2635 = vld [vmem:[#allocation2 + $0x50] sm:$0xff]
  %v2636 = vld [vmem:[#allocation2 + $0x58] sm:$0xff]
  %v2637 = vld [vmem:[#allocation2 + $0x60] sm:$0xff]
  %v2638 = vld [vmem:[#allocation2 + $0x68] sm:$0xff]
  %v2639 = vld [vmem:[#allocation2 + $0x70] sm:$0xff]
  %v2640 = vld [vmem:[#allocation2 + $0x78] sm:$0xff]
  %v2641 = vld [vmem:[#allocation2 + $0x80] sm:$0xff]
  %v2642 = vld [vmem:[#allocation2 + $0x88] sm:$0xff]
  %v2643 = vld [vmem:[#allocation2 + $0x90] sm:$0xff]
  %v2644 = vld [vmem:[#allocation2 + $0x98] sm:$0xff]
  %v2645 = vld [vmem:[#allocation2 + $0xa0] sm:$0xff]
  %v2646 = vld [vmem:[#allocation2 + $0xa8] sm:$0xff]
  %v2647 = vld [vmem:[#allocation2 + $0xb0] sm:$0xff]
  %v2648 = vld [vmem:[#allocation2 + $0xb8] sm:$0xff]
  %v2649 = vld [vmem:[#allocation2 + $0xc0] sm:$0xff]
  %v2650 = vld [vmem:[#allocation2 + $0xc8] sm:$0xff]
  %v2651 = vld [vmem:[#allocation2 + $0xd0] sm:$0xff]
  %v2652 = vld [vmem:[#allocation2 + $0xd8] sm:$0xff]
  %v2653 = vld [vmem:[#allocation2 + $0xe0] sm:$0xff]
  %v2654 = vld [vmem:[#allocation2 + $0xe8] sm:$0xff]
  %s2655 = scalar_lea.vmem %s3, 352
  %v2656 = vld [vmem:[%s2655] sm:$0xf]
  %v2657 = vld [vmem:[%s2655 + $0x4] sm:$0xf]
  %v2658 = vld [vmem:[%s2655 + $0x8] sm:$0xf]
  %v2659 = vld [vmem:[%s2655 + $0xc] sm:$0xf]
  %v2660 = vld [vmem:[%s2655 + $0x10] sm:$0xf]
  %v2661 = vld [vmem:[%s2655 + $0x14] sm:$0xf]
  %v2662 = vld [vmem:[%s2655 + $0x18] sm:$0xf]
  %v2663 = vld [vmem:[%s2655 + $0x1c] sm:$0xf]
  %v2664 = vld [vmem:[%s2655 + $0x20] sm:$0xf]
  %v2665 = vld [vmem:[%s2655 + $0x24] sm:$0xf]
  %v2666 = vld [vmem:[%s2655 + $0x28] sm:$0xf]
  %v2667 = vld [vmem:[%s2655 + $0x2c] sm:$0xf]
  %v2668 = vld [vmem:[%s2655 + $0x30] sm:$0xf]
  %v2669 = vld [vmem:[%s2655 + $0x34] sm:$0xf]
  %v2670 = vld [vmem:[%s2655 + $0x38] sm:$0xf]
  %v2671 = vld [vmem:[%s2655 + $0x3c] sm:$0xf]
  %v2672 = vld [vmem:[%s2655 + $0x40] sm:$0xf]
  %v2673 = vld [vmem:[%s2655 + $0x44] sm:$0xf]
  %v2674 = vld [vmem:[%s2655 + $0x48] sm:$0xf]
  %v2675 = vld [vmem:[%s2655 + $0x4c] sm:$0xf]
  %v2676 = vld [vmem:[%s2655 + $0x50] sm:$0xf]
  %v2677 = vld [vmem:[%s2655 + $0x54] sm:$0xf]
  %v2678 = vld [vmem:[%s2655 + $0x58] sm:$0xf]
  %v2679 = vld [vmem:[%s2655 + $0x5c] sm:$0xf]
  %v2680 = vld [vmem:[%s2655 + $0x60] sm:$0xf]
  %v2681 = vld [vmem:[%s2655 + $0x64] sm:$0xf]
  %v2682 = vld [vmem:[%s2655 + $0x68] sm:$0xf]
  %v2683 = vld [vmem:[%s2655 + $0x6c] sm:$0xf]
  %v2684 = vld [vmem:[%s2655 + $0x70] sm:$0xf]
  %v2685 = vld [vmem:[%s2655 + $0x74] sm:$0xf]
  %v2686 = vld [vmem:[%s2655 + $0x78] sm:$0xf]
  %v2687 = vld [vmem:[%s2655 + $0x7c] sm:$0xf]
  %v2688 = vld [vmem:[%s2655 + $0x80] sm:$0xf]
  %v2689 = vld [vmem:[%s2655 + $0x84] sm:$0xf]
  %v2690 = vld [vmem:[%s2655 + $0x88] sm:$0xf]
  %v2691 = vld [vmem:[%s2655 + $0x8c] sm:$0xf]
  %v2692 = vld [vmem:[%s2655 + $0x90] sm:$0xf]
  %v2693 = vld [vmem:[%s2655 + $0x94] sm:$0xf]
  %v2694 = vld [vmem:[%s2655 + $0x98] sm:$0xf]
  %v2695 = vld [vmem:[%s2655 + $0x9c] sm:$0xf]
  %v2696 = vld [vmem:[%s2655 + $0xa0] sm:$0xf]
  %v2697 = vld [vmem:[%s2655 + $0xa4] sm:$0xf]
  %v2698 = vld [vmem:[%s2655 + $0xa8] sm:$0xf]
  %v2699 = vld [vmem:[%s2655 + $0xac] sm:$0xf]
  %v2744 = vunpack.c.l.b16 %v2656
  %v2745 = vunpack.c.l.b16 %v2657
  %v2746 = vunpack.c.l.b16 %v2658
  %v2747 = vunpack.c.l.b16 %v2659
  %v2748 = vunpack.c.l.b16 %v2660
  %v2749 = vunpack.c.l.b16 %v2661
  %v2750 = vunpack.c.l.b16 %v2662
  %v2751 = vunpack.c.l.b16 %v2663
  %v2752 = vunpack.c.l.b16 %v2664
  %v2753 = vunpack.c.l.b16 %v2665
  %v2754 = vunpack.c.l.b16 %v2666
  %v2755 = vunpack.c.l.b16 %v2667
  %v2756 = vunpack.c.l.b16 %v2668
  %v2757 = vunpack.c.l.b16 %v2669
  %v2758 = vunpack.c.l.b16 %v2670
  %v2759 = vunpack.c.l.b16 %v2671
  %v2760 = vunpack.c.l.b16 %v2672
  %v2761 = vunpack.c.l.b16 %v2673
  %v2762 = vunpack.c.l.b16 %v2674
  %v2763 = vunpack.c.l.b16 %v2675
  %v2764 = vunpack.c.l.b16 %v2676
  %v2765 = vunpack.c.l.b16 %v2677
  %v2766 = vunpack.c.l.b16 %v2678
  %v2767 = vunpack.c.l.b16 %v2679
  %v2768 = vunpack.c.l.b16 %v2680
  %v2769 = vunpack.c.l.b16 %v2681
  %v2770 = vunpack.c.l.b16 %v2682
  %v2771 = vunpack.c.l.b16 %v2683
  %v2772 = vunpack.c.l.b16 %v2684
  %v2773 = vunpack.c.l.b16 %v2685
  %v2774 = vunpack.c.l.b16 %v2686
  %v2775 = vunpack.c.l.b16 %v2687
  %v2776 = vunpack.c.l.b16 %v2688
  %v2777 = vunpack.c.l.b16 %v2689
  %v2778 = vunpack.c.l.b16 %v2690
  %v2779 = vunpack.c.l.b16 %v2691
  %v2780 = vunpack.c.l.b16 %v2692
  %v2781 = vunpack.c.l.b16 %v2693
  %v2782 = vunpack.c.l.b16 %v2694
  %v2783 = vunpack.c.l.b16 %v2695
  %v2784 = vunpack.c.l.b16 %v2696
  %v2785 = vunpack.c.l.b16 %v2697
  %v2786 = vunpack.c.l.b16 %v2698
  %v2787 = vunpack.c.l.b16 %v2699
  %v2788 = vpack.c.b16 %v2745, %v2744
  %v2789 = vpack.c.b16 %v2747, %v2746
  %v2790 = vpack.c.b16 %v2749, %v2748
  %v2791 = vpack.c.b16 %v2751, %v2750
  %v2792 = vpack.c.b16 %v2753, %v2752
  %v2793 = vpack.c.b16 %v2755, %v2754
  %v2794 = vpack.c.b16 %v2757, %v2756
  %v2795 = vpack.c.b16 %v2759, %v2758
  %v2796 = vpack.c.b16 %v2761, %v2760
  %v2797 = vpack.c.b16 %v2763, %v2762
  %v2798 = vpack.c.b16 %v2765, %v2764
  %v2799 = vpack.c.b16 %v2767, %v2766
  %v2800 = vpack.c.b16 %v2769, %v2768
  %v2801 = vpack.c.b16 %v2771, %v2770
  %v2802 = vpack.c.b16 %v2773, %v2772
  %v2803 = vpack.c.b16 %v2775, %v2774
  %v2804 = vpack.c.b16 %v2777, %v2776
  %v2805 = vpack.c.b16 %v2779, %v2778
  %v2806 = vpack.c.b16 %v2781, %v2780
  %v2807 = vpack.c.b16 %v2783, %v2782
  %v2808 = vpack.c.b16 %v2785, %v2784
  %v2809 = vpack.c.b16 %v2787, %v2786
  %v2833 = vsel %vm1524, %v2633, 0
  %v2836 = vsel %vm1524, %v2636, 0
  %v2839 = vsel %vm1524, %v2639, 0
  %v2842 = vsel %vm1524, %v2642, 0
  %v2845 = vsel %vm1524, %v2645, 0
  %v2848 = vsel %vm1524, %v2648, 0
  %v2851 = vsel %vm1524, %v2651, 0
  %v2854 = vsel %vm1524, %v2654, 0
  %2856 = vmatprep.subr.bf16.mxu0 0
  %2857 = vmatpush1.bf16.msra.mxu0 %v2788
  %2858 = vmatprep.subr.bf16.mxu0 0
  %2859 = vmatpush1.bf16.msra.mxu0 %v2789
  %2860 = vmatprep.subr.bf16.mxu0 0
  %2861 = vmatpush1.bf16.msra.mxu0 %v2790
  %2862 = vmatprep.subr.bf16.mxu0 0
  %2863 = vmatpush1.bf16.msra.mxu0 %v2791
  %2864 = vmatprep.subr.bf16.mxu0 0
  %2865 = vmatpush1.bf16.msra.mxu0 %v2792
  %2866 = vmatprep.subr.bf16.mxu0 0
  %2867 = vmatpush1.bf16.msra.mxu0 %v2793
  %2868 = vmatprep.subr.bf16.mxu0 0
  %2869 = vmatpush1.bf16.msra.mxu0 %v2794
  %2870 = vmatprep.subr.bf16.mxu0 0
  %2871 = vmatpush1.bf16.msra.mxu0 %v2795
  %2872 = vmatprep.subr.bf16.mxu0 0
  %2873 = vmatpush1.bf16.msra.mxu0 %v2796
  %2874 = vmatprep.subr.bf16.mxu0 0
  %2875 = vmatpush1.bf16.msra.mxu0 %v2797
  %2876 = vmatprep.subr.bf16.mxu0 0
  %2877 = vmatpush1.bf16.msra.mxu0 %v2798
  %2878 = vmatprep.subr.bf16.mxu0 0
  %2879 = vmatpush1.bf16.msra.mxu0 %v2799
  %2880 = vmatprep.subr.bf16.mxu0 0
  %2881 = vmatpush1.bf16.msra.mxu0 %v2800
  %2882 = vmatprep.subr.bf16.mxu0 0
  %2883 = vmatpush1.bf16.msra.mxu0 %v2801
  %2884 = vmatprep.subr.bf16.mxu0 0
  %2885 = vmatpush1.bf16.msra.mxu0 %v2802
  %2886 = vmatprep.subr.bf16.mxu0 0
  %2887 = vmatpush1.bf16.msra.mxu0 %v2803
  %2888 = vmatprep.mubr.bf16.mxu0 %v2632
  %2889 = vmatmul.mubr.bf16.gmra.mrb[0].mxu0 %v2631
  %v2890 = vpop.f32.mrb[0].mxu0
  %v2891 = vadd.f32 0.0, %v2890
  %v2892 = vpop.f32.mrb[0].mxu0
  %v2893 = vpop.f32.mrb[0].mxu0
  %v2894 = vadd.f32 0.0, %v2893
  %v2895 = vpop.f32.mrb[0].mxu0
  %2896 = vmatprep.mubr.bf16.mxu0 %v2635
  %2897 = vmatmul.mubr.bf16.gmra.mrb[0].mxu0 %v2634
  %v2898 = vpop.f32.mrb[0].mxu0
  %v2899 = vadd.f32 0.0, %v2898
  %v2900 = vpop.f32.mrb[0].mxu0
  %v2901 = vpop.f32.mrb[0].mxu0
  %v2902 = vadd.f32 0.0, %v2901
  %v2903 = vpop.f32.mrb[0].mxu0
  %2904 = vmatprep.mubr.bf16.mxu0 %v2638
  %2905 = vmatmul.mubr.bf16.gmra.mrb[0].mxu0 %v2637
  %v2906 = vpop.f32.mrb[0].mxu0
  %v2907 = vadd.f32 0.0, %v2906
  %v2908 = vpop.f32.mrb[0].mxu0
  %v2909 = vpop.f32.mrb[0].mxu0
  %v2910 = vadd.f32 0.0, %v2909
  %v2911 = vpop.f32.mrb[0].mxu0
  %2912 = vmatprep.mubr.bf16.mxu0 %v2641
  %2913 = vmatmul.mubr.bf16.gmra.mrb[0].mxu0 %v2640
  %v2914 = vpop.f32.mrb[0].mxu0
  %v2915 = vadd.f32 0.0, %v2914
  %v2916 = vpop.f32.mrb[0].mxu0
  %v2917 = vpop.f32.mrb[0].mxu0
  %v2918 = vadd.f32 0.0, %v2917
  %v2919 = vpop.f32.mrb[0].mxu0
  %2920 = vmatprep.mubr.bf16.mxu0 %v2644
  %2921 = vmatmul.mubr.bf16.gmra.mrb[0].mxu0 %v2643
  %v2922 = vpop.f32.mrb[0].mxu0
  %v2923 = vadd.f32 0.0, %v2922
  %v2924 = vpop.f32.mrb[0].mxu0
  %v2925 = vpop.f32.mrb[0].mxu0
  %v2926 = vadd.f32 0.0, %v2925
  %v2927 = vpop.f32.mrb[0].mxu0
  %2928 = vmatprep.mubr.bf16.mxu0 %v2647
  %2929 = vmatmul.mubr.bf16.gmra.mrb[0].mxu0 %v2646
  %v2930 = vpop.f32.mrb[0].mxu0
  %v2931 = vadd.f32 0.0, %v2930
  %v2932 = vpop.f32.mrb[0].mxu0
  %v2933 = vpop.f32.mrb[0].mxu0
  %v2934 = vadd.f32 0.0, %v2933
  %v2935 = vpop.f32.mrb[0].mxu0
  %2936 = vmatprep.mubr.bf16.mxu0 %v2650
  %2937 = vmatmul.mubr.bf16.gmra.mrb[0].mxu0 %v2649
  %v2938 = vpop.f32.mrb[0].mxu0
  %v2939 = vadd.f32 0.0, %v2938
  %v2940 = vpop.f32.mrb[0].mxu0
  %v2941 = vpop.f32.mrb[0].mxu0
  %v2942 = vadd.f32 0.0, %v2941
  %v2943 = vpop.f32.mrb[0].mxu0
  %2944 = vmatprep.mubr.bf16.mxu0 %v2653
  %2945 = vmatmul.mubr.bf16.gmra.mrb[0].mxu0 %v2652
  %v2946 = vpop.f32.mrb[0].mxu0
  %v2947 = vadd.f32 0.0, %v2946
  %v2948 = vpop.f32.mrb[0].mxu0
  %v2949 = vpop.f32.mrb[0].mxu0
  %v2950 = vadd.f32 0.0, %v2949
  %v2951 = vpop.f32.mrb[0].mxu0
  %2952 = vdwg.mxu0
  %2953 = vmatprep.subr.bf16.mxu0 0
  %2954 = vmatpush1.bf16.msra.mxu0 %v2804
  %2955 = vmatprep.subr.bf16.mxu0 0
  %2956 = vmatpush1.bf16.msra.mxu0 %v2805
  %2957 = vmatprep.subr.bf16.mxu0 0
  %2958 = vmatpush1.bf16.msra.mxu0 %v2806
  %2959 = vmatprep.subr.bf16.mxu0 0
  %2960 = vmatpush1.bf16.msra.mxu0 %v2807
  %2961 = vmatprep.subr.bf16.mxu0 0
  %2962 = vmatpush1.bf16.msra.mxu0 %v2808
  %2963 = vmatprep.subr.bf16.mxu0 0
  %2964 = vmatpush1.bf16.msra.mxu0 %v2809
  %2965 = vmatprep.subr.bf16.mxu0 0
  %2966 = vmatpush1.bf16.msra.mxu0 0
  %2967 = vmatprep.subr.bf16.mxu0 0
  %2968 = vmatpush1.bf16.msra.mxu0 0
  %2969 = vmatprep.subr.bf16.mxu0 0
  %2970 = vmatpush1.bf16.msra.mxu0 0
  %2971 = vmatprep.subr.bf16.mxu0 0
  %2972 = vmatpush1.bf16.msra.mxu0 0
  %2973 = vmatprep.subr.bf16.mxu0 0
  %2974 = vmatpush1.bf16.msra.mxu0 0
  %2975 = vmatprep.subr.bf16.mxu0 0
  %2976 = vmatpush1.bf16.msra.mxu0 0
  %2977 = vmatprep.subr.bf16.mxu0 0
  %2978 = vmatpush1.bf16.msra.mxu0 0
  %2979 = vmatprep.subr.bf16.mxu0 0
  %2980 = vmatpush1.bf16.msra.mxu0 0
  %2981 = vmatprep.subr.bf16.mxu0 0
  %2982 = vmatpush1.bf16.msra.mxu0 0
  %2983 = vmatprep.subr.bf16.mxu0 0
  %2984 = vmatpush1.bf16.msra.mxu0 0
  %2985 = vmatprep.mubr.bf16.mxu0 0
  %2986 = vmatmul.mubr.bf16.gmra.mrb[0].mxu0 %v2833
  %v2987 = vpop.f32.mrb[0].mxu0
  %v2988 = vadd.f32 %v2891, %v2987
  %v2989 = vpop.f32.mrb[0].mxu0
  %v2990 = vpop.f32.mrb[0].mxu0
  %v2991 = vadd.f32 %v2894, %v2990
  %v2992 = vpop.f32.mrb[0].mxu0
  %2993 = vmatprep.mubr.bf16.mxu0 0
  %2994 = vmatmul.mubr.bf16.gmra.mrb[0].mxu0 %v2836
  %v2995 = vpop.f32.mrb[0].mxu0
  %v2996 = vadd.f32 %v2899, %v2995
  %v2997 = vpop.f32.mrb[0].mxu0
  %v2998 = vpop.f32.mrb[0].mxu0
  %v2999 = vadd.f32 %v2902, %v2998
  %v3000 = vpop.f32.mrb[0].mxu0
  %3001 = vmatprep.mubr.bf16.mxu0 0
  %3002 = vmatmul.mubr.bf16.gmra.mrb[0].mxu0 %v2839
  %v3003 = vpop.f32.mrb[0].mxu0
  %v3004 = vadd.f32 %v2907, %v3003
  %v3005 = vpop.f32.mrb[0].mxu0
  %v3006 = vpop.f32.mrb[0].mxu0
  %v3007 = vadd.f32 %v2910, %v3006
  %v3008 = vpop.f32.mrb[0].mxu0
  %3009 = vmatprep.mubr.bf16.mxu0 0
  %3010 = vmatmul.mubr.bf16.gmra.mrb[0].mxu0 %v2842
  %v3011 = vpop.f32.mrb[0].mxu0
  %v3012 = vadd.f32 %v2915, %v3011
  %v3013 = vpop.f32.mrb[0].mxu0
  %v3014 = vpop.f32.mrb[0].mxu0
  %v3015 = vadd.f32 %v2918, %v3014
  %v3016 = vpop.f32.mrb[0].mxu0
  %3017 = vmatprep.mubr.bf16.mxu0 0
  %3018 = vmatmul.mubr.bf16.gmra.mrb[0].mxu0 %v2845
  %v3019 = vpop.f32.mrb[0].mxu0
  %v3020 = vadd.f32 %v2923, %v3019
  %v3021 = vpop.f32.mrb[0].mxu0
  %v3022 = vpop.f32.mrb[0].mxu0
  %v3023 = vadd.f32 %v2926, %v3022
  %v3024 = vpop.f32.mrb[0].mxu0
  %3025 = vmatprep.mubr.bf16.mxu0 0
  %3026 = vmatmul.mubr.bf16.gmra.mrb[0].mxu0 %v2848
  %v3027 = vpop.f32.mrb[0].mxu0
  %v3028 = vadd.f32 %v2931, %v3027
  %v3029 = vpop.f32.mrb[0].mxu0
  %v3030 = vpop.f32.mrb[0].mxu0
  %v3031 = vadd.f32 %v2934, %v3030
  %v3032 = vpop.f32.mrb[0].mxu0
  %3033 = vmatprep.mubr.bf16.mxu0 0
  %3034 = vmatmul.mubr.bf16.gmra.mrb[0].mxu0 %v2851
  %v3035 = vpop.f32.mrb[0].mxu0
  %v3036 = vadd.f32 %v2939, %v3035
  %v3037 = vpop.f32.mrb[0].mxu0
  %v3038 = vpop.f32.mrb[0].mxu0
  %v3039 = vadd.f32 %v2942, %v3038
  %v3040 = vpop.f32.mrb[0].mxu0
  %3041 = vmatprep.mubr.bf16.mxu0 0
  %3042 = vmatmul.mubr.bf16.gmra.mrb[0].mxu0 %v2854
  %v3043 = vpop.f32.mrb[0].mxu0
  %v3044 = vadd.f32 %v2947, %v3043
  %v3045 = vpop.f32.mrb[0].mxu0
  %v3046 = vpop.f32.mrb[0].mxu0
  %v3047 = vadd.f32 %v2950, %v3046
  %v3048 = vpop.f32.mrb[0].mxu0
  %3049 = vdwg.mxu0
  %v3050 = vadd.f32 %v2615, %v2988
  %v3051 = vadd.f32 %v2616, %v2991
  %v3052 = vadd.f32 %v2617, %v2996
  %v3053 = vadd.f32 %v2618, %v2999
  %v3054 = vadd.f32 %v2619, %v3004
  %v3055 = vadd.f32 %v2620, %v3007
  %v3056 = vadd.f32 %v2621, %v3012
  %v3057 = vadd.f32 %v2622, %v3015
  %v3058 = vadd.f32 %v2623, %v3020
  %v3059 = vadd.f32 %v2624, %v3023
  %v3060 = vadd.f32 %v2625, %v3028
  %v3061 = vadd.f32 %v2626, %v3031
  %v3062 = vadd.f32 %v2627, %v3036
  %v3063 = vadd.f32 %v2628, %v3039
  %v3064 = vadd.f32 %v2629, %v3044
  %v3065 = vadd.f32 %v2630, %v3047
  %v3066 = vmax.f32 %v3050, %v3052
  %v3067 = vmax.f32 %v3051, %v3053
  %v3068 = vmax.f32 %v3054, %v3056
  %v3069 = vmax.f32 %v3055, %v3057
  %v3070 = vmax.f32 %v3058, %v3060
  %v3071 = vmax.f32 %v3059, %v3061
  %v3072 = vmax.f32 %v3062, %v3064
  %v3073 = vmax.f32 %v3063, %v3065
  %3082 = vrot.lane.b32.xlu0 %v3066, 112
  %v3083 = vpop.permute.xlu0 %3082
  %3084 = vrot.lane.b32.xlu0 %v3067, 112
  %v3085 = vpop.permute.xlu0 %3084
  %3086 = vrot.lane.b32.xlu0 %v3068, 112
  %v3087 = vpop.permute.xlu0 %3086
  %3088 = vrot.lane.b32.xlu0 %v3069, 112
  %v3089 = vpop.permute.xlu0 %3088
  %3090 = vrot.lane.b32.xlu0 %v3070, 112
  %v3091 = vpop.permute.xlu0 %3090
  %3092 = vrot.lane.b32.xlu0 %v3071, 112
  %v3093 = vpop.permute.xlu0 %3092
  %3094 = vrot.lane.b32.xlu0 %v3072, 112
  %v3095 = vpop.permute.xlu0 %3094
  %3096 = vrot.lane.b32.xlu0 %v3073, 112
  %v3097 = vpop.permute.xlu0 %3096
  %v3106 = vmax.f32 %v3066, %v3083
  %v3107 = vmax.f32 %v3067, %v3085
  %v3108 = vmax.f32 %v3068, %v3087
  %v3109 = vmax.f32 %v3069, %v3089
  %v3110 = vmax.f32 %v3070, %v3091
  %v3111 = vmax.f32 %v3071, %v3093
  %v3112 = vmax.f32 %v3072, %v3095
  %v3113 = vmax.f32 %v3073, %v3097
  %v3114 = vmax.f32 %v3106, 0.0
  %v3115 = vmax.f32 %v3107, 0.0
  %v3116 = vmax.f32 %v3108, 0.0
  %v3117 = vmax.f32 %v3109, 0.0
  %v3118 = vmax.f32 %v3110, 0.0
  %v3119 = vmax.f32 %v3111, 0.0
  %v3120 = vmax.f32 %v3112, 0.0
  %v3121 = vmax.f32 %v3113, 0.0
  %v3122 = vpack.c.bf16 %v3115, %v3114
  %v3123 = vpack.c.bf16 %v3117, %v3116
  %v3124 = vpack.c.bf16 %v3119, %v3118
  %v3125 = vpack.c.bf16 %v3121, %v3120
  %v3126 = vld [vmem:[%s6] sm:$0x1]
  %v3127 = vld [vmem:[%s5] sm:$0xf]
  %v3128 = vld [vmem:[%s5 + $0x4] sm:$0xf]
  %v3129 = vld [vmem:[%s5 + $0x8] sm:$0xf]
  %v3130 = vld [vmem:[%s5 + $0xc] sm:$0xf]
  %v3131 = vld [vmem:[%s5 + $0x10] sm:$0xf]
  %v3132 = vld [vmem:[%s5 + $0x14] sm:$0xf]
  %v3133 = vld [vmem:[%s5 + $0x18] sm:$0xf]
  %v3134 = vld [vmem:[%s5 + $0x1c] sm:$0xf]
  %v3135 = vld [vmem:[%s5 + $0x20] sm:$0xf]
  %v3136 = vld [vmem:[%s5 + $0x24] sm:$0xf]
  %v3137 = vld [vmem:[%s5 + $0x28] sm:$0xf]
  %v3138 = vld [vmem:[%s5 + $0x2c] sm:$0xf]
  %v3139 = vld [vmem:[%s5 + $0x30] sm:$0xf]
  %v3140 = vld [vmem:[%s5 + $0x34] sm:$0xf]
  %v3155 = vunpack.c.l.b16 %v3127
  %v3156 = vunpack.c.l.b16 %v3128
  %v3157 = vunpack.c.l.b16 %v3129
  %v3158 = vunpack.c.l.b16 %v3130
  %v3159 = vunpack.c.l.b16 %v3131
  %v3160 = vunpack.c.l.b16 %v3132
  %v3161 = vunpack.c.l.b16 %v3133
  %v3162 = vunpack.c.l.b16 %v3134
  %v3163 = vunpack.c.l.b16 %v3135
  %v3164 = vunpack.c.l.b16 %v3136
  %v3165 = vunpack.c.l.b16 %v3137
  %v3166 = vunpack.c.l.b16 %v3138
  %v3167 = vunpack.c.l.b16 %v3139
  %v3168 = vunpack.c.l.b16 %v3140
  %v3169 = vpack.c.b16 %v3156, %v3155
  %v3170 = vpack.c.b16 %v3158, %v3157
  %v3171 = vpack.c.b16 %v3160, %v3159
  %v3172 = vpack.c.b16 %v3162, %v3161
  %v3173 = vpack.c.b16 %v3164, %v3163
  %v3174 = vpack.c.b16 %v3166, %v3165
  %v3175 = vpack.c.b16 %v3168, %v3167
  %v3184 = vsel %vm1299, %v3122, 0
  %3186 = vmatprep.subr.bf16.mxu0 0
  %3187 = vmatpush1.bf16.msra.mxu0 %v3169
  %3188 = vmatprep.subr.bf16.mxu0 0
  %3189 = vmatpush1.bf16.msra.mxu0 %v3170
  %3190 = vmatprep.subr.bf16.mxu0 0
  %3191 = vmatpush1.bf16.msra.mxu0 %v3171
  %3192 = vmatprep.subr.bf16.mxu0 0
  %3193 = vmatpush1.bf16.msra.mxu0 %v3172
  %3194 = vmatprep.subr.bf16.mxu0 0
  %3195 = vmatpush1.bf16.msra.mxu0 %v3173
  %3196 = vmatprep.subr.bf16.mxu0 0
  %3197 = vmatpush1.bf16.msra.mxu0 %v3174
  %3198 = vmatprep.subr.bf16.mxu0 0
  %3199 = vmatpush1.bf16.msra.mxu0 %v3175
  %3200 = vmatprep.subr.bf16.mxu0 0
  %3201 = vmatpush1.bf16.msra.mxu0 0
  %3202 = vmatprep.subr.bf16.mxu0 0
  %3203 = vmatpush1.bf16.msra.mxu0 0
  %3204 = vmatprep.subr.bf16.mxu0 0
  %3205 = vmatpush1.bf16.msra.mxu0 0
  %3206 = vmatprep.subr.bf16.mxu0 0
  %3207 = vmatpush1.bf16.msra.mxu0 0
  %3208 = vmatprep.subr.bf16.mxu0 0
  %3209 = vmatpush1.bf16.msra.mxu0 0
  %3210 = vmatprep.subr.bf16.mxu0 0
  %3211 = vmatpush1.bf16.msra.mxu0 0
  %3212 = vmatprep.subr.bf16.mxu0 0
  %3213 = vmatpush1.bf16.msra.mxu0 0
  %3214 = vmatprep.subr.bf16.mxu0 0
  %3215 = vmatpush1.bf16.msra.mxu0 0
  %3216 = vmatprep.subr.bf16.mxu0 0
  %3217 = vmatpush1.bf16.msra.mxu0 0
  %3218 = vmatprep.mubr.bf16.mxu0 0
  %3219 = vmatmul.mubr.bf16.gmra.mrb[0].mxu0 %v3184
  %v3220 = vpop.f32.mrb[0].mxu0
  %v3221 = vadd.f32 0.0, %v3220
  %v3222 = vpop.f32.mrb[0].mxu0
  %v3223 = vpop.f32.mrb[0].mxu0
  %v3224 = vadd.f32 0.0, %v3223
  %v3225 = vpop.f32.mrb[0].mxu0
  %3226 = vdwg.mxu0
  %v3228 = vlaneseq
  %v3229 = vshrl.u32 %v3228, 7
  %v3230 = vsub.s32 0, %v3229
  %v3231 = vrot.slane %v3126, %v3230
  %v3233 = vadd.f32 %v3231, %v3221
  %v3234 = vadd.f32 %v3231, %v3224
  %s3235 = scalar_lea.vmem %s5, 56
  %v3236 = vld [vmem:[%s3235] sm:$0xf]
  %v3237 = vld [vmem:[%s3235 + $0x4] sm:$0xf]
  %v3238 = vld [vmem:[%s3235 + $0x8] sm:$0xf]
  %v3239 = vld [vmem:[%s3235 + $0xc] sm:$0xf]
  %v3240 = vld [vmem:[%s3235 + $0x10] sm:$0xf]
  %v3241 = vld [vmem:[%s3235 + $0x14] sm:$0xf]
  %v3242 = vld [vmem:[%s3235 + $0x18] sm:$0xf]
  %v3243 = vld [vmem:[%s3235 + $0x1c] sm:$0xf]
  %v3244 = vld [vmem:[%s3235 + $0x20] sm:$0xf]
  %v3245 = vld [vmem:[%s3235 + $0x24] sm:$0xf]
  %v3246 = vld [vmem:[%s3235 + $0x28] sm:$0xf]
  %v3247 = vld [vmem:[%s3235 + $0x2c] sm:$0xf]
  %v3248 = vld [vmem:[%s3235 + $0x30] sm:$0xf]
  %v3249 = vld [vmem:[%s3235 + $0x34] sm:$0xf]
  %v3264 = vunpack.c.l.b16 %v3236
  %v3265 = vunpack.c.l.b16 %v3237
  %v3266 = vunpack.c.l.b16 %v3238
  %v3267 = vunpack.c.l.b16 %v3239
  %v3268 = vunpack.c.l.b16 %v3240
  %v3269 = vunpack.c.l.b16 %v3241
  %v3270 = vunpack.c.l.b16 %v3242
  %v3271 = vunpack.c.l.b16 %v3243
  %v3272 = vunpack.c.l.b16 %v3244
  %v3273 = vunpack.c.l.b16 %v3245
  %v3274 = vunpack.c.l.b16 %v3246
  %v3275 = vunpack.c.l.b16 %v3247
  %v3276 = vunpack.c.l.b16 %v3248
  %v3277 = vunpack.c.l.b16 %v3249
  %v3278 = vpack.c.b16 %v3265, %v3264
  %v3279 = vpack.c.b16 %v3267, %v3266
  %v3280 = vpack.c.b16 %v3269, %v3268
  %v3281 = vpack.c.b16 %v3271, %v3270
  %v3282 = vpack.c.b16 %v3273, %v3272
  %v3283 = vpack.c.b16 %v3275, %v3274
  %v3284 = vpack.c.b16 %v3277, %v3276
  %v3293 = vsel %vm1299, %v3123, 0
  %3295 = vmatprep.subr.bf16.mxu0 0
  %3296 = vmatpush1.bf16.msra.mxu0 %v3278
  %3297 = vmatprep.subr.bf16.mxu0 0
  %3298 = vmatpush1.bf16.msra.mxu0 %v3279
  %3299 = vmatprep.subr.bf16.mxu0 0
  %3300 = vmatpush1.bf16.msra.mxu0 %v3280
  %3301 = vmatprep.subr.bf16.mxu0 0
  %3302 = vmatpush1.bf16.msra.mxu0 %v3281
  %3303 = vmatprep.subr.bf16.mxu0 0
  %3304 = vmatpush1.bf16.msra.mxu0 %v3282
  %3305 = vmatprep.subr.bf16.mxu0 0
  %3306 = vmatpush1.bf16.msra.mxu0 %v3283
  %3307 = vmatprep.subr.bf16.mxu0 0
  %3308 = vmatpush1.bf16.msra.mxu0 %v3284
  %3309 = vmatprep.subr.bf16.mxu0 0
  %3310 = vmatpush1.bf16.msra.mxu0 0
  %3311 = vmatprep.subr.bf16.mxu0 0
  %3312 = vmatpush1.bf16.msra.mxu0 0
  %3313 = vmatprep.subr.bf16.mxu0 0
  %3314 = vmatpush1.bf16.msra.mxu0 0
  %3315 = vmatprep.subr.bf16.mxu0 0
  %3316 = vmatpush1.bf16.msra.mxu0 0
  %3317 = vmatprep.subr.bf16.mxu0 0
  %3318 = vmatpush1.bf16.msra.mxu0 0
  %3319 = vmatprep.subr.bf16.mxu0 0
  %3320 = vmatpush1.bf16.msra.mxu0 0
  %3321 = vmatprep.subr.bf16.mxu0 0
  %3322 = vmatpush1.bf16.msra.mxu0 0
  %3323 = vmatprep.subr.bf16.mxu0 0
  %3324 = vmatpush1.bf16.msra.mxu0 0
  %3325 = vmatprep.subr.bf16.mxu0 0
  %3326 = vmatpush1.bf16.msra.mxu0 0
  %3327 = vmatprep.mubr.bf16.mxu0 0
  %3328 = vmatmul.mubr.bf16.gmra.mrb[0].mxu0 %v3293
  %v3329 = vpop.f32.mrb[0].mxu0
  %v3330 = vadd.f32 0.0, %v3329
  %v3331 = vpop.f32.mrb[0].mxu0
  %v3332 = vpop.f32.mrb[0].mxu0
  %v3333 = vadd.f32 0.0, %v3332
  %v3334 = vpop.f32.mrb[0].mxu0
  %3335 = vdwg.mxu0
  %v3336 = vadd.f32 %v3233, %v3330
  %v3337 = vadd.f32 %v3234, %v3333
  %s3338 = scalar_lea.vmem %s5, 112
  %v3339 = vld [vmem:[%s3338] sm:$0xf]
  %v3340 = vld [vmem:[%s3338 + $0x4] sm:$0xf]
  %v3341 = vld [vmem:[%s3338 + $0x8] sm:$0xf]
  %v3342 = vld [vmem:[%s3338 + $0xc] sm:$0xf]
  %v3343 = vld [vmem:[%s3338 + $0x10] sm:$0xf]
  %v3344 = vld [vmem:[%s3338 + $0x14] sm:$0xf]
  %v3345 = vld [vmem:[%s3338 + $0x18] sm:$0xf]
  %v3346 = vld [vmem:[%s3338 + $0x1c] sm:$0xf]
  %v3347 = vld [vmem:[%s3338 + $0x20] sm:$0xf]
  %v3348 = vld [vmem:[%s3338 + $0x24] sm:$0xf]
  %v3349 = vld [vmem:[%s3338 + $0x28] sm:$0xf]
  %v3350 = vld [vmem:[%s3338 + $0x2c] sm:$0xf]
  %v3351 = vld [vmem:[%s3338 + $0x30] sm:$0xf]
  %v3352 = vld [vmem:[%s3338 + $0x34] sm:$0xf]
  %v3367 = vunpack.c.l.b16 %v3339
  %v3368 = vunpack.c.l.b16 %v3340
  %v3369 = vunpack.c.l.b16 %v3341
  %v3370 = vunpack.c.l.b16 %v3342
  %v3371 = vunpack.c.l.b16 %v3343
  %v3372 = vunpack.c.l.b16 %v3344
  %v3373 = vunpack.c.l.b16 %v3345
  %v3374 = vunpack.c.l.b16 %v3346
  %v3375 = vunpack.c.l.b16 %v3347
  %v3376 = vunpack.c.l.b16 %v3348
  %v3377 = vunpack.c.l.b16 %v3349
  %v3378 = vunpack.c.l.b16 %v3350
  %v3379 = vunpack.c.l.b16 %v3351
  %v3380 = vunpack.c.l.b16 %v3352
  %v3381 = vpack.c.b16 %v3368, %v3367
  %v3382 = vpack.c.b16 %v3370, %v3369
  %v3383 = vpack.c.b16 %v3372, %v3371
  %v3384 = vpack.c.b16 %v3374, %v3373
  %v3385 = vpack.c.b16 %v3376, %v3375
  %v3386 = vpack.c.b16 %v3378, %v3377
  %v3387 = vpack.c.b16 %v3380, %v3379
  %v3396 = vsel %vm1299, %v3124, 0
  %3398 = vmatprep.subr.bf16.mxu0 0
  %3399 = vmatpush1.bf16.msra.mxu0 %v3381
  %3400 = vmatprep.subr.bf16.mxu0 0
  %3401 = vmatpush1.bf16.msra.mxu0 %v3382
  %3402 = vmatprep.subr.bf16.mxu0 0
  %3403 = vmatpush1.bf16.msra.mxu0 %v3383
  %3404 = vmatprep.subr.bf16.mxu0 0
  %3405 = vmatpush1.bf16.msra.mxu0 %v3384
  %3406 = vmatprep.subr.bf16.mxu0 0
  %3407 = vmatpush1.bf16.msra.mxu0 %v3385
  %3408 = vmatprep.subr.bf16.mxu0 0
  %3409 = vmatpush1.bf16.msra.mxu0 %v3386
  %3410 = vmatprep.subr.bf16.mxu0 0
  %3411 = vmatpush1.bf16.msra.mxu0 %v3387
  %3412 = vmatprep.subr.bf16.mxu0 0
  %3413 = vmatpush1.bf16.msra.mxu0 0
  %3414 = vmatprep.subr.bf16.mxu0 0
  %3415 = vmatpush1.bf16.msra.mxu0 0
  %3416 = vmatprep.subr.bf16.mxu0 0
  %3417 = vmatpush1.bf16.msra.mxu0 0
  %3418 = vmatprep.subr.bf16.mxu0 0
  %3419 = vmatpush1.bf16.msra.mxu0 0
  %3420 = vmatprep.subr.bf16.mxu0 0
  %3421 = vmatpush1.bf16.msra.mxu0 0
  %3422 = vmatprep.subr.bf16.mxu0 0
  %3423 = vmatpush1.bf16.msra.mxu0 0
  %3424 = vmatprep.subr.bf16.mxu0 0
  %3425 = vmatpush1.bf16.msra.mxu0 0
  %3426 = vmatprep.subr.bf16.mxu0 0
  %3427 = vmatpush1.bf16.msra.mxu0 0
  %3428 = vmatprep.subr.bf16.mxu0 0
  %3429 = vmatpush1.bf16.msra.mxu0 0
  %3430 = vmatprep.mubr.bf16.mxu0 0
  %3431 = vmatmul.mubr.bf16.gmra.mrb[0].mxu0 %v3396
  %v3432 = vpop.f32.mrb[0].mxu0
  %v3433 = vadd.f32 0.0, %v3432
  %v3434 = vpop.f32.mrb[0].mxu0
  %v3435 = vpop.f32.mrb[0].mxu0
  %v3436 = vadd.f32 0.0, %v3435
  %v3437 = vpop.f32.mrb[0].mxu0
  %3438 = vdwg.mxu0
  %v3439 = vadd.f32 %v3336, %v3433
  %v3440 = vadd.f32 %v3337, %v3436
  %s3441 = scalar_lea.vmem %s5, 168
  %v3442 = vld [vmem:[%s3441] sm:$0xf]
  %v3443 = vld [vmem:[%s3441 + $0x4] sm:$0xf]
  %v3444 = vld [vmem:[%s3441 + $0x8] sm:$0xf]
  %v3445 = vld [vmem:[%s3441 + $0xc] sm:$0xf]
  %v3446 = vld [vmem:[%s3441 + $0x10] sm:$0xf]
  %v3447 = vld [vmem:[%s3441 + $0x14] sm:$0xf]
  %v3448 = vld [vmem:[%s3441 + $0x18] sm:$0xf]
  %v3449 = vld [vmem:[%s3441 + $0x1c] sm:$0xf]
  %v3450 = vld [vmem:[%s3441 + $0x20] sm:$0xf]
  %v3451 = vld [vmem:[%s3441 + $0x24] sm:$0xf]
  %v3452 = vld [vmem:[%s3441 + $0x28] sm:$0xf]
  %v3453 = vld [vmem:[%s3441 + $0x2c] sm:$0xf]
  %v3454 = vld [vmem:[%s3441 + $0x30] sm:$0xf]
  %v3455 = vld [vmem:[%s3441 + $0x34] sm:$0xf]
  %v3470 = vunpack.c.l.b16 %v3442
  %v3471 = vunpack.c.l.b16 %v3443
  %v3472 = vunpack.c.l.b16 %v3444
  %v3473 = vunpack.c.l.b16 %v3445
  %v3474 = vunpack.c.l.b16 %v3446
  %v3475 = vunpack.c.l.b16 %v3447
  %v3476 = vunpack.c.l.b16 %v3448
  %v3477 = vunpack.c.l.b16 %v3449
  %v3478 = vunpack.c.l.b16 %v3450
  %v3479 = vunpack.c.l.b16 %v3451
  %v3480 = vunpack.c.l.b16 %v3452
  %v3481 = vunpack.c.l.b16 %v3453
  %v3482 = vunpack.c.l.b16 %v3454
  %v3483 = vunpack.c.l.b16 %v3455
  %v3484 = vpack.c.b16 %v3471, %v3470
  %v3485 = vpack.c.b16 %v3473, %v3472
  %v3486 = vpack.c.b16 %v3475, %v3474
  %v3487 = vpack.c.b16 %v3477, %v3476
  %v3488 = vpack.c.b16 %v3479, %v3478
  %v3489 = vpack.c.b16 %v3481, %v3480
  %v3490 = vpack.c.b16 %v3483, %v3482
  %v3499 = vsel %vm1299, %v3125, 0
  %3501 = vmatprep.subr.bf16.mxu0 0
  %3502 = vmatpush1.bf16.msra.mxu0 %v3484
  %3503 = vmatprep.subr.bf16.mxu0 0
  %3504 = vmatpush1.bf16.msra.mxu0 %v3485
  %3505 = vmatprep.subr.bf16.mxu0 0
  %3506 = vmatpush1.bf16.msra.mxu0 %v3486
  %3507 = vmatprep.subr.bf16.mxu0 0
  %3508 = vmatpush1.bf16.msra.mxu0 %v3487
  %3509 = vmatprep.subr.bf16.mxu0 0
  %3510 = vmatpush1.bf16.msra.mxu0 %v3488
  %3511 = vmatprep.subr.bf16.mxu0 0
  %3512 = vmatpush1.bf16.msra.mxu0 %v3489
  %3513 = vmatprep.subr.bf16.mxu0 0
  %3514 = vmatpush1.bf16.msra.mxu0 %v3490
  %3515 = vmatprep.subr.bf16.mxu0 0
  %3516 = vmatpush1.bf16.msra.mxu0 0
  %3517 = vmatprep.subr.bf16.mxu0 0
  %3518 = vmatpush1.bf16.msra.mxu0 0
  %3519 = vmatprep.subr.bf16.mxu0 0
  %3520 = vmatpush1.bf16.msra.mxu0 0
  %3521 = vmatprep.subr.bf16.mxu0 0
  %3522 = vmatpush1.bf16.msra.mxu0 0
  %3523 = vmatprep.subr.bf16.mxu0 0
  %3524 = vmatpush1.bf16.msra.mxu0 0
  %3525 = vmatprep.subr.bf16.mxu0 0
  %3526 = vmatpush1.bf16.msra.mxu0 0
  %3527 = vmatprep.subr.bf16.mxu0 0
  %3528 = vmatpush1.bf16.msra.mxu0 0
  %3529 = vmatprep.subr.bf16.mxu0 0
  %3530 = vmatpush1.bf16.msra.mxu0 0
  %3531 = vmatprep.subr.bf16.mxu0 0
  %3532 = vmatpush1.bf16.msra.mxu0 0
  %3533 = vmatprep.mubr.bf16.mxu0 0
  %3534 = vmatmul.mubr.bf16.gmra.mrb[0].mxu0 %v3499
  %v3535 = vpop.f32.mrb[0].mxu0
  %v3536 = vadd.f32 0.0, %v3535
  %v3537 = vpop.f32.mrb[0].mxu0
  %v3538 = vpop.f32.mrb[0].mxu0
  %v3539 = vadd.f32 0.0, %v3538
  %v3540 = vpop.f32.mrb[0].mxu0
  %3541 = vdwg.mxu0
  %v3542 = vadd.f32 %v3439, %v3536
  %v3543 = vadd.f32 %v3440, %v3539
  %3544 = vmax.xlane.f32.xlu0 %v3542
  %v3545 = vpop.xlane.xlu0 %3544
  %3546 = vmax.xlane.f32.xlu0 %v3543
  %v3547 = vpop.xlane.xlu0 %3546
  %v3548 = vsub.f32 %v3542, %v3545
  %v3549 = vsub.f32 %v3543, %v3547
  %v3550 = vmul.f32 %v3548, 1.442695
  %v3551 = vpow.pop %v3550
  %v3552 = vmul.f32 %v3549, 1.442695
  %v3553 = vpow.pop %v3552
  %3554 = vadd.xlane.f32.xlu0 %v3551
  %v3555 = vpop.xlane.xlu0 %3554
  %3556 = vadd.xlane.f32.xlu0 %v3553
  %v3557 = vpop.xlane.xlu0 %3556
  %v3558 = vlog2.pop %v3555
  %v3559 = vmul.f32 %v3558, 0.6931472
  %v3560 = vlog2.pop %v3557
  %v3561 = vmul.f32 %v3560, 0.6931472
  %v3562 = vsub.f32 %v3548, %v3559
  %v3563 = vsub.f32 %v3549, %v3561
  %3564 = vst [vmem:[%s7] sm:$0xff] %v3562
  %3565 = vst [vmem:[%s7 + $0x8] sm:$0xff] %v3563
  // Predicated region
  $region30: #{convnet_forward.1} parent=0 // pred_check
    _
  $region31: #{convnet_forward.1} parent=0 // pred_check_branch
    %3567 = sbr.rel (0) target = $region33
  $region32: #{convnet_forward.1} parent=0 // pred_region
    _
  $region33: #{convnet_forward.1} parent=0 // pred_fallthru
    _
  // Predicated region
  $region34: #{convnet_forward.1} parent=0 // pred_check
    _
  $region35: #{convnet_forward.1} parent=0 // pred_check_branch
    %3569 = sbr.rel (0) target = $region37
  $region36: #{convnet_forward.1} parent=0 // pred_region
    _
  $region37: #{convnet_forward.1} parent=0 // pred_fallthru
    _

</llo_original>
